<compile_context>
chip_gen: v7x
topology: tpu7x:2x2x1
jax: 0.10.0
libtpu: 0.0.40
codegen_flags: <defaults>
</compile_context>

<pallas_src>
import math
from functools import partial

import jax
import jax.numpy as jnp
from jax import lax
from jax.experimental import pallas as pl
from jax.experimental.pallas import tpu as pltpu

# ----- hyperparameters implied by TranAD_SelfConditioning(feats) -----
FEATS = 4              # n_feats
N_WINDOW = 10          # n_window (hard-coded in the module)
D_MODEL = 2 * FEATS    # transformer width
N_HEAD = FEATS         # nhead = feats  (head_dim = 2)
DIM_FF = 16            # dim_feedforward
BATCH = 2
TGT_LEN = 1            # TranAD passes the last window element as tgt
NEG_SLOPE = 1.0        # nn.LeakyReLU(True) -> negative_slope = 1.0 (identity)

# canonical parameter ordering / naming (matches make_params / reference)
_BLOCKS = ["enc_attn", "enc_ffn",
           "d1_self", "d1_cross", "d1_ffn",
           "d2_self", "d2_cross", "d2_ffn"]
_PARAM_NAMES = []
for _blk in _BLOCKS:
    if _blk.endswith("ffn"):
        _PARAM_NAMES += [f"{_blk}.l1w_t", f"{_blk}.l1b",
                         f"{_blk}.l2w_t", f"{_blk}.l2b"]
    else:
        _PARAM_NAMES += [f"{_blk}.wi_t", f"{_blk}.bi",
                         f"{_blk}.wo_t", f"{_blk}.bo"]
_PARAM_NAMES += ["fcn.w_t", "fcn.b"]


# ---------------------------------------------------------------------------
# small math helpers
# ---------------------------------------------------------------------------
def _sigmoid(x):
    return 1.0 / (1.0 + jnp.exp(-x))


def positional_encoding(max_len, d_model):
    # TranAD's custom PositionalEncoding: pe = sin(pos*div) + cos(pos*div)
    pos = jnp.arange(max_len, dtype=jnp.float32)[:, None]
    div = jnp.exp(jnp.arange(d_model, dtype=jnp.float32)
                  * (-math.log(10000.0) / d_model))
    ang = pos * div[None, :]
    return jnp.sin(ang) + jnp.cos(ang)           # (max_len, d_model)


# ---------------------------------------------------------------------------
# one-time constant packing (runs once at init, NOT in the per-call path)
# ---------------------------------------------------------------------------
def _pack(entries, dtype):
    """Lane-concat a list of (name, 2-D array) into one slab.

    Rows are zero-padded to the max row count; entries are aligned so no slice
    straddles a 128-lane vreg boundary.  layout[name] = (col_start, width, rows).
    """
    max_rows = max(int(a.shape[0]) for _, a in entries)
    col, cols, layout = 0, [], {}
    for name, a in entries:
        r, w = int(a.shape[0]), int(a.shape[1])
        if w <= 128 and (col % 128) + w > 128:       # avoid vreg-boundary straddle
            pad = 128 - (col % 128)
            cols.append(jnp.zeros((max_rows, pad), dtype))
            col += pad
        layout[name] = (col, w, r)
        cols.append(jnp.pad(a, ((0, max_rows - r), (0, 0))).astype(dtype))
        col += w
    return jnp.concatenate(cols, axis=1), layout


def prepare_consts(params, feats, n_window, batch, tgt_len):
    """Build the fused/packed constant slabs (weights bf16, biases/PE/masks f32)."""
    F, E, W, B, Lt = feats, 2 * feats, n_window, batch, tgt_len
    p = dict(zip(_PARAM_NAMES, params))

    def bd(a, b):   # block-diagonal [[a, 0], [0, b]]
        ra, ca = a.shape
        rb, cb = b.shape
        top = jnp.concatenate([a, jnp.zeros((ra, cb), a.dtype)], axis=1)
        bot = jnp.concatenate([jnp.zeros((rb, ca), b.dtype), b], axis=1)
        return jnp.concatenate([top, bot], axis=0)

    def cat(*xs):
        return jnp.concatenate(xs, axis=1)

    # fused weight matrices (kernel does x @ W; weights already transposed)
    weights = [
        ("enc.wqkv",        p["enc_attn.wi_t"]),                              # (E, 3E)
        ("enc.wo",          p["enc_attn.wo_t"]),                              # (E, E)
        ("enc.l1",          p["enc_ffn.l1w_t"]),                              # (E, FF)
        ("enc.l2",          p["enc_ffn.l2w_t"]),                              # (FF, E)
        ("dec.self_v",      cat(p["d1_self.wi_t"][:, 2 * E:],
                                p["d2_self.wi_t"][:, 2 * E:])),               # (E, 2E)
        ("dec.self_wo_bd",  bd(p["d1_self.wo_t"], p["d2_self.wo_t"])),        # (2E, 2E)
        ("dec.cross_q_bd",  bd(p["d1_cross.wi_t"][:, :E],
                               p["d2_cross.wi_t"][:, :E])),                   # (2E, 2E)
        ("dec.cross_wo_bd", bd(p["d1_cross.wo_t"], p["d2_cross.wo_t"])),      # (2E, 2E)
        ("fcn_bd",          bd(p["fcn.w_t"], p["fcn.w_t"])),                  # (2E, 2F)
        ("dec.cross_kv",    cat(p["d1_cross.wi_t"][:, E:2 * E],
                                p["d2_cross.wi_t"][:, E:2 * E],
                                p["d1_cross.wi_t"][:, 2 * E:],
                                p["d2_cross.wi_t"][:, 2 * E:])),              # (E, 4E) [k1|k2|v1|v2]
        ("dec.ffn1_bd",     bd(p["d1_ffn.l1w_t"], p["d2_ffn.l1w_t"])),        # (2E, 2FF)
        ("dec.ffn2_bd",     bd(p["d1_ffn.l2w_t"], p["d2_ffn.l2w_t"])),        # (2FF, 2E)
    ]
    wslab, w_layout = _pack(weights, jnp.bfloat16)

    # positional encoding, pre-repeated to the seq-major interleaved row order
    pe = jnp.repeat(positional_encoding(W, E).astype(jnp.float32), B, axis=0)  # (W*B, E)

    # batch-independence additive masks (row % B == col % B -> 0, else -1e30)
    def batch_mask(rq, rk):
        iq = jnp.arange(rq, dtype=jnp.int32)[:, None] % B
        ik = jnp.arange(rk, dtype=jnp.int32)[None, :] % B
        return jnp.where(iq == ik, 0.0, -1e30).astype(jnp.float32)

    consts = [
        ("enc.bi",         p["enc_attn.bi"]),
        ("enc.bo",         p["enc_attn.bo"]),
        ("enc.l1b",        p["enc_ffn.l1b"]),
        ("enc.l2b",        p["enc_ffn.l2b"]),
        ("dec.self_v_b",   cat(p["d1_self.bi"][:, 2 * E:], p["d2_self.bi"][:, 2 * E:])),
        ("dec.self_wo_b",  cat(p["d1_self.bo"], p["d2_self.bo"])),
        ("dec.cross_q_b",  cat(p["d1_cross.bi"][:, :E], p["d2_cross.bi"][:, :E])),
        ("dec.cross_wo_b", cat(p["d1_cross.bo"], p["d2_cross.bo"])),
        ("fcn_b",          cat(p["fcn.b"], p["fcn.b"])),
        ("dec.cross_kv_b", cat(p["d1_cross.bi"][:, E:2 * E], p["d2_cross.bi"][:, E:2 * E],
                               p["d1_cross.bi"][:, 2 * E:], p["d2_cross.bi"][:, 2 * E:])),
        ("dec.ffn1_b",     cat(p["d1_ffn.l1b"], p["d2_ffn.l1b"])),
        ("dec.ffn2_b",     cat(p["d1_ffn.l2b"], p["d2_ffn.l2b"])),
        ("pe",             pe),
        ("mask.enc",       batch_mask(W * B, W * B)),
        ("mask.cross",     batch_mask(Lt * B, W * B)),
    ]
    cslab, c_layout = _pack(consts, jnp.float32)
    return wslab, cslab, w_layout, c_layout


# ---------------------------------------------------------------------------
# Pallas kernel: full forward (encoder + 2 fused decoders + fcn), one call.
# Every tensor is far smaller than one (8,128) tile, so a single grid-less
# full-array VMEM block is used; total footprint << 100 KiB.
# ---------------------------------------------------------------------------
def _tranad_kernel(src_ref, tgt_ref, wslab_ref, cslab_ref, out_ref, *,
                   w_layout, c_layout, feats):
    F = feats
    E = 2 * F
    nhead = F
    dh = E // nhead
    scale = 1.0 / math.sqrt(dh)
    sqrt_f = math.sqrt(F)
    bf16 = jnp.bfloat16

    def getw(name):                                  # bf16 weight slice (lazy)
        c0, w, r = w_layout[name]
        return wslab_ref[0:r, c0:c0 + w]

    def getc(name):                                  # f32 constant slice (lazy)
        c0, w, r = c_layout[name]
        return cslab_ref[0:r, c0:c0 + w]

    def mm(x, w):                                    # bf16 x bf16 -> f32 accum
        return jnp.dot(x.astype(bf16), w, preferred_element_type=jnp.float32)

    def mha(q_bf, k_bf, v_bf, bias, n_heads):
        heads = []
        for h in range(n_heads):                     # static tiny loop
            lo, hi = h * dh, (h + 1) * dh
            s = lax.dot_general(q_bf[:, lo:hi], k_bf[:, lo:hi],
                                (((1,), (1,)), ((), ())),
                                preferred_element_type=jnp.float32) * scale + bias
            s = s - jnp.max(s, axis=-1, keepdims=True)          # f32 softmax
            p = jnp.exp(s)
            p = p * pl.reciprocal(jnp.sum(p, axis=-1, keepdims=True), approx=True)
            heads.append(jnp.dot(p.astype(bf16), v_bf[:, lo:hi],
                                 preferred_element_type=jnp.float32))
        return jnp.concatenate(heads, axis=-1)       # f32 (rows, n_heads*dh)

    # ----- encode(): cat(src, c=0) * sqrt(F) + positional encoding ----------
    src = src_ref[...]                                           # (W*B, F)
    src2 = (jnp.concatenate([src * sqrt_f, jnp.zeros_like(src)], axis=-1)
            + getc("pe"))                                        # (W*B, E)

    # ----- encoder layer: self-attn + FFN, residuals, no LayerNorm ----------
    enc_mask = getc("mask.enc")                                  # (W*B, W*B)
    qkv = mm(src2, getw("enc.wqkv")) + getc("enc.bi")            # fused Q/K/V proj
    qkv_bf = qkv.astype(bf16)
    att = mha(qkv_bf[:, 0:E], qkv_bf[:, E:2 * E], qkv_bf[:, 2 * E:],
              enc_mask, nhead)
    mem = src2 + mm(att, getw("enc.wo")) + getc("enc.bo")
    h1 = mm(mem, getw("enc.l1")) + getc("enc.l1b")   # LeakyReLU(True) == identity
    mem = mem + mm(h1, getw("enc.l2")) + getc("enc.l2b")

    # ----- both decoders, lane-fused into one width-2E state [t1 | t2] ------
    tgt = tgt_ref[...]                                           # (Lt*B, F)
    tgt2 = jnp.concatenate([tgt, tgt], axis=-1)                  # tgt.repeat(1,1,2)
    t_cat = jnp.concatenate([tgt2, tgt2], axis=-1)               # (Lt*B, 2E)

    # self-attention, tgt_len == 1: softmax(1x1) == 1 -> out_proj(V_proj(tgt));
    # both decoders fused via lane-concat V weights + block-diag out_proj.
    vcat = mm(tgt2, getw("dec.self_v")) + getc("dec.self_v_b")
    t_cat = t_cat + mm(vcat, getw("dec.self_wo_bd")) + getc("dec.self_wo_b")

    # cross-attention over encoder memory; both decoders run as 2*nhead heads
    cross_mask = getc("mask.cross")                              # (Lt*B, W*B)
    q_cat = mm(t_cat, getw("dec.cross_q_bd")) + getc("dec.cross_q_b")
    kv = mm(mem, getw("dec.cross_kv")) + getc("dec.cross_kv_b")  # [k1|k2|v1|v2]
    kv_bf = kv.astype(bf16)
    att2 = mha(q_cat.astype(bf16), kv_bf[:, 0:2 * E], kv_bf[:, 2 * E:],
               cross_mask, 2 * nhead)
    t_cat = t_cat + mm(att2, getw("dec.cross_wo_bd")) + getc("dec.cross_wo_b")

    # FFN (LeakyReLU(True) == identity; dropout == identity in eval)
    h2 = mm(t_cat, getw("dec.ffn1_bd")) + getc("dec.ffn1_b")
    t_cat = t_cat + mm(h2, getw("dec.ffn2_bd")) + getc("dec.ffn2_b")

    # shared fcn: Linear(2F -> F) + Sigmoid, both decoder states at once
    logits = mm(t_cat, getw("fcn_bd")) + getc("fcn_b")           # (Lt*B, 2F)
    out_ref[...] = pl.reciprocal(1.0 + jnp.exp(-logits), approx=True)


# ---------------------------------------------------------------------------
# Wrapper: per-call path is only free reshapes + the pallas_call.
# ---------------------------------------------------------------------------
def tranad_forward(src, tgt, wslab, cslab, *, w_layout, c_layout, feats):
    """src: (W, B, F), tgt: (Lt, B, F) -- PyTorch (seq, batch, feat) layout."""
    W, B, F = src.shape
    Lt = tgt.shape[0]
    assert F == feats
    if Lt != 1:
        # TODO(synk): general tgt_len > 1 decoder self-attention not implemented.
        raise NotImplementedError("kernel is specialised for tgt_len == 1")

    src2d = src.reshape(W * B, F).astype(jnp.float32)   # seq-major fold (free)
    tgt2d = tgt.reshape(Lt * B, F).astype(jnp.float32)

    vmem = pl.BlockSpec(memory_space=pltpu.MemorySpace.VMEM)
    out = pl.pallas_call(
        partial(_tranad_kernel, w_layout=w_layout, c_layout=c_layout, feats=F),
        out_shape=jax.ShapeDtypeStruct((Lt * B, 2 * F), jnp.float32),
        in_specs=[vmem, vmem, vmem, vmem],
        out_specs=vmem,
    )(src2d, tgt2d, wslab, cslab)

    x1 = out[:, 0:F].reshape(Lt, B, F)                   # free reshapes, no transpose
    x2 = out[:, F:2 * F].reshape(Lt, B, F)
    return x1, x2


# ---------------------------------------------------------------------------
# Deterministic parameter initialization (shapes from the module __init__).
# Weights are stored pre-transposed (in_dim, out_dim) so the kernel does x @ W.
# ---------------------------------------------------------------------------
def make_params(key, feats):
    E = 2 * feats
    keys = iter(jax.random.split(key, 64))

    def lin_t(out_dim, in_dim, scale=0.2):
        return jnp.transpose(
            jax.random.normal(next(keys), (out_dim, in_dim), jnp.float32) * scale)

    def bias(n, scale=0.1):
        return jax.random.normal(next(keys), (1, n), jnp.float32) * scale

    def mha_params():   # in_proj (3E,E)+bias, out_proj (E,E)+bias
        return [lin_t(3 * E, E), bias(3 * E), lin_t(E, E), bias(E)]

    def ffn_params():   # linear1 (16,E)+bias, linear2 (E,16)+bias
        return [lin_t(DIM_FF, E), bias(DIM_FF), lin_t(E, DIM_FF), bias(E)]

    params = []
    params += mha_params() + ffn_params()                     # encoder layer
    params += mha_params() + mha_params() + ffn_params()      # decoder layer 1
    params += mha_params() + mha_params() + ffn_params()      # decoder layer 2
    params += [lin_t(feats, E), bias(feats)]                  # fcn: Linear(2f, f)
    return params


# ---------------------------------------------------------------------------
# Plain-JAX f32 reference (per-batch, per-head; no Pallas) for validation.
# ---------------------------------------------------------------------------
def _mha_ref(q_in, k_in, v_in, wi_t, bi, wo_t, bo, nhead):
    E = q_in.shape[-1]
    dh = E // nhead
    scale = 1.0 / math.sqrt(dh)
    q = jnp.dot(q_in, wi_t[:, 0:E]) + bi[:, 0:E]
    k = jnp.dot(k_in, wi_t[:, E:2 * E]) + bi[:, E:2 * E]
    v = jnp.dot(v_in, wi_t[:, 2 * E:3 * E]) + bi[:, 2 * E:3 * E]
    acc = jnp.zeros((q_in.shape[0], E), jnp.float32)
    for h in range(nhead):
        lo, hi = h * dh, (h + 1) * dh
        s = lax.dot_general(q[:, lo:hi], k[:, lo:hi],
                            (((1,), (1,)), ((), ()))) * scale
        s = s - jnp.max(s, axis=-1, keepdims=True)
        p = jnp.exp(s)
        p = p / jnp.sum(p, axis=-1, keepdims=True)
        oh = jnp.dot(p, v[:, lo:hi])
        acc = acc + jnp.dot(oh, wo_t[lo:hi, :])
    return acc + bo


def _ffn_ref(x, l1w_t, l1b, l2w_t, l2b):
    h = jnp.dot(x, l1w_t) + l1b
    h = jnp.where(h >= 0, h, NEG_SLOPE * h)       # slope 1.0 -> identity
    return jnp.dot(h, l2w_t) + l2b


def _decoder_layer_ref(t, mem, self_w, cross_w, ffn_w, nhead):
    t = t + _mha_ref(t, t, t, *self_w, nhead)
    t = t + _mha_ref(t, mem, mem, *cross_w, nhead)
    t = t + _ffn_ref(t, *ffn_w)
    return t


def tranad_reference(src, tgt, params, feats):
    W, B, F = src.shape
    src_bt = jnp.transpose(src, (1, 0, 2))
    tgt_bt = jnp.transpose(tgt, (1, 0, 2))
    src2 = jnp.concatenate([src_bt, jnp.zeros_like(src_bt)], axis=-1)
    tgt2 = jnp.concatenate([tgt_bt, tgt_bt], axis=-1)
    pe = positional_encoding(W, 2 * F)

    w = list(params)
    enc_attn, enc_ffn = w[0:4], w[4:8]
    d1_self, d1_cross, d1_ffn = w[8:12], w[12:16], w[16:20]
    d2_self, d2_cross, d2_ffn = w[20:24], w[24:28], w[28:32]
    fcn_w_t, fcn_b = w[32], w[33]

    o1, o2 = [], []
    for b in range(B):
        src_b = src2[b] * math.sqrt(F) + pe
        mem = src_b
        mem = mem + _mha_ref(mem, mem, mem, *enc_attn, F)
        mem = mem + _ffn_ref(mem, *enc_ffn)
        t1 = _decoder_layer_ref(tgt2[b], mem, d1_self, d1_cross, d1_ffn, F)
        t2 = _decoder_layer_ref(tgt2[b], mem, d2_self, d2_cross, d2_ffn, F)
        o1.append(_sigmoid(jnp.dot(t1, fcn_w_t) + fcn_b))
        o2.append(_sigmoid(jnp.dot(t2, fcn_w_t) + fcn_b))
    x1 = jnp.stack(o1, axis=0)
    x2 = jnp.stack(o2, axis=0)
    return jnp.transpose(x1, (1, 0, 2)), jnp.transpose(x2, (1, 0, 2))


if __name__ == "__main__":
    key = jax.random.PRNGKey(0)
    k_src, k_tgt, k_par = jax.random.split(key, 3)

    src = jax.random.normal(k_src, (N_WINDOW, BATCH, FEATS), jnp.float32)
    tgt = jax.random.normal(k_tgt, (TGT_LEN, BATCH, FEATS), jnp.float32)
    params = make_params(k_par, FEATS)

    # one-time packing of weights / PE / masks (hoisted out of the call path)
    wslab, cslab, w_layout, c_layout = prepare_consts(
        params, FEATS, N_WINDOW, BATCH, TGT_LEN)

    fwd = jax.jit(partial(tranad_forward, w_layout=w_layout,
                          c_layout=c_layout, feats=FEATS))
    x1, x2 = fwd(src, tgt, wslab, cslab)
    jax.block_until_ready((x1, x2))

    assert x1.shape == (TGT_LEN, BATCH, FEATS)
    assert x2.shape == (TGT_LEN, BATCH, FEATS)

    r1, r2 = tranad_reference(src, tgt, params, FEATS)
    err = max(float(jnp.max(jnp.abs(x1 - r1))), float(jnp.max(jnp.abs(x2 - r2))))
    # Kernel uses bf16 matmul operands (f32 accumulation) and approximate EUP
    # reciprocals, so compare against the f32 reference with a relaxed bound;
    # a wiring/packing bug would show up as >> 0.1 on these sigmoid outputs.
    assert err < 4e-2, err

    print("KERNEL_OK")
</pallas_src>

<mosaic_0001>
module attributes {stable_mosaic.version = 11 : i64} {
  func.func @_tranad_kernel(%arg0: memref<20x4xf32, #tpu.memory_space<vmem>>, %arg1: memref<2x4xf32, #tpu.memory_space<vmem>>, %arg2: memref<32x208xbf16, #tpu.memory_space<vmem>>, %arg3: memref<20x256xf32, #tpu.memory_space<vmem>>, %arg4: memref<2x8xf32, #tpu.memory_space<vmem>>) attributes {dimension_semantics = [], scalar_prefetch = 0 : i64, scratch_operands = 0 : i64, tpu.core_type = #tpu.core_type<tc>} {
    %c0 = arith.constant 0 : index
    %c0_0 = arith.constant 0 : index
    %0 = vector.load %arg0[%c0, %c0_0] : memref<20x4xf32, #tpu.memory_space<vmem>>, vector<20x4xf32>
    %cst = arith.constant 2.000000e+00 : f32
    %1 = vector.broadcast %cst : f32 to vector<20x4xf32>
    %2 = arith.mulf %0, %1 : vector<20x4xf32>
    %cst_1 = arith.constant 0.000000e+00 : f32
    %3 = vector.broadcast %cst_1 : f32 to vector<20x4xf32>
    %4 = tpu.concatenate %2, %3 in 1 : vector<20x4xf32>, vector<20x4xf32> -> vector<20x8xf32>
    %c0_2 = arith.constant 0 : index
    %c208 = arith.constant 208 : index
    %5 = vector.load %arg3[%c0_2, %c208] : memref<20x256xf32, #tpu.memory_space<vmem>>, vector<20x8xf32>
    %6 = arith.addf %4, %5 : vector<20x8xf32>
    %c0_3 = arith.constant 0 : index
    %c216 = arith.constant 216 : index
    %7 = vector.load %arg3[%c0_3, %c216] : memref<20x256xf32, #tpu.memory_space<vmem>>, vector<20x20xf32>
    %c0_4 = arith.constant 0 : index
    %c0_5 = arith.constant 0 : index
    %8 = vector.load %arg2[%c0_4, %c0_5] : memref<32x208xbf16, #tpu.memory_space<vmem>>, vector<8x24xbf16>
    %9 = arith.truncf %6 : vector<20x8xf32> to vector<20x8xbf16>
    %cst_6 = arith.constant dense<0.000000e+00> : vector<20x24xf32>
    %10 = tpu.matmul %9, %8, %cst_6 {dimension_numbers = #tpu.dot_dimension_numbers<[1], [0], [0], [1], [0, 0, 1, 1], [], []>} : vector<20x8xbf16>, vector<8x24xbf16>, vector<20x24xf32> -> vector<20x24xf32>
    %c0_7 = arith.constant 0 : index
    %c0_8 = arith.constant 0 : index
    %11 = vector.load %arg3[%c0_7, %c0_8] : memref<20x256xf32, #tpu.memory_space<vmem>>, vector<1x24xf32>
    %12 = vector.broadcast %11 : vector<1x24xf32> to vector<20x24xf32>
    %13 = arith.addf %10, %12 : vector<20x24xf32>
    %14 = arith.truncf %13 : vector<20x24xf32> to vector<20x24xbf16>
    %15 = vector.extract_strided_slice %14 {offsets = [0, 0], sizes = [20, 8], strides = [1, 1]} : vector<20x24xbf16> to vector<20x8xbf16>
    %16 = vector.extract_strided_slice %14 {offsets = [0, 8], sizes = [20, 8], strides = [1, 1]} : vector<20x24xbf16> to vector<20x8xbf16>
    %17 = vector.extract_strided_slice %14 {offsets = [0, 16], sizes = [20, 8], strides = [1, 1]} : vector<20x24xbf16> to vector<20x8xbf16>
    %18 = vector.extract_strided_slice %15 {offsets = [0, 0], sizes = [20, 2], strides = [1, 1]} : vector<20x8xbf16> to vector<20x2xbf16>
    %19 = vector.extract_strided_slice %16 {offsets = [0, 0], sizes = [20, 2], strides = [1, 1]} : vector<20x8xbf16> to vector<20x2xbf16>
    %cst_9 = arith.constant dense<0.000000e+00> : vector<20x20xf32>
    %20 = tpu.matmul %18, %19, %cst_9 {dimension_numbers = #tpu.dot_dimension_numbers<[1], [1], [0], [0], [0, 0, 1, 0], [], []>} : vector<20x2xbf16>, vector<20x2xbf16>, vector<20x20xf32> -> vector<20x20xf32>
    %cst_10 = arith.constant 0.707106769 : f32
    %21 = vector.broadcast %cst_10 : f32 to vector<20x20xf32>
    %22 = arith.mulf %20, %21 : vector<20x20xf32>
    %23 = arith.addf %22, %7 : vector<20x20xf32>
    %cst_11 = arith.constant dense<0xFF800000> : vector<20xf32>
    %24 = vector.multi_reduction <maximumf>, %23, %cst_11 [1] : vector<20x20xf32> to vector<20xf32>
    %25 = vector.shape_cast %24 : vector<20xf32> to vector<20x1xf32>
    %26 = vector.broadcast %25 : vector<20x1xf32> to vector<20x20xf32>
    %27 = arith.subf %23, %26 : vector<20x20xf32>
    %28 = math.exp %27 : vector<20x20xf32>
    %cst_12 = arith.constant dense<0.000000e+00> : vector<20xf32>
    %29 = vector.multi_reduction <add>, %28, %cst_12 [1] : vector<20x20xf32> to vector<20xf32>
    %30 = vector.shape_cast %29 : vector<20xf32> to vector<20x1xf32>
    %31 = tpu.reciprocal %30 {approx = true} : vector<20x1xf32> -> vector<20x1xf32>
    %32 = vector.broadcast %31 : vector<20x1xf32> to vector<20x20xf32>
    %33 = arith.mulf %28, %32 : vector<20x20xf32>
    %34 = arith.truncf %33 : vector<20x20xf32> to vector<20x20xbf16>
    %35 = vector.extract_strided_slice %17 {offsets = [0, 0], sizes = [20, 2], strides = [1, 1]} : vector<20x8xbf16> to vector<20x2xbf16>
    %cst_13 = arith.constant dense<0.000000e+00> : vector<20x2xf32>
    %36 = tpu.matmul %34, %35, %cst_13 {dimension_numbers = #tpu.dot_dimension_numbers<[1], [0], [0], [1], [0, 0, 1, 1], [], []>} : vector<20x20xbf16>, vector<20x2xbf16>, vector<20x2xf32> -> vector<20x2xf32>
    %37 = vector.extract_strided_slice %15 {offsets = [0, 2], sizes = [20, 2], strides = [1, 1]} : vector<20x8xbf16> to vector<20x2xbf16>
    %38 = vector.extract_strided_slice %16 {offsets = [0, 2], sizes = [20, 2], strides = [1, 1]} : vector<20x8xbf16> to vector<20x2xbf16>
    %cst_14 = arith.constant dense<0.000000e+00> : vector<20x20xf32>
    %39 = tpu.matmul %37, %38, %cst_14 {dimension_numbers = #tpu.dot_dimension_numbers<[1], [1], [0], [0], [0, 0, 1, 0], [], []>} : vector<20x2xbf16>, vector<20x2xbf16>, vector<20x20xf32> -> vector<20x20xf32>
    %cst_15 = arith.constant 0.707106769 : f32
    %40 = vector.broadcast %cst_15 : f32 to vector<20x20xf32>
    %41 = arith.mulf %39, %40 : vector<20x20xf32>
    %42 = arith.addf %41, %7 : vector<20x20xf32>
    %cst_16 = arith.constant dense<0xFF800000> : vector<20xf32>
    %43 = vector.multi_reduction <maximumf>, %42, %cst_16 [1] : vector<20x20xf32> to vector<20xf32>
    %44 = vector.shape_cast %43 : vector<20xf32> to vector<20x1xf32>
    %45 = vector.broadcast %44 : vector<20x1xf32> to vector<20x20xf32>
    %46 = arith.subf %42, %45 : vector<20x20xf32>
    %47 = math.exp %46 : vector<20x20xf32>
    %cst_17 = arith.constant dense<0.000000e+00> : vector<20xf32>
    %48 = vector.multi_reduction <add>, %47, %cst_17 [1] : vector<20x20xf32> to vector<20xf32>
    %49 = vector.shape_cast %48 : vector<20xf32> to vector<20x1xf32>
    %50 = tpu.reciprocal %49 {approx = true} : vector<20x1xf32> -> vector<20x1xf32>
    %51 = vector.broadcast %50 : vector<20x1xf32> to vector<20x20xf32>
    %52 = arith.mulf %47, %51 : vector<20x20xf32>
    %53 = arith.truncf %52 : vector<20x20xf32> to vector<20x20xbf16>
    %54 = vector.extract_strided_slice %17 {offsets = [0, 2], sizes = [20, 2], strides = [1, 1]} : vector<20x8xbf16> to vector<20x2xbf16>
    %cst_18 = arith.constant dense<0.000000e+00> : vector<20x2xf32>
    %55 = tpu.matmul %53, %54, %cst_18 {dimension_numbers = #tpu.dot_dimension_numbers<[1], [0], [0], [1], [0, 0, 1, 1], [], []>} : vector<20x20xbf16>, vector<20x2xbf16>, vector<20x2xf32> -> vector<20x2xf32>
    %56 = vector.extract_strided_slice %15 {offsets = [0, 4], sizes = [20, 2], strides = [1, 1]} : vector<20x8xbf16> to vector<20x2xbf16>
    %57 = vector.extract_strided_slice %16 {offsets = [0, 4], sizes = [20, 2], strides = [1, 1]} : vector<20x8xbf16> to vector<20x2xbf16>
    %cst_19 = arith.constant dense<0.000000e+00> : vector<20x20xf32>
    %58 = tpu.matmul %56, %57, %cst_19 {dimension_numbers = #tpu.dot_dimension_numbers<[1], [1], [0], [0], [0, 0, 1, 0], [], []>} : vector<20x2xbf16>, vector<20x2xbf16>, vector<20x20xf32> -> vector<20x20xf32>
    %cst_20 = arith.constant 0.707106769 : f32
    %59 = vector.broadcast %cst_20 : f32 to vector<20x20xf32>
    %60 = arith.mulf %58, %59 : vector<20x20xf32>
    %61 = arith.addf %60, %7 : vector<20x20xf32>
    %cst_21 = arith.constant dense<0xFF800000> : vector<20xf32>
    %62 = vector.multi_reduction <maximumf>, %61, %cst_21 [1] : vector<20x20xf32> to vector<20xf32>
    %63 = vector.shape_cast %62 : vector<20xf32> to vector<20x1xf32>
    %64 = vector.broadcast %63 : vector<20x1xf32> to vector<20x20xf32>
    %65 = arith.subf %61, %64 : vector<20x20xf32>
    %66 = math.exp %65 : vector<20x20xf32>
    %cst_22 = arith.constant dense<0.000000e+00> : vector<20xf32>
    %67 = vector.multi_reduction <add>, %66, %cst_22 [1] : vector<20x20xf32> to vector<20xf32>
    %68 = vector.shape_cast %67 : vector<20xf32> to vector<20x1xf32>
    %69 = tpu.reciprocal %68 {approx = true} : vector<20x1xf32> -> vector<20x1xf32>
    %70 = vector.broadcast %69 : vector<20x1xf32> to vector<20x20xf32>
    %71 = arith.mulf %66, %70 : vector<20x20xf32>
    %72 = arith.truncf %71 : vector<20x20xf32> to vector<20x20xbf16>
    %73 = vector.extract_strided_slice %17 {offsets = [0, 4], sizes = [20, 2], strides = [1, 1]} : vector<20x8xbf16> to vector<20x2xbf16>
    %cst_23 = arith.constant dense<0.000000e+00> : vector<20x2xf32>
    %74 = tpu.matmul %72, %73, %cst_23 {dimension_numbers = #tpu.dot_dimension_numbers<[1], [0], [0], [1], [0, 0, 1, 1], [], []>} : vector<20x20xbf16>, vector<20x2xbf16>, vector<20x2xf32> -> vector<20x2xf32>
    %75 = vector.extract_strided_slice %15 {offsets = [0, 6], sizes = [20, 2], strides = [1, 1]} : vector<20x8xbf16> to vector<20x2xbf16>
    %76 = vector.extract_strided_slice %16 {offsets = [0, 6], sizes = [20, 2], strides = [1, 1]} : vector<20x8xbf16> to vector<20x2xbf16>
    %cst_24 = arith.constant dense<0.000000e+00> : vector<20x20xf32>
    %77 = tpu.matmul %75, %76, %cst_24 {dimension_numbers = #tpu.dot_dimension_numbers<[1], [1], [0], [0], [0, 0, 1, 0], [], []>} : vector<20x2xbf16>, vector<20x2xbf16>, vector<20x20xf32> -> vector<20x20xf32>
    %cst_25 = arith.constant 0.707106769 : f32
    %78 = vector.broadcast %cst_25 : f32 to vector<20x20xf32>
    %79 = arith.mulf %77, %78 : vector<20x20xf32>
    %80 = arith.addf %79, %7 : vector<20x20xf32>
    %cst_26 = arith.constant dense<0xFF800000> : vector<20xf32>
    %81 = vector.multi_reduction <maximumf>, %80, %cst_26 [1] : vector<20x20xf32> to vector<20xf32>
    %82 = vector.shape_cast %81 : vector<20xf32> to vector<20x1xf32>
    %83 = vector.broadcast %82 : vector<20x1xf32> to vector<20x20xf32>
    %84 = arith.subf %80, %83 : vector<20x20xf32>
    %85 = math.exp %84 : vector<20x20xf32>
    %cst_27 = arith.constant dense<0.000000e+00> : vector<20xf32>
    %86 = vector.multi_reduction <add>, %85, %cst_27 [1] : vector<20x20xf32> to vector<20xf32>
    %87 = vector.shape_cast %86 : vector<20xf32> to vector<20x1xf32>
    %88 = tpu.reciprocal %87 {approx = true} : vector<20x1xf32> -> vector<20x1xf32>
    %89 = vector.broadcast %88 : vector<20x1xf32> to vector<20x20xf32>
    %90 = arith.mulf %85, %89 : vector<20x20xf32>
    %91 = arith.truncf %90 : vector<20x20xf32> to vector<20x20xbf16>
    %92 = vector.extract_strided_slice %17 {offsets = [0, 6], sizes = [20, 2], strides = [1, 1]} : vector<20x8xbf16> to vector<20x2xbf16>
    %cst_28 = arith.constant dense<0.000000e+00> : vector<20x2xf32>
    %93 = tpu.matmul %91, %92, %cst_28 {dimension_numbers = #tpu.dot_dimension_numbers<[1], [0], [0], [1], [0, 0, 1, 1], [], []>} : vector<20x20xbf16>, vector<20x2xbf16>, vector<20x2xf32> -> vector<20x2xf32>
    %94 = tpu.concatenate %36, %55, %74, %93 in 1 : vector<20x2xf32>, vector<20x2xf32>, vector<20x2xf32>, vector<20x2xf32> -> vector<20x8xf32>
    %c0_29 = arith.constant 0 : index
    %c24 = arith.constant 24 : index
    %95 = vector.load %arg2[%c0_29, %c24] : memref<32x208xbf16, #tpu.memory_space<vmem>>, vector<8x8xbf16>
    %96 = arith.truncf %94 : vector<20x8xf32> to vector<20x8xbf16>
    %cst_30 = arith.constant dense<0.000000e+00> : vector<20x8xf32>
    %97 = tpu.matmul %96, %95, %cst_30 {dimension_numbers = #tpu.dot_dimension_numbers<[1], [0], [0], [1], [0, 0, 1, 1], [], []>} : vector<20x8xbf16>, vector<8x8xbf16>, vector<20x8xf32> -> vector<20x8xf32>
    %98 = arith.addf %6, %97 : vector<20x8xf32>
    %c0_31 = arith.constant 0 : index
    %c24_32 = arith.constant 24 : index
    %99 = vector.load %arg3[%c0_31, %c24_32] : memref<20x256xf32, #tpu.memory_space<vmem>>, vector<1x8xf32>
    %100 = vector.broadcast %99 : vector<1x8xf32> to vector<20x8xf32>
    %101 = arith.addf %98, %100 : vector<20x8xf32>
    %c0_33 = arith.constant 0 : index
    %c32 = arith.constant 32 : index
    %102 = vector.load %arg2[%c0_33, %c32] : memref<32x208xbf16, #tpu.memory_space<vmem>>, vector<8x16xbf16>
    %103 = arith.truncf %101 : vector<20x8xf32> to vector<20x8xbf16>
    %cst_34 = arith.constant dense<0.000000e+00> : vector<20x16xf32>
    %104 = tpu.matmul %103, %102, %cst_34 {dimension_numbers = #tpu.dot_dimension_numbers<[1], [0], [0], [1], [0, 0, 1, 1], [], []>} : vector<20x8xbf16>, vector<8x16xbf16>, vector<20x16xf32> -> vector<20x16xf32>
    %c0_35 = arith.constant 0 : index
    %c32_36 = arith.constant 32 : index
    %105 = vector.load %arg3[%c0_35, %c32_36] : memref<20x256xf32, #tpu.memory_space<vmem>>, vector<1x16xf32>
    %106 = vector.broadcast %105 : vector<1x16xf32> to vector<20x16xf32>
    %107 = arith.addf %104, %106 : vector<20x16xf32>
    %c0_37 = arith.constant 0 : index
    %c48 = arith.constant 48 : index
    %108 = vector.load %arg2[%c0_37, %c48] : memref<32x208xbf16, #tpu.memory_space<vmem>>, vector<16x8xbf16>
    %109 = arith.truncf %107 : vector<20x16xf32> to vector<20x16xbf16>
    %cst_38 = arith.constant dense<0.000000e+00> : vector<20x8xf32>
    %110 = tpu.matmul %109, %108, %cst_38 {dimension_numbers = #tpu.dot_dimension_numbers<[1], [0], [0], [1], [0, 0, 1, 1], [], []>} : vector<20x16xbf16>, vector<16x8xbf16>, vector<20x8xf32> -> vector<20x8xf32>
    %111 = arith.addf %101, %110 : vector<20x8xf32>
    %c0_39 = arith.constant 0 : index
    %c48_40 = arith.constant 48 : index
    %112 = vector.load %arg3[%c0_39, %c48_40] : memref<20x256xf32, #tpu.memory_space<vmem>>, vector<1x8xf32>
    %113 = vector.broadcast %112 : vector<1x8xf32> to vector<20x8xf32>
    %114 = arith.addf %111, %113 : vector<20x8xf32>
    %c0_41 = arith.constant 0 : index
    %c0_42 = arith.constant 0 : index
    %115 = vector.load %arg1[%c0_41, %c0_42] : memref<2x4xf32, #tpu.memory_space<vmem>>, vector<2x4xf32>
    %116 = tpu.concatenate %115, %115 in 1 : vector<2x4xf32>, vector<2x4xf32> -> vector<2x8xf32>
    %117 = tpu.concatenate %116, %116 in 1 : vector<2x8xf32>, vector<2x8xf32> -> vector<2x16xf32>
    %c0_43 = arith.constant 0 : index
    %c56 = arith.constant 56 : index
    %118 = vector.load %arg2[%c0_43, %c56] : memref<32x208xbf16, #tpu.memory_space<vmem>>, vector<8x16xbf16>
    %119 = arith.truncf %116 : vector<2x8xf32> to vector<2x8xbf16>
    %cst_44 = arith.constant dense<0.000000e+00> : vector<2x16xf32>
    %120 = tpu.matmul %119, %118, %cst_44 {dimension_numbers = #tpu.dot_dimension_numbers<[1], [0], [0], [1], [0, 0, 1, 1], [], []>} : vector<2x8xbf16>, vector<8x16xbf16>, vector<2x16xf32> -> vector<2x16xf32>
    %c0_45 = arith.constant 0 : index
    %c56_46 = arith.constant 56 : index
    %121 = vector.load %arg3[%c0_45, %c56_46] : memref<20x256xf32, #tpu.memory_space<vmem>>, vector<1x16xf32>
    %122 = vector.broadcast %121 : vector<1x16xf32> to vector<2x16xf32>
    %123 = arith.addf %120, %122 : vector<2x16xf32>
    %c0_47 = arith.constant 0 : index
    %c72 = arith.constant 72 : index
    %124 = vector.load %arg2[%c0_47, %c72] : memref<32x208xbf16, #tpu.memory_space<vmem>>, vector<16x16xbf16>
    %125 = arith.truncf %123 : vector<2x16xf32> to vector<2x16xbf16>
    %cst_48 = arith.constant dense<0.000000e+00> : vector<2x16xf32>
    %126 = tpu.matmul %125, %124, %cst_48 {dimension_numbers = #tpu.dot_dimension_numbers<[1], [0], [0], [1], [0, 0, 1, 1], [], []>} : vector<2x16xbf16>, vector<16x16xbf16>, vector<2x16xf32> -> vector<2x16xf32>
    %127 = arith.addf %117, %126 : vector<2x16xf32>
    %c0_49 = arith.constant 0 : index
    %c72_50 = arith.constant 72 : index
    %128 = vector.load %arg3[%c0_49, %c72_50] : memref<20x256xf32, #tpu.memory_space<vmem>>, vector<1x16xf32>
    %129 = vector.broadcast %128 : vector<1x16xf32> to vector<2x16xf32>
    %130 = arith.addf %127, %129 : vector<2x16xf32>
    %c0_51 = arith.constant 0 : index
    %c236 = arith.constant 236 : index
    %131 = vector.load %arg3[%c0_51, %c236] : memref<20x256xf32, #tpu.memory_space<vmem>>, vector<2x20xf32>
    %c0_52 = arith.constant 0 : index
    %c88 = arith.constant 88 : index
    %132 = vector.load %arg2[%c0_52, %c88] : memref<32x208xbf16, #tpu.memory_space<vmem>>, vector<16x16xbf16>
    %133 = arith.truncf %130 : vector<2x16xf32> to vector<2x16xbf16>
    %cst_53 = arith.constant dense<0.000000e+00> : vector<2x16xf32>
    %134 = tpu.matmul %133, %132, %cst_53 {dimension_numbers = #tpu.dot_dimension_numbers<[1], [0], [0], [1], [0, 0, 1, 1], [], []>} : vector<2x16xbf16>, vector<16x16xbf16>, vector<2x16xf32> -> vector<2x16xf32>
    %c0_54 = arith.constant 0 : index
    %c88_55 = arith.constant 88 : index
    %135 = vector.load %arg3[%c0_54, %c88_55] : memref<20x256xf32, #tpu.memory_space<vmem>>, vector<1x16xf32>
    %136 = vector.broadcast %135 : vector<1x16xf32> to vector<2x16xf32>
    %137 = arith.addf %134, %136 : vector<2x16xf32>
    %c0_56 = arith.constant 0 : index
    %c128 = arith.constant 128 : index
    %138 = vector.load %arg2[%c0_56, %c128] : memref<32x208xbf16, #tpu.memory_space<vmem>>, vector<8x32xbf16>
    %139 = arith.truncf %114 : vector<20x8xf32> to vector<20x8xbf16>
    %cst_57 = arith.constant dense<0.000000e+00> : vector<20x32xf32>
    %140 = tpu.matmul %139, %138, %cst_57 {dimension_numbers = #tpu.dot_dimension_numbers<[1], [0], [0], [1], [0, 0, 1, 1], [], []>} : vector<20x8xbf16>, vector<8x32xbf16>, vector<20x32xf32> -> vector<20x32xf32>
    %c0_58 = arith.constant 0 : index
    %c128_59 = arith.constant 128 : index
    %141 = vector.load %arg3[%c0_58, %c128_59] : memref<20x256xf32, #tpu.memory_space<vmem>>, vector<1x32xf32>
    %142 = vector.broadcast %141 : vector<1x32xf32> to vector<20x32xf32>
    %143 = arith.addf %140, %142 : vector<20x32xf32>
    %144 = arith.truncf %143 : vector<20x32xf32> to vector<20x32xbf16>
    %145 = arith.truncf %137 : vector<2x16xf32> to vector<2x16xbf16>
    %146 = vector.extract_strided_slice %144 {offsets = [0, 0], sizes = [20, 16], strides = [1, 1]} : vector<20x32xbf16> to vector<20x16xbf16>
    %147 = vector.extract_strided_slice %144 {offsets = [0, 16], sizes = [20, 16], strides = [1, 1]} : vector<20x32xbf16> to vector<20x16xbf16>
    %148 = vector.extract_strided_slice %145 {offsets = [0, 0], sizes = [2, 2], strides = [1, 1]} : vector<2x16xbf16> to vector<2x2xbf16>
    %149 = vector.extract_strided_slice %146 {offsets = [0, 0], sizes = [20, 2], strides = [1, 1]} : vector<20x16xbf16> to vector<20x2xbf16>
    %cst_60 = arith.constant dense<0.000000e+00> : vector<2x20xf32>
    %150 = tpu.matmul %148, %149, %cst_60 {dimension_numbers = #tpu.dot_dimension_numbers<[1], [1], [0], [0], [0, 0, 1, 0], [], []>} : vector<2x2xbf16>, vector<20x2xbf16>, vector<2x20xf32> -> vector<2x20xf32>
    %cst_61 = arith.constant 0.707106769 : f32
    %151 = vector.broadcast %cst_61 : f32 to vector<2x20xf32>
    %152 = arith.mulf %150, %151 : vector<2x20xf32>
    %153 = arith.addf %152, %131 : vector<2x20xf32>
    %cst_62 = arith.constant dense<0xFF800000> : vector<2xf32>
    %154 = vector.multi_reduction <maximumf>, %153, %cst_62 [1] : vector<2x20xf32> to vector<2xf32>
    %155 = vector.shape_cast %154 : vector<2xf32> to vector<2x1xf32>
    %156 = vector.broadcast %155 : vector<2x1xf32> to vector<2x20xf32>
    %157 = arith.subf %153, %156 : vector<2x20xf32>
    %158 = math.exp %157 : vector<2x20xf32>
    %cst_63 = arith.constant dense<0.000000e+00> : vector<2xf32>
    %159 = vector.multi_reduction <add>, %158, %cst_63 [1] : vector<2x20xf32> to vector<2xf32>
    %160 = vector.shape_cast %159 : vector<2xf32> to vector<2x1xf32>
    %161 = tpu.reciprocal %160 {approx = true} : vector<2x1xf32> -> vector<2x1xf32>
    %162 = vector.broadcast %161 : vector<2x1xf32> to vector<2x20xf32>
    %163 = arith.mulf %158, %162 : vector<2x20xf32>
    %164 = arith.truncf %163 : vector<2x20xf32> to vector<2x20xbf16>
    %165 = vector.extract_strided_slice %147 {offsets = [0, 0], sizes = [20, 2], strides = [1, 1]} : vector<20x16xbf16> to vector<20x2xbf16>
    %cst_64 = arith.constant dense<0.000000e+00> : vector<2x2xf32>
    %166 = tpu.matmul %164, %165, %cst_64 {dimension_numbers = #tpu.dot_dimension_numbers<[1], [0], [0], [1], [0, 0, 1, 1], [], []>} : vector<2x20xbf16>, vector<20x2xbf16>, vector<2x2xf32> -> vector<2x2xf32>
    %167 = vector.extract_strided_slice %145 {offsets = [0, 2], sizes = [2, 2], strides = [1, 1]} : vector<2x16xbf16> to vector<2x2xbf16>
    %168 = vector.extract_strided_slice %146 {offsets = [0, 2], sizes = [20, 2], strides = [1, 1]} : vector<20x16xbf16> to vector<20x2xbf16>
    %cst_65 = arith.constant dense<0.000000e+00> : vector<2x20xf32>
    %169 = tpu.matmul %167, %168, %cst_65 {dimension_numbers = #tpu.dot_dimension_numbers<[1], [1], [0], [0], [0, 0, 1, 0], [], []>} : vector<2x2xbf16>, vector<20x2xbf16>, vector<2x20xf32> -> vector<2x20xf32>
    %cst_66 = arith.constant 0.707106769 : f32
    %170 = vector.broadcast %cst_66 : f32 to vector<2x20xf32>
    %171 = arith.mulf %169, %170 : vector<2x20xf32>
    %172 = arith.addf %171, %131 : vector<2x20xf32>
    %cst_67 = arith.constant dense<0xFF800000> : vector<2xf32>
    %173 = vector.multi_reduction <maximumf>, %172, %cst_67 [1] : vector<2x20xf32> to vector<2xf32>
    %174 = vector.shape_cast %173 : vector<2xf32> to vector<2x1xf32>
    %175 = vector.broadcast %174 : vector<2x1xf32> to vector<2x20xf32>
    %176 = arith.subf %172, %175 : vector<2x20xf32>
    %177 = math.exp %176 : vector<2x20xf32>
    %cst_68 = arith.constant dense<0.000000e+00> : vector<2xf32>
    %178 = vector.multi_reduction <add>, %177, %cst_68 [1] : vector<2x20xf32> to vector<2xf32>
    %179 = vector.shape_cast %178 : vector<2xf32> to vector<2x1xf32>
    %180 = tpu.reciprocal %179 {approx = true} : vector<2x1xf32> -> vector<2x1xf32>
    %181 = vector.broadcast %180 : vector<2x1xf32> to vector<2x20xf32>
    %182 = arith.mulf %177, %181 : vector<2x20xf32>
    %183 = arith.truncf %182 : vector<2x20xf32> to vector<2x20xbf16>
    %184 = vector.extract_strided_slice %147 {offsets = [0, 2], sizes = [20, 2], strides = [1, 1]} : vector<20x16xbf16> to vector<20x2xbf16>
    %cst_69 = arith.constant dense<0.000000e+00> : vector<2x2xf32>
    %185 = tpu.matmul %183, %184, %cst_69 {dimension_numbers = #tpu.dot_dimension_numbers<[1], [0], [0], [1], [0, 0, 1, 1], [], []>} : vector<2x20xbf16>, vector<20x2xbf16>, vector<2x2xf32> -> vector<2x2xf32>
    %186 = vector.extract_strided_slice %145 {offsets = [0, 4], sizes = [2, 2], strides = [1, 1]} : vector<2x16xbf16> to vector<2x2xbf16>
    %187 = vector.extract_strided_slice %146 {offsets = [0, 4], sizes = [20, 2], strides = [1, 1]} : vector<20x16xbf16> to vector<20x2xbf16>
    %cst_70 = arith.constant dense<0.000000e+00> : vector<2x20xf32>
    %188 = tpu.matmul %186, %187, %cst_70 {dimension_numbers = #tpu.dot_dimension_numbers<[1], [1], [0], [0], [0, 0, 1, 0], [], []>} : vector<2x2xbf16>, vector<20x2xbf16>, vector<2x20xf32> -> vector<2x20xf32>
    %cst_71 = arith.constant 0.707106769 : f32
    %189 = vector.broadcast %cst_71 : f32 to vector<2x20xf32>
    %190 = arith.mulf %188, %189 : vector<2x20xf32>
    %191 = arith.addf %190, %131 : vector<2x20xf32>
    %cst_72 = arith.constant dense<0xFF800000> : vector<2xf32>
    %192 = vector.multi_reduction <maximumf>, %191, %cst_72 [1] : vector<2x20xf32> to vector<2xf32>
    %193 = vector.shape_cast %192 : vector<2xf32> to vector<2x1xf32>
    %194 = vector.broadcast %193 : vector<2x1xf32> to vector<2x20xf32>
    %195 = arith.subf %191, %194 : vector<2x20xf32>
    %196 = math.exp %195 : vector<2x20xf32>
    %cst_73 = arith.constant dense<0.000000e+00> : vector<2xf32>
    %197 = vector.multi_reduction <add>, %196, %cst_73 [1] : vector<2x20xf32> to vector<2xf32>
    %198 = vector.shape_cast %197 : vector<2xf32> to vector<2x1xf32>
    %199 = tpu.reciprocal %198 {approx = true} : vector<2x1xf32> -> vector<2x1xf32>
    %200 = vector.broadcast %199 : vector<2x1xf32> to vector<2x20xf32>
    %201 = arith.mulf %196, %200 : vector<2x20xf32>
    %202 = arith.truncf %201 : vector<2x20xf32> to vector<2x20xbf16>
    %203 = vector.extract_strided_slice %147 {offsets = [0, 4], sizes = [20, 2], strides = [1, 1]} : vector<20x16xbf16> to vector<20x2xbf16>
    %cst_74 = arith.constant dense<0.000000e+00> : vector<2x2xf32>
    %204 = tpu.matmul %202, %203, %cst_74 {dimension_numbers = #tpu.dot_dimension_numbers<[1], [0], [0], [1], [0, 0, 1, 1], [], []>} : vector<2x20xbf16>, vector<20x2xbf16>, vector<2x2xf32> -> vector<2x2xf32>
    %205 = vector.extract_strided_slice %145 {offsets = [0, 6], sizes = [2, 2], strides = [1, 1]} : vector<2x16xbf16> to vector<2x2xbf16>
    %206 = vector.extract_strided_slice %146 {offsets = [0, 6], sizes = [20, 2], strides = [1, 1]} : vector<20x16xbf16> to vector<20x2xbf16>
    %cst_75 = arith.constant dense<0.000000e+00> : vector<2x20xf32>
    %207 = tpu.matmul %205, %206, %cst_75 {dimension_numbers = #tpu.dot_dimension_numbers<[1], [1], [0], [0], [0, 0, 1, 0], [], []>} : vector<2x2xbf16>, vector<20x2xbf16>, vector<2x20xf32> -> vector<2x20xf32>
    %cst_76 = arith.constant 0.707106769 : f32
    %208 = vector.broadcast %cst_76 : f32 to vector<2x20xf32>
    %209 = arith.mulf %207, %208 : vector<2x20xf32>
    %210 = arith.addf %209, %131 : vector<2x20xf32>
    %cst_77 = arith.constant dense<0xFF800000> : vector<2xf32>
    %211 = vector.multi_reduction <maximumf>, %210, %cst_77 [1] : vector<2x20xf32> to vector<2xf32>
    %212 = vector.shape_cast %211 : vector<2xf32> to vector<2x1xf32>
    %213 = vector.broadcast %212 : vector<2x1xf32> to vector<2x20xf32>
    %214 = arith.subf %210, %213 : vector<2x20xf32>
    %215 = math.exp %214 : vector<2x20xf32>
    %cst_78 = arith.constant dense<0.000000e+00> : vector<2xf32>
    %216 = vector.multi_reduction <add>, %215, %cst_78 [1] : vector<2x20xf32> to vector<2xf32>
    %217 = vector.shape_cast %216 : vector<2xf32> to vector<2x1xf32>
    %218 = tpu.reciprocal %217 {approx = true} : vector<2x1xf32> -> vector<2x1xf32>
    %219 = vector.broadcast %218 : vector<2x1xf32> to vector<2x20xf32>
    %220 = arith.mulf %215, %219 : vector<2x20xf32>
    %221 = arith.truncf %220 : vector<2x20xf32> to vector<2x20xbf16>
    %222 = vector.extract_strided_slice %147 {offsets = [0, 6], sizes = [20, 2], strides = [1, 1]} : vector<20x16xbf16> to vector<20x2xbf16>
    %cst_79 = arith.constant dense<0.000000e+00> : vector<2x2xf32>
    %223 = tpu.matmul %221, %222, %cst_79 {dimension_numbers = #tpu.dot_dimension_numbers<[1], [0], [0], [1], [0, 0, 1, 1], [], []>} : vector<2x20xbf16>, vector<20x2xbf16>, vector<2x2xf32> -> vector<2x2xf32>
    %224 = vector.extract_strided_slice %145 {offsets = [0, 8], sizes = [2, 2], strides = [1, 1]} : vector<2x16xbf16> to vector<2x2xbf16>
    %225 = vector.extract_strided_slice %146 {offsets = [0, 8], sizes = [20, 2], strides = [1, 1]} : vector<20x16xbf16> to vector<20x2xbf16>
    %cst_80 = arith.constant dense<0.000000e+00> : vector<2x20xf32>
    %226 = tpu.matmul %224, %225, %cst_80 {dimension_numbers = #tpu.dot_dimension_numbers<[1], [1], [0], [0], [0, 0, 1, 0], [], []>} : vector<2x2xbf16>, vector<20x2xbf16>, vector<2x20xf32> -> vector<2x20xf32>
    %cst_81 = arith.constant 0.707106769 : f32
    %227 = vector.broadcast %cst_81 : f32 to vector<2x20xf32>
    %228 = arith.mulf %226, %227 : vector<2x20xf32>
    %229 = arith.addf %228, %131 : vector<2x20xf32>
    %cst_82 = arith.constant dense<0xFF800000> : vector<2xf32>
    %230 = vector.multi_reduction <maximumf>, %229, %cst_82 [1] : vector<2x20xf32> to vector<2xf32>
    %231 = vector.shape_cast %230 : vector<2xf32> to vector<2x1xf32>
    %232 = vector.broadcast %231 : vector<2x1xf32> to vector<2x20xf32>
    %233 = arith.subf %229, %232 : vector<2x20xf32>
    %234 = math.exp %233 : vector<2x20xf32>
    %cst_83 = arith.constant dense<0.000000e+00> : vector<2xf32>
    %235 = vector.multi_reduction <add>, %234, %cst_83 [1] : vector<2x20xf32> to vector<2xf32>
    %236 = vector.shape_cast %235 : vector<2xf32> to vector<2x1xf32>
    %237 = tpu.reciprocal %236 {approx = true} : vector<2x1xf32> -> vector<2x1xf32>
    %238 = vector.broadcast %237 : vector<2x1xf32> to vector<2x20xf32>
    %239 = arith.mulf %234, %238 : vector<2x20xf32>
    %240 = arith.truncf %239 : vector<2x20xf32> to vector<2x20xbf16>
    %241 = vector.extract_strided_slice %147 {offsets = [0, 8], sizes = [20, 2], strides = [1, 1]} : vector<20x16xbf16> to vector<20x2xbf16>
    %cst_84 = arith.constant dense<0.000000e+00> : vector<2x2xf32>
    %242 = tpu.matmul %240, %241, %cst_84 {dimension_numbers = #tpu.dot_dimension_numbers<[1], [0], [0], [1], [0, 0, 1, 1], [], []>} : vector<2x20xbf16>, vector<20x2xbf16>, vector<2x2xf32> -> vector<2x2xf32>
    %243 = vector.extract_strided_slice %145 {offsets = [0, 10], sizes = [2, 2], strides = [1, 1]} : vector<2x16xbf16> to vector<2x2xbf16>
    %244 = vector.extract_strided_slice %146 {offsets = [0, 10], sizes = [20, 2], strides = [1, 1]} : vector<20x16xbf16> to vector<20x2xbf16>
    %cst_85 = arith.constant dense<0.000000e+00> : vector<2x20xf32>
    %245 = tpu.matmul %243, %244, %cst_85 {dimension_numbers = #tpu.dot_dimension_numbers<[1], [1], [0], [0], [0, 0, 1, 0], [], []>} : vector<2x2xbf16>, vector<20x2xbf16>, vector<2x20xf32> -> vector<2x20xf32>
    %cst_86 = arith.constant 0.707106769 : f32
    %246 = vector.broadcast %cst_86 : f32 to vector<2x20xf32>
    %247 = arith.mulf %245, %246 : vector<2x20xf32>
    %248 = arith.addf %247, %131 : vector<2x20xf32>
    %cst_87 = arith.constant dense<0xFF800000> : vector<2xf32>
    %249 = vector.multi_reduction <maximumf>, %248, %cst_87 [1] : vector<2x20xf32> to vector<2xf32>
    %250 = vector.shape_cast %249 : vector<2xf32> to vector<2x1xf32>
    %251 = vector.broadcast %250 : vector<2x1xf32> to vector<2x20xf32>
    %252 = arith.subf %248, %251 : vector<2x20xf32>
    %253 = math.exp %252 : vector<2x20xf32>
    %cst_88 = arith.constant dense<0.000000e+00> : vector<2xf32>
    %254 = vector.multi_reduction <add>, %253, %cst_88 [1] : vector<2x20xf32> to vector<2xf32>
    %255 = vector.shape_cast %254 : vector<2xf32> to vector<2x1xf32>
    %256 = tpu.reciprocal %255 {approx = true} : vector<2x1xf32> -> vector<2x1xf32>
    %257 = vector.broadcast %256 : vector<2x1xf32> to vector<2x20xf32>
    %258 = arith.mulf %253, %257 : vector<2x20xf32>
    %259 = arith.truncf %258 : vector<2x20xf32> to vector<2x20xbf16>
    %260 = vector.extract_strided_slice %147 {offsets = [0, 10], sizes = [20, 2], strides = [1, 1]} : vector<20x16xbf16> to vector<20x2xbf16>
    %cst_89 = arith.constant dense<0.000000e+00> : vector<2x2xf32>
    %261 = tpu.matmul %259, %260, %cst_89 {dimension_numbers = #tpu.dot_dimension_numbers<[1], [0], [0], [1], [0, 0, 1, 1], [], []>} : vector<2x20xbf16>, vector<20x2xbf16>, vector<2x2xf32> -> vector<2x2xf32>
    %262 = vector.extract_strided_slice %145 {offsets = [0, 12], sizes = [2, 2], strides = [1, 1]} : vector<2x16xbf16> to vector<2x2xbf16>
    %263 = vector.extract_strided_slice %146 {offsets = [0, 12], sizes = [20, 2], strides = [1, 1]} : vector<20x16xbf16> to vector<20x2xbf16>
    %cst_90 = arith.constant dense<0.000000e+00> : vector<2x20xf32>
    %264 = tpu.matmul %262, %263, %cst_90 {dimension_numbers = #tpu.dot_dimension_numbers<[1], [1], [0], [0], [0, 0, 1, 0], [], []>} : vector<2x2xbf16>, vector<20x2xbf16>, vector<2x20xf32> -> vector<2x20xf32>
    %cst_91 = arith.constant 0.707106769 : f32
    %265 = vector.broadcast %cst_91 : f32 to vector<2x20xf32>
    %266 = arith.mulf %264, %265 : vector<2x20xf32>
    %267 = arith.addf %266, %131 : vector<2x20xf32>
    %cst_92 = arith.constant dense<0xFF800000> : vector<2xf32>
    %268 = vector.multi_reduction <maximumf>, %267, %cst_92 [1] : vector<2x20xf32> to vector<2xf32>
    %269 = vector.shape_cast %268 : vector<2xf32> to vector<2x1xf32>
    %270 = vector.broadcast %269 : vector<2x1xf32> to vector<2x20xf32>
    %271 = arith.subf %267, %270 : vector<2x20xf32>
    %272 = math.exp %271 : vector<2x20xf32>
    %cst_93 = arith.constant dense<0.000000e+00> : vector<2xf32>
    %273 = vector.multi_reduction <add>, %272, %cst_93 [1] : vector<2x20xf32> to vector<2xf32>
    %274 = vector.shape_cast %273 : vector<2xf32> to vector<2x1xf32>
    %275 = tpu.reciprocal %274 {approx = true} : vector<2x1xf32> -> vector<2x1xf32>
    %276 = vector.broadcast %275 : vector<2x1xf32> to vector<2x20xf32>
    %277 = arith.mulf %272, %276 : vector<2x20xf32>
    %278 = arith.truncf %277 : vector<2x20xf32> to vector<2x20xbf16>
    %279 = vector.extract_strided_slice %147 {offsets = [0, 12], sizes = [20, 2], strides = [1, 1]} : vector<20x16xbf16> to vector<20x2xbf16>
    %cst_94 = arith.constant dense<0.000000e+00> : vector<2x2xf32>
    %280 = tpu.matmul %278, %279, %cst_94 {dimension_numbers = #tpu.dot_dimension_numbers<[1], [0], [0], [1], [0, 0, 1, 1], [], []>} : vector<2x20xbf16>, vector<20x2xbf16>, vector<2x2xf32> -> vector<2x2xf32>
    %281 = vector.extract_strided_slice %145 {offsets = [0, 14], sizes = [2, 2], strides = [1, 1]} : vector<2x16xbf16> to vector<2x2xbf16>
    %282 = vector.extract_strided_slice %146 {offsets = [0, 14], sizes = [20, 2], strides = [1, 1]} : vector<20x16xbf16> to vector<20x2xbf16>
    %cst_95 = arith.constant dense<0.000000e+00> : vector<2x20xf32>
    %283 = tpu.matmul %281, %282, %cst_95 {dimension_numbers = #tpu.dot_dimension_numbers<[1], [1], [0], [0], [0, 0, 1, 0], [], []>} : vector<2x2xbf16>, vector<20x2xbf16>, vector<2x20xf32> -> vector<2x20xf32>
    %cst_96 = arith.constant 0.707106769 : f32
    %284 = vector.broadcast %cst_96 : f32 to vector<2x20xf32>
    %285 = arith.mulf %283, %284 : vector<2x20xf32>
    %286 = arith.addf %285, %131 : vector<2x20xf32>
    %cst_97 = arith.constant dense<0xFF800000> : vector<2xf32>
    %287 = vector.multi_reduction <maximumf>, %286, %cst_97 [1] : vector<2x20xf32> to vector<2xf32>
    %288 = vector.shape_cast %287 : vector<2xf32> to vector<2x1xf32>
    %289 = vector.broadcast %288 : vector<2x1xf32> to vector<2x20xf32>
    %290 = arith.subf %286, %289 : vector<2x20xf32>
    %291 = math.exp %290 : vector<2x20xf32>
    %cst_98 = arith.constant dense<0.000000e+00> : vector<2xf32>
    %292 = vector.multi_reduction <add>, %291, %cst_98 [1] : vector<2x20xf32> to vector<2xf32>
    %293 = vector.shape_cast %292 : vector<2xf32> to vector<2x1xf32>
    %294 = tpu.reciprocal %293 {approx = true} : vector<2x1xf32> -> vector<2x1xf32>
    %295 = vector.broadcast %294 : vector<2x1xf32> to vector<2x20xf32>
    %296 = arith.mulf %291, %295 : vector<2x20xf32>
    %297 = arith.truncf %296 : vector<2x20xf32> to vector<2x20xbf16>
    %298 = vector.extract_strided_slice %147 {offsets = [0, 14], sizes = [20, 2], strides = [1, 1]} : vector<20x16xbf16> to vector<20x2xbf16>
    %cst_99 = arith.constant dense<0.000000e+00> : vector<2x2xf32>
    %299 = tpu.matmul %297, %298, %cst_99 {dimension_numbers = #tpu.dot_dimension_numbers<[1], [0], [0], [1], [0, 0, 1, 1], [], []>} : vector<2x20xbf16>, vector<20x2xbf16>, vector<2x2xf32> -> vector<2x2xf32>
    %300 = tpu.concatenate %166, %185, %204, %223, %242, %261, %280, %299 in 1 : vector<2x2xf32>, vector<2x2xf32>, vector<2x2xf32>, vector<2x2xf32>, vector<2x2xf32>, vector<2x2xf32>, vector<2x2xf32>, vector<2x2xf32> -> vector<2x16xf32>
    %c0_100 = arith.constant 0 : index
    %c104 = arith.constant 104 : index
    %301 = vector.load %arg2[%c0_100, %c104] : memref<32x208xbf16, #tpu.memory_space<vmem>>, vector<16x16xbf16>
    %302 = arith.truncf %300 : vector<2x16xf32> to vector<2x16xbf16>
    %cst_101 = arith.constant dense<0.000000e+00> : vector<2x16xf32>
    %303 = tpu.matmul %302, %301, %cst_101 {dimension_numbers = #tpu.dot_dimension_numbers<[1], [0], [0], [1], [0, 0, 1, 1], [], []>} : vector<2x16xbf16>, vector<16x16xbf16>, vector<2x16xf32> -> vector<2x16xf32>
    %304 = arith.addf %130, %303 : vector<2x16xf32>
    %c0_102 = arith.constant 0 : index
    %c104_103 = arith.constant 104 : index
    %305 = vector.load %arg3[%c0_102, %c104_103] : memref<20x256xf32, #tpu.memory_space<vmem>>, vector<1x16xf32>
    %306 = vector.broadcast %305 : vector<1x16xf32> to vector<2x16xf32>
    %307 = arith.addf %304, %306 : vector<2x16xf32>
    %c0_104 = arith.constant 0 : index
    %c160 = arith.constant 160 : index
    %308 = vector.load %arg2[%c0_104, %c160] : memref<32x208xbf16, #tpu.memory_space<vmem>>, vector<16x32xbf16>
    %309 = arith.truncf %307 : vector<2x16xf32> to vector<2x16xbf16>
    %cst_105 = arith.constant dense<0.000000e+00> : vector<2x32xf32>
    %310 = tpu.matmul %309, %308, %cst_105 {dimension_numbers = #tpu.dot_dimension_numbers<[1], [0], [0], [1], [0, 0, 1, 1], [], []>} : vector<2x16xbf16>, vector<16x32xbf16>, vector<2x32xf32> -> vector<2x32xf32>
    %c0_106 = arith.constant 0 : index
    %c160_107 = arith.constant 160 : index
    %311 = vector.load %arg3[%c0_106, %c160_107] : memref<20x256xf32, #tpu.memory_space<vmem>>, vector<1x32xf32>
    %312 = vector.broadcast %311 : vector<1x32xf32> to vector<2x32xf32>
    %313 = arith.addf %310, %312 : vector<2x32xf32>
    %c0_108 = arith.constant 0 : index
    %c192 = arith.constant 192 : index
    %314 = vector.load %arg2[%c0_108, %c192] : memref<32x208xbf16, #tpu.memory_space<vmem>>, vector<32x16xbf16>
    %315 = arith.truncf %313 : vector<2x32xf32> to vector<2x32xbf16>
    %cst_109 = arith.constant dense<0.000000e+00> : vector<2x16xf32>
    %316 = tpu.matmul %315, %314, %cst_109 {dimension_numbers = #tpu.dot_dimension_numbers<[1], [0], [0], [1], [0, 0, 1, 1], [], []>} : vector<2x32xbf16>, vector<32x16xbf16>, vector<2x16xf32> -> vector<2x16xf32>
    %317 = arith.addf %307, %316 : vector<2x16xf32>
    %c0_110 = arith.constant 0 : index
    %c192_111 = arith.constant 192 : index
    %318 = vector.load %arg3[%c0_110, %c192_111] : memref<20x256xf32, #tpu.memory_space<vmem>>, vector<1x16xf32>
    %319 = vector.broadcast %318 : vector<1x16xf32> to vector<2x16xf32>
    %320 = arith.addf %317, %319 : vector<2x16xf32>
    %c0_112 = arith.constant 0 : index
    %c120 = arith.constant 120 : index
    %321 = vector.load %arg2[%c0_112, %c120] : memref<32x208xbf16, #tpu.memory_space<vmem>>, vector<16x8xbf16>
    %322 = arith.truncf %320 : vector<2x16xf32> to vector<2x16xbf16>
    %cst_113 = arith.constant dense<0.000000e+00> : vector<2x8xf32>
    %323 = tpu.matmul %322, %321, %cst_113 {dimension_numbers = #tpu.dot_dimension_numbers<[1], [0], [0], [1], [0, 0, 1, 1], [], []>} : vector<2x16xbf16>, vector<16x8xbf16>, vector<2x8xf32> -> vector<2x8xf32>
    %c0_114 = arith.constant 0 : index
    %c120_115 = arith.constant 120 : index
    %324 = vector.load %arg3[%c0_114, %c120_115] : memref<20x256xf32, #tpu.memory_space<vmem>>, vector<1x8xf32>
    %325 = vector.broadcast %324 : vector<1x8xf32> to vector<2x8xf32>
    %326 = arith.addf %323, %325 : vector<2x8xf32>
    %cst_116 = arith.constant 0.000000e+00 : f32
    %327 = vector.broadcast %cst_116 : f32 to vector<2x8xf32>
    %328 = arith.subf %327, %326 : vector<2x8xf32>
    %329 = math.exp %328 : vector<2x8xf32>
    %cst_117 = arith.constant 1.000000e+00 : f32
    %330 = vector.broadcast %cst_117 : f32 to vector<2x8xf32>
    %331 = arith.addf %330, %329 : vector<2x8xf32>
    %332 = tpu.reciprocal %331 {approx = true} : vector<2x8xf32> -> vector<2x8xf32>
    %c0_118 = arith.constant 0 : index
    %c0_119 = arith.constant 0 : index
    %333 = vector.load %arg4[%c0_118, %c0_119] : memref<2x8xf32, #tpu.memory_space<vmem>>, vector<2x8xf32>
    tpu.vector_store %arg4[%c0_118, %c0_119], %332 {strides = array<i32>} : memref<2x8xf32, #tpu.memory_space<vmem>>, vector<2x8xf32>,
    return
  }
}

</mosaic_0001>

<llo_original>
// kernel: tranad_forward.1
$region0: #{tranad_forward.1}
  #allocation0 [shape = 'u32[]', space=smem, size = 0x4, offset = 0x4, fixed_abs, tag = 'smem constant byte address 0x4 - core index']
  #allocation1 [shape = 'u32[144,128]{1,0:T(1,128)}', space=vmem, size = 0x12000, scoped, tag = 'internal scratch']
  %s0 = inlined_call_operand.vmem [shape: f32[20,4], index: 0, kind: input, shape index: {}]
  %s1 = inlined_call_operand.vmem [shape: f32[2,4], index: 1, kind: input, shape index: {}]
  %s2 = inlined_call_operand.vmem [shape: bf16[32,208], index: 2, kind: input, shape index: {}]
  %s3 = inlined_call_operand.vmem [shape: f32[20,256], index: 3, kind: input, shape index: {}]
  %s4 = inlined_call_operand.vmem [shape: f32[2,8], index: 4, kind: output, shape index: {}]
  %s5 = sld [smem:[#allocation0]]
  $region26: #{tranad_forward.1} parent=0
    _
  %s7 = ssub.s32 1, %s5
  %s8 = scalar_select 0, %s7, %s5
  // Predicated region
  $region2: #{tranad_forward.1} parent=0 // pred_check
    _
  $region3: #{tranad_forward.1} parent=0 // pred_check_branch
    %10 = sbr.rel (0) target = $region5
  $region4: #{tranad_forward.1} parent=0 // pred_region
    _
  $region5: #{tranad_forward.1} parent=0 // pred_fallthru
    _
  // Predicated region
  $region6: #{tranad_forward.1} parent=0 // pred_check
    _
  $region7: #{tranad_forward.1} parent=0 // pred_check_branch
    %12 = sbr.rel (0) target = $region9
  $region8: #{tranad_forward.1} parent=0 // pred_region
    _
  $region9: #{tranad_forward.1} parent=0 // pred_fallthru
    _
  // Predicated region
  $region10: #{tranad_forward.1} parent=0 // pred_check
    _
  $region11: #{tranad_forward.1} parent=0 // pred_check_branch
    %14 = sbr.rel (0) target = $region13
  $region12: #{tranad_forward.1} parent=0 // pred_region
    _
  $region13: #{tranad_forward.1} parent=0 // pred_fallthru
    _
  // Predicated region
  $region14: #{tranad_forward.1} parent=0 // pred_check
    _
  $region15: #{tranad_forward.1} parent=0 // pred_check_branch
    %16 = sbr.rel (0) target = $region17
  $region16: #{tranad_forward.1} parent=0 // pred_region
    _
  $region17: #{tranad_forward.1} parent=0 // pred_fallthru
    _
  %v18 = vld [vmem:[%s0] sm:$0xff]
  %v19 = vld [vmem:[%s0 + $0x8] sm:$0xff]
  %v20 = vld [vmem:[%s0 + $0x10] sm:$0xf]
  %v21 = vmul.f32 %v18, 2.0
  %v22 = vmul.f32 %v19, 2.0
  %v23 = vmul.f32 %v20, 2.0
  %vm24 = vcmask 31744
  %v25 = vsel %vm24, %v21, 0.0
  %v26 = vsel %vm24, %v22, 0.0
  %v27 = vsel %vm24, %v23, 0.0
  %v28 = vld [vmem:[%s3 + $0x8] sm:$0xff]
  %v29 = vld [vmem:[%s3 + $0x18] sm:$0xff]
  %v30 = vld [vmem:[%s3 + $0x28] sm:$0xf]
  %34 = vrot.lane.b32.xlu0 %v28, 48
  %v35 = vpop.permute.xlu0 %34
  %36 = vrot.lane.b32.xlu0 %v29, 48
  %v37 = vpop.permute.xlu0 %36
  %38 = vrot.lane.b32.xlu0 %v30, 48
  %v39 = vpop.permute.xlu0 %38
  %v43 = vadd.f32 %v25, %v35
  %v44 = vadd.f32 %v26, %v37
  %v45 = vadd.f32 %v27, %v39
  %v46 = vld [vmem:[%s2] sm:$0xf]
  %v47 = vpack.c.bf16 %v44, %v43
  %v48 = vpack.c.bf16 %v45, %v45
  %v49 = vld [vmem:[%s3] ss:$0 sm:$0xff]
  %vm50 = vcmask 64512
  %v52 = vsel %vm50, %v47, 0
  %v55 = vsel %vm50, %v48, 0
  %vm57 = vcmask 1043456
  %v59 = vsel %vm57, %v46, 0
  %61 = vmatprep.subr.bf16.mxu0 0
  %62 = vmatpush1.bf16.msra.mxu0 %v59
  %63 = vmatprep.subr.bf16.mxu0 0
  %64 = vmatpush1.bf16.msra.mxu0 0
  %65 = vmatprep.subr.bf16.mxu0 0
  %66 = vmatpush1.bf16.msra.mxu0 0
  %67 = vmatprep.subr.bf16.mxu0 0
  %68 = vmatpush1.bf16.msra.mxu0 0
  %69 = vmatprep.subr.bf16.mxu0 0
  %70 = vmatpush1.bf16.msra.mxu0 0
  %71 = vmatprep.subr.bf16.mxu0 0
  %72 = vmatpush1.bf16.msra.mxu0 0
  %73 = vmatprep.subr.bf16.mxu0 0
  %74 = vmatpush1.bf16.msra.mxu0 0
  %75 = vmatprep.subr.bf16.mxu0 0
  %76 = vmatpush1.bf16.msra.mxu0 0
  %77 = vmatprep.subr.bf16.mxu0 0
  %78 = vmatpush1.bf16.msra.mxu0 0
  %79 = vmatprep.subr.bf16.mxu0 0
  %80 = vmatpush1.bf16.msra.mxu0 0
  %81 = vmatprep.subr.bf16.mxu0 0
  %82 = vmatpush1.bf16.msra.mxu0 0
  %83 = vmatprep.subr.bf16.mxu0 0
  %84 = vmatpush1.bf16.msra.mxu0 0
  %85 = vmatprep.subr.bf16.mxu0 0
  %86 = vmatpush1.bf16.msra.mxu0 0
  %87 = vmatprep.subr.bf16.mxu0 0
  %88 = vmatpush1.bf16.msra.mxu0 0
  %89 = vmatprep.subr.bf16.mxu0 0
  %90 = vmatpush1.bf16.msra.mxu0 0
  %91 = vmatprep.subr.bf16.mxu0 0
  %92 = vmatpush1.bf16.msra.mxu0 0
  %93 = vmatprep.mubr.bf16.mxu0 0
  %94 = vmatmul.mubr.bf16.gmra.mrb[0].mxu0 %v52
  %v95 = vpop.f32.mrb[0].mxu0
  %v96 = vadd.f32 %v49, %v95
  %v97 = vpop.f32.mrb[0].mxu0
  %v98 = vpop.f32.mrb[0].mxu0
  %v99 = vadd.f32 %v49, %v98
  %v100 = vpop.f32.mrb[0].mxu0
  %101 = vmatprep.mubr.bf16.mxu0 0
  %102 = vmatmul.mubr.bf16.gmra.mrb[0].mxu0 %v55
  %v103 = vpop.f32.mrb[0].mxu0
  %v104 = vadd.f32 %v49, %v103
  %v105 = vpop.f32.mrb[0].mxu0
  %v106 = vpop.f32.mrb[0].mxu0
  %v107 = vpop.f32.mrb[0].mxu0
  %108 = vdwg.mxu0
  %v109 = vpack.c.bf16 %v99, %v96
  %v110 = vpack.c.bf16 %v104, %v104
  %113 = vrot.lane.b32.xlu0 %v109, 120
  %v114 = vpop.permute.xlu0 %113
  %115 = vrot.lane.b32.xlu0 %v110, 120
  %v116 = vpop.permute.xlu0 %115
  %vm117 = vcmask 15360
  %v119 = vsel %vm117, %v109, 0
  %v122 = vsel %vm117, %v110, 0
  %v125 = vsel %vm117, %v114, 0
  %v128 = vsel %vm117, %v116, 0
  %130 = vmatprep.subr.bf16.mxu0 0
  %131 = vmatpush1.bf16.xpose.msra.mxu0 %v125
  %132 = vmatprep.subr.bf16.mxu0 0
  %133 = vmatpush1.bf16.xpose.msra.mxu0 %v128
  %134 = vmatprep.subr.bf16.mxu0 0
  %135 = vmatpush1.bf16.xpose.msra.mxu0 0
  %136 = vmatprep.subr.bf16.mxu0 0
  %137 = vmatpush1.bf16.xpose.msra.mxu0 0
  %138 = vmatprep.subr.bf16.mxu0 0
  %139 = vmatpush1.bf16.xpose.msra.mxu0 0
  %140 = vmatprep.subr.bf16.mxu0 0
  %141 = vmatpush1.bf16.xpose.msra.mxu0 0
  %142 = vmatprep.subr.bf16.mxu0 0
  %143 = vmatpush1.bf16.xpose.msra.mxu0 0
  %144 = vmatprep.subr.bf16.mxu0 0
  %145 = vmatpush1.bf16.xpose.msra.mxu0 0
  %146 = vmatprep.subr.bf16.mxu0 0
  %147 = vmatpush1.bf16.xpose.msra.mxu0 0
  %148 = vmatprep.subr.bf16.mxu0 0
  %149 = vmatpush1.bf16.xpose.msra.mxu0 0
  %150 = vmatprep.subr.bf16.mxu0 0
  %151 = vmatpush1.bf16.xpose.msra.mxu0 0
  %152 = vmatprep.subr.bf16.mxu0 0
  %153 = vmatpush1.bf16.xpose.msra.mxu0 0
  %154 = vmatprep.subr.bf16.mxu0 0
  %155 = vmatpush1.bf16.xpose.msra.mxu0 0
  %156 = vmatprep.subr.bf16.mxu0 0
  %157 = vmatpush1.bf16.xpose.msra.mxu0 0
  %158 = vmatprep.subr.bf16.mxu0 0
  %159 = vmatpush1.bf16.xpose.msra.mxu0 0
  %160 = vmatprep.subr.bf16.mxu0 0
  %161 = vmatpush1.bf16.xpose.msra.mxu0 0
  %162 = vmatprep.mubr.bf16.mxu0 0
  %163 = vmatmul.mubr.bf16.gmra.mrb[0].mxu0 %v119
  %v164 = vpop.f32.mrb[0].mxu0
  %v165 = vadd.f32 0.0, %v164
  %v166 = vpop.f32.mrb[0].mxu0
  %v167 = vpop.f32.mrb[0].mxu0
  %v168 = vadd.f32 0.0, %v167
  %v169 = vpop.f32.mrb[0].mxu0
  %170 = vmatprep.mubr.bf16.mxu0 0
  %171 = vmatmul.mubr.bf16.gmra.mrb[0].mxu0 %v122
  %v172 = vpop.f32.mrb[0].mxu0
  %v173 = vadd.f32 0.0, %v172
  %v174 = vpop.f32.mrb[0].mxu0
  %v175 = vpop.f32.mrb[0].mxu0
  %v176 = vpop.f32.mrb[0].mxu0
  %177 = vdwg.mxu0
  %v178 = vmul.f32 %v165, 0.70710677
  %v179 = vmul.f32 %v168, 0.70710677
  %v180 = vmul.f32 %v173, 0.70710677
  %181 = vrot.lane.b32.xlu0 %v28, 40
  %v182 = vpop.permute.xlu0 %181
  %183 = vrot.lane.b32.xlu0 %v29, 40
  %v184 = vpop.permute.xlu0 %183
  %185 = vrot.lane.b32.xlu0 %v30, 40
  %v186 = vpop.permute.xlu0 %185
  %v190 = vadd.f32 %v178, %v182
  %v191 = vadd.f32 %v179, %v184
  %v192 = vadd.f32 %v180, %v186
  %vm193 = vcmask 162816
  %v194 = vsel %vm193, %v190, -inf
  %195 = vmax.xlane.f32.xlu0 %v194
  %v196 = vpop.xlane.xlu0 %195
  %v197 = vsel %vm193, %v191, -inf
  %198 = vmax.xlane.f32.xlu0 %v197
  %v199 = vpop.xlane.xlu0 %198
  %vm200 = vcmask 158720
  %v201 = vsel %vm200, %v192, -inf
  %202 = vmax.xlane.f32.xlu0 %v201
  %v203 = vpop.xlane.xlu0 %202
  %v204 = vsub.f32 %v190, %v196
  %v205 = vsub.f32 %v191, %v199
  %v206 = vsub.f32 %v192, %v203
  %v207 = vmul.f32 %v204, 1.442695
  %v208 = vpow.pop %v207
  %v209 = vmul.f32 %v205, 1.442695
  %v210 = vpow.pop %v209
  %v211 = vmul.f32 %v206, 1.442695
  %v212 = vpow.pop %v211
  %v213 = vsel %vm193, %v208, 0.0
  %214 = vadd.xlane.f32.xlu0 %v213
  %v215 = vpop.xlane.xlu0 %214
  %v216 = vsel %vm193, %v210, 0.0
  %217 = vadd.xlane.f32.xlu0 %v216
  %v218 = vpop.xlane.xlu0 %217
  %v219 = vsel %vm200, %v212, 0.0
  %220 = vadd.xlane.f32.xlu0 %v219
  %v221 = vpop.xlane.xlu0 %220
  %v222 = vrcp.pop %v215
  %v223 = vrcp.pop %v218
  %v224 = vrcp.pop %v221
  %v225 = vmul.f32 %v208, %v222
  %v226 = vmul.f32 %v210, %v223
  %v227 = vmul.f32 %v212, %v224
  %v228 = vpack.c.bf16 %v226, %v225
  %v229 = vpack.c.bf16 %v227, %v227
  %230 = vrot.lane.b32.xlu0 %v109, 112
  %v231 = vpop.permute.xlu0 %230
  %232 = vrot.lane.b32.xlu0 %v110, 112
  %v233 = vpop.permute.xlu0 %232
  %v236 = vsel %vm193, %v228, 0
  %v239 = vsel %vm193, %v229, 0
  %vm241 = vcmask 1041408
  %v243 = vsel %vm241, %v233, 0
  %245 = vmatprep.subr.bf16.mxu0 0
  %246 = vmatpush1.bf16.msra.mxu0 %v231
  %247 = vmatprep.subr.bf16.mxu0 0
  %248 = vmatpush1.bf16.msra.mxu0 %v243
  %249 = vmatprep.subr.bf16.mxu0 0
  %250 = vmatpush1.bf16.msra.mxu0 0
  %251 = vmatprep.subr.bf16.mxu0 0
  %252 = vmatpush1.bf16.msra.mxu0 0
  %253 = vmatprep.subr.bf16.mxu0 0
  %254 = vmatpush1.bf16.msra.mxu0 0
  %255 = vmatprep.subr.bf16.mxu0 0
  %256 = vmatpush1.bf16.msra.mxu0 0
  %257 = vmatprep.subr.bf16.mxu0 0
  %258 = vmatpush1.bf16.msra.mxu0 0
  %259 = vmatprep.subr.bf16.mxu0 0
  %260 = vmatpush1.bf16.msra.mxu0 0
  %261 = vmatprep.subr.bf16.mxu0 0
  %262 = vmatpush1.bf16.msra.mxu0 0
  %263 = vmatprep.subr.bf16.mxu0 0
  %264 = vmatpush1.bf16.msra.mxu0 0
  %265 = vmatprep.subr.bf16.mxu0 0
  %266 = vmatpush1.bf16.msra.mxu0 0
  %267 = vmatprep.subr.bf16.mxu0 0
  %268 = vmatpush1.bf16.msra.mxu0 0
  %269 = vmatprep.subr.bf16.mxu0 0
  %270 = vmatpush1.bf16.msra.mxu0 0
  %271 = vmatprep.subr.bf16.mxu0 0
  %272 = vmatpush1.bf16.msra.mxu0 0
  %273 = vmatprep.subr.bf16.mxu0 0
  %274 = vmatpush1.bf16.msra.mxu0 0
  %275 = vmatprep.subr.bf16.mxu0 0
  %276 = vmatpush1.bf16.msra.mxu0 0
  %277 = vmatprep.mubr.bf16.mxu0 0
  %278 = vmatmul.mubr.bf16.gmra.mrb[0].mxu0 %v236
  %v279 = vpop.f32.mrb[0].mxu0
  %v280 = vadd.f32 0.0, %v279
  %v281 = vpop.f32.mrb[0].mxu0
  %v282 = vpop.f32.mrb[0].mxu0
  %v283 = vadd.f32 0.0, %v282
  %v284 = vpop.f32.mrb[0].mxu0
  %285 = vmatprep.mubr.bf16.mxu0 0
  %286 = vmatmul.mubr.bf16.gmra.mrb[0].mxu0 %v239
  %v287 = vpop.f32.mrb[0].mxu0
  %v288 = vadd.f32 0.0, %v287
  %v289 = vpop.f32.mrb[0].mxu0
  %v290 = vpop.f32.mrb[0].mxu0
  %v291 = vpop.f32.mrb[0].mxu0
  %292 = vdwg.mxu0
  %293 = vrot.lane.b32.xlu0 %v109, 126
  %v294 = vpop.permute.xlu0 %293
  %295 = vrot.lane.b32.xlu0 %v110, 126
  %v296 = vpop.permute.xlu0 %295
  %297 = vrot.lane.b32.xlu0 %v109, 118
  %v298 = vpop.permute.xlu0 %297
  %299 = vrot.lane.b32.xlu0 %v110, 118
  %v300 = vpop.permute.xlu0 %299
  %v302 = vsel %vm117, %v294, 0
  %v305 = vsel %vm117, %v296, 0
  %v308 = vsel %vm117, %v298, 0
  %v311 = vsel %vm117, %v300, 0
  %313 = vmatprep.subr.bf16.mxu0 0
  %314 = vmatpush1.bf16.xpose.msra.mxu0 %v308
  %315 = vmatprep.subr.bf16.mxu0 0
  %316 = vmatpush1.bf16.xpose.msra.mxu0 %v311
  %317 = vmatprep.subr.bf16.mxu0 0
  %318 = vmatpush1.bf16.xpose.msra.mxu0 0
  %319 = vmatprep.subr.bf16.mxu0 0
  %320 = vmatpush1.bf16.xpose.msra.mxu0 0
  %321 = vmatprep.subr.bf16.mxu0 0
  %322 = vmatpush1.bf16.xpose.msra.mxu0 0
  %323 = vmatprep.subr.bf16.mxu0 0
  %324 = vmatpush1.bf16.xpose.msra.mxu0 0
  %325 = vmatprep.subr.bf16.mxu0 0
  %326 = vmatpush1.bf16.xpose.msra.mxu0 0
  %327 = vmatprep.subr.bf16.mxu0 0
  %328 = vmatpush1.bf16.xpose.msra.mxu0 0
  %329 = vmatprep.subr.bf16.mxu0 0
  %330 = vmatpush1.bf16.xpose.msra.mxu0 0
  %331 = vmatprep.subr.bf16.mxu0 0
  %332 = vmatpush1.bf16.xpose.msra.mxu0 0
  %333 = vmatprep.subr.bf16.mxu0 0
  %334 = vmatpush1.bf16.xpose.msra.mxu0 0
  %335 = vmatprep.subr.bf16.mxu0 0
  %336 = vmatpush1.bf16.xpose.msra.mxu0 0
  %337 = vmatprep.subr.bf16.mxu0 0
  %338 = vmatpush1.bf16.xpose.msra.mxu0 0
  %339 = vmatprep.subr.bf16.mxu0 0
  %340 = vmatpush1.bf16.xpose.msra.mxu0 0
  %341 = vmatprep.subr.bf16.mxu0 0
  %342 = vmatpush1.bf16.xpose.msra.mxu0 0
  %343 = vmatprep.subr.bf16.mxu0 0
  %344 = vmatpush1.bf16.xpose.msra.mxu0 0
  %345 = vmatprep.mubr.bf16.mxu0 0
  %346 = vmatmul.mubr.bf16.gmra.mrb[0].mxu0 %v302
  %v347 = vpop.f32.mrb[0].mxu0
  %v348 = vadd.f32 0.0, %v347
  %v349 = vpop.f32.mrb[0].mxu0
  %v350 = vpop.f32.mrb[0].mxu0
  %v351 = vadd.f32 0.0, %v350
  %v352 = vpop.f32.mrb[0].mxu0
  %353 = vmatprep.mubr.bf16.mxu0 0
  %354 = vmatmul.mubr.bf16.gmra.mrb[0].mxu0 %v305
  %v355 = vpop.f32.mrb[0].mxu0
  %v356 = vadd.f32 0.0, %v355
  %v357 = vpop.f32.mrb[0].mxu0
  %v358 = vpop.f32.mrb[0].mxu0
  %v359 = vpop.f32.mrb[0].mxu0
  %360 = vdwg.mxu0
  %v361 = vmul.f32 %v348, 0.70710677
  %v362 = vmul.f32 %v351, 0.70710677
  %v363 = vmul.f32 %v356, 0.70710677
  %v364 = vadd.f32 %v361, %v182
  %v365 = vadd.f32 %v362, %v184
  %v366 = vadd.f32 %v363, %v186
  %v367 = vsel %vm193, %v364, -inf
  %368 = vmax.xlane.f32.xlu0 %v367
  %v369 = vpop.xlane.xlu0 %368
  %v370 = vsel %vm193, %v365, -inf
  %371 = vmax.xlane.f32.xlu0 %v370
  %v372 = vpop.xlane.xlu0 %371
  %v373 = vsel %vm200, %v366, -inf
  %374 = vmax.xlane.f32.xlu0 %v373
  %v375 = vpop.xlane.xlu0 %374
  %v376 = vsub.f32 %v364, %v369
  %v377 = vsub.f32 %v365, %v372
  %v378 = vsub.f32 %v366, %v375
  %v379 = vmul.f32 %v376, 1.442695
  %v380 = vpow.pop %v379
  %v381 = vmul.f32 %v377, 1.442695
  %v382 = vpow.pop %v381
  %v383 = vmul.f32 %v378, 1.442695
  %v384 = vpow.pop %v383
  %v385 = vsel %vm193, %v380, 0.0
  %386 = vadd.xlane.f32.xlu0 %v385
  %v387 = vpop.xlane.xlu0 %386
  %v388 = vsel %vm193, %v382, 0.0
  %389 = vadd.xlane.f32.xlu0 %v388
  %v390 = vpop.xlane.xlu0 %389
  %v391 = vsel %vm200, %v384, 0.0
  %392 = vadd.xlane.f32.xlu0 %v391
  %v393 = vpop.xlane.xlu0 %392
  %v394 = vrcp.pop %v387
  %v395 = vrcp.pop %v390
  %v396 = vrcp.pop %v393
  %v397 = vmul.f32 %v380, %v394
  %v398 = vmul.f32 %v382, %v395
  %v399 = vmul.f32 %v384, %v396
  %v400 = vpack.c.bf16 %v398, %v397
  %v401 = vpack.c.bf16 %v399, %v399
  %402 = vrot.lane.b32.xlu0 %v109, 110
  %v403 = vpop.permute.xlu0 %402
  %404 = vrot.lane.b32.xlu0 %v110, 110
  %v405 = vpop.permute.xlu0 %404
  %v408 = vsel %vm193, %v400, 0
  %v411 = vsel %vm193, %v401, 0
  %v414 = vsel %vm241, %v405, 0
  %416 = vmatprep.subr.bf16.mxu0 0
  %417 = vmatpush1.bf16.msra.mxu0 %v403
  %418 = vmatprep.subr.bf16.mxu0 0
  %419 = vmatpush1.bf16.msra.mxu0 %v414
  %420 = vmatprep.subr.bf16.mxu0 0
  %421 = vmatpush1.bf16.msra.mxu0 0
  %422 = vmatprep.subr.bf16.mxu0 0
  %423 = vmatpush1.bf16.msra.mxu0 0
  %424 = vmatprep.subr.bf16.mxu0 0
  %425 = vmatpush1.bf16.msra.mxu0 0
  %426 = vmatprep.subr.bf16.mxu0 0
  %427 = vmatpush1.bf16.msra.mxu0 0
  %428 = vmatprep.subr.bf16.mxu0 0
  %429 = vmatpush1.bf16.msra.mxu0 0
  %430 = vmatprep.subr.bf16.mxu0 0
  %431 = vmatpush1.bf16.msra.mxu0 0
  %432 = vmatprep.subr.bf16.mxu0 0
  %433 = vmatpush1.bf16.msra.mxu0 0
  %434 = vmatprep.subr.bf16.mxu0 0
  %435 = vmatpush1.bf16.msra.mxu0 0
  %436 = vmatprep.subr.bf16.mxu0 0
  %437 = vmatpush1.bf16.msra.mxu0 0
  %438 = vmatprep.subr.bf16.mxu0 0
  %439 = vmatpush1.bf16.msra.mxu0 0
  %440 = vmatprep.subr.bf16.mxu0 0
  %441 = vmatpush1.bf16.msra.mxu0 0
  %442 = vmatprep.subr.bf16.mxu0 0
  %443 = vmatpush1.bf16.msra.mxu0 0
  %444 = vmatprep.subr.bf16.mxu0 0
  %445 = vmatpush1.bf16.msra.mxu0 0
  %446 = vmatprep.subr.bf16.mxu0 0
  %447 = vmatpush1.bf16.msra.mxu0 0
  %448 = vmatprep.mubr.bf16.mxu0 0
  %449 = vmatmul.mubr.bf16.gmra.mrb[0].mxu0 %v408
  %v450 = vpop.f32.mrb[0].mxu0
  %v451 = vadd.f32 0.0, %v450
  %v452 = vpop.f32.mrb[0].mxu0
  %v453 = vpop.f32.mrb[0].mxu0
  %v454 = vadd.f32 0.0, %v453
  %v455 = vpop.f32.mrb[0].mxu0
  %456 = vmatprep.mubr.bf16.mxu0 0
  %457 = vmatmul.mubr.bf16.gmra.mrb[0].mxu0 %v411
  %v458 = vpop.f32.mrb[0].mxu0
  %v459 = vadd.f32 0.0, %v458
  %v460 = vpop.f32.mrb[0].mxu0
  %v461 = vpop.f32.mrb[0].mxu0
  %v462 = vpop.f32.mrb[0].mxu0
  %463 = vdwg.mxu0
  %464 = vrot.lane.b32.xlu0 %v109, 124
  %v465 = vpop.permute.xlu0 %464
  %466 = vrot.lane.b32.xlu0 %v110, 124
  %v467 = vpop.permute.xlu0 %466
  %468 = vrot.lane.b32.xlu0 %v109, 116
  %v469 = vpop.permute.xlu0 %468
  %470 = vrot.lane.b32.xlu0 %v110, 116
  %v471 = vpop.permute.xlu0 %470
  %v473 = vsel %vm117, %v465, 0
  %v476 = vsel %vm117, %v467, 0
  %v479 = vsel %vm117, %v469, 0
  %v482 = vsel %vm117, %v471, 0
  %484 = vmatprep.subr.bf16.mxu0 0
  %485 = vmatpush1.bf16.xpose.msra.mxu0 %v479
  %486 = vmatprep.subr.bf16.mxu0 0
  %487 = vmatpush1.bf16.xpose.msra.mxu0 %v482
  %488 = vmatprep.subr.bf16.mxu0 0
  %489 = vmatpush1.bf16.xpose.msra.mxu0 0
  %490 = vmatprep.subr.bf16.mxu0 0
  %491 = vmatpush1.bf16.xpose.msra.mxu0 0
  %492 = vmatprep.subr.bf16.mxu0 0
  %493 = vmatpush1.bf16.xpose.msra.mxu0 0
  %494 = vmatprep.subr.bf16.mxu0 0
  %495 = vmatpush1.bf16.xpose.msra.mxu0 0
  %496 = vmatprep.subr.bf16.mxu0 0
  %497 = vmatpush1.bf16.xpose.msra.mxu0 0
  %498 = vmatprep.subr.bf16.mxu0 0
  %499 = vmatpush1.bf16.xpose.msra.mxu0 0
  %500 = vmatprep.subr.bf16.mxu0 0
  %501 = vmatpush1.bf16.xpose.msra.mxu0 0
  %502 = vmatprep.subr.bf16.mxu0 0
  %503 = vmatpush1.bf16.xpose.msra.mxu0 0
  %504 = vmatprep.subr.bf16.mxu0 0
  %505 = vmatpush1.bf16.xpose.msra.mxu0 0
  %506 = vmatprep.subr.bf16.mxu0 0
  %507 = vmatpush1.bf16.xpose.msra.mxu0 0
  %508 = vmatprep.subr.bf16.mxu0 0
  %509 = vmatpush1.bf16.xpose.msra.mxu0 0
  %510 = vmatprep.subr.bf16.mxu0 0
  %511 = vmatpush1.bf16.xpose.msra.mxu0 0
  %512 = vmatprep.subr.bf16.mxu0 0
  %513 = vmatpush1.bf16.xpose.msra.mxu0 0
  %514 = vmatprep.subr.bf16.mxu0 0
  %515 = vmatpush1.bf16.xpose.msra.mxu0 0
  %516 = vmatprep.mubr.bf16.mxu0 0
  %517 = vmatmul.mubr.bf16.gmra.mrb[0].mxu0 %v473
  %v518 = vpop.f32.mrb[0].mxu0
  %v519 = vadd.f32 0.0, %v518
  %v520 = vpop.f32.mrb[0].mxu0
  %v521 = vpop.f32.mrb[0].mxu0
  %v522 = vadd.f32 0.0, %v521
  %v523 = vpop.f32.mrb[0].mxu0
  %524 = vmatprep.mubr.bf16.mxu0 0
  %525 = vmatmul.mubr.bf16.gmra.mrb[0].mxu0 %v476
  %v526 = vpop.f32.mrb[0].mxu0
  %v527 = vadd.f32 0.0, %v526
  %v528 = vpop.f32.mrb[0].mxu0
  %v529 = vpop.f32.mrb[0].mxu0
  %v530 = vpop.f32.mrb[0].mxu0
  %531 = vdwg.mxu0
  %v532 = vmul.f32 %v519, 0.70710677
  %v533 = vmul.f32 %v522, 0.70710677
  %v534 = vmul.f32 %v527, 0.70710677
  %v535 = vadd.f32 %v532, %v182
  %v536 = vadd.f32 %v533, %v184
  %v537 = vadd.f32 %v534, %v186
  %v538 = vsel %vm193, %v535, -inf
  %539 = vmax.xlane.f32.xlu0 %v538
  %v540 = vpop.xlane.xlu0 %539
  %v541 = vsel %vm193, %v536, -inf
  %542 = vmax.xlane.f32.xlu0 %v541
  %v543 = vpop.xlane.xlu0 %542
  %v544 = vsel %vm200, %v537, -inf
  %545 = vmax.xlane.f32.xlu0 %v544
  %v546 = vpop.xlane.xlu0 %545
  %v547 = vsub.f32 %v535, %v540
  %v548 = vsub.f32 %v536, %v543
  %v549 = vsub.f32 %v537, %v546
  %v550 = vmul.f32 %v547, 1.442695
  %v551 = vpow.pop %v550
  %v552 = vmul.f32 %v548, 1.442695
  %v553 = vpow.pop %v552
  %v554 = vmul.f32 %v549, 1.442695
  %v555 = vpow.pop %v554
  %v556 = vsel %vm193, %v551, 0.0
  %557 = vadd.xlane.f32.xlu0 %v556
  %v558 = vpop.xlane.xlu0 %557
  %v559 = vsel %vm193, %v553, 0.0
  %560 = vadd.xlane.f32.xlu0 %v559
  %v561 = vpop.xlane.xlu0 %560
  %v562 = vsel %vm200, %v555, 0.0
  %563 = vadd.xlane.f32.xlu0 %v562
  %v564 = vpop.xlane.xlu0 %563
  %v565 = vrcp.pop %v558
  %v566 = vrcp.pop %v561
  %v567 = vrcp.pop %v564
  %v568 = vmul.f32 %v551, %v565
  %v569 = vmul.f32 %v553, %v566
  %v570 = vmul.f32 %v555, %v567
  %v571 = vpack.c.bf16 %v569, %v568
  %v572 = vpack.c.bf16 %v570, %v570
  %573 = vrot.lane.b32.xlu0 %v109, 108
  %v574 = vpop.permute.xlu0 %573
  %575 = vrot.lane.b32.xlu0 %v110, 108
  %v576 = vpop.permute.xlu0 %575
  %v579 = vsel %vm193, %v571, 0
  %v582 = vsel %vm193, %v572, 0
  %v585 = vsel %vm241, %v576, 0
  %587 = vmatprep.subr.bf16.mxu0 0
  %588 = vmatpush1.bf16.msra.mxu0 %v574
  %589 = vmatprep.subr.bf16.mxu0 0
  %590 = vmatpush1.bf16.msra.mxu0 %v585
  %591 = vmatprep.subr.bf16.mxu0 0
  %592 = vmatpush1.bf16.msra.mxu0 0
  %593 = vmatprep.subr.bf16.mxu0 0
  %594 = vmatpush1.bf16.msra.mxu0 0
  %595 = vmatprep.subr.bf16.mxu0 0
  %596 = vmatpush1.bf16.msra.mxu0 0
  %597 = vmatprep.subr.bf16.mxu0 0
  %598 = vmatpush1.bf16.msra.mxu0 0
  %599 = vmatprep.subr.bf16.mxu0 0
  %600 = vmatpush1.bf16.msra.mxu0 0
  %601 = vmatprep.subr.bf16.mxu0 0
  %602 = vmatpush1.bf16.msra.mxu0 0
  %603 = vmatprep.subr.bf16.mxu0 0
  %604 = vmatpush1.bf16.msra.mxu0 0
  %605 = vmatprep.subr.bf16.mxu0 0
  %606 = vmatpush1.bf16.msra.mxu0 0
  %607 = vmatprep.subr.bf16.mxu0 0
  %608 = vmatpush1.bf16.msra.mxu0 0
  %609 = vmatprep.subr.bf16.mxu0 0
  %610 = vmatpush1.bf16.msra.mxu0 0
  %611 = vmatprep.subr.bf16.mxu0 0
  %612 = vmatpush1.bf16.msra.mxu0 0
  %613 = vmatprep.subr.bf16.mxu0 0
  %614 = vmatpush1.bf16.msra.mxu0 0
  %615 = vmatprep.subr.bf16.mxu0 0
  %616 = vmatpush1.bf16.msra.mxu0 0
  %617 = vmatprep.subr.bf16.mxu0 0
  %618 = vmatpush1.bf16.msra.mxu0 0
  %619 = vmatprep.mubr.bf16.mxu0 0
  %620 = vmatmul.mubr.bf16.gmra.mrb[0].mxu0 %v579
  %v621 = vpop.f32.mrb[0].mxu0
  %v622 = vadd.f32 0.0, %v621
  %v623 = vpop.f32.mrb[0].mxu0
  %v624 = vpop.f32.mrb[0].mxu0
  %v625 = vadd.f32 0.0, %v624
  %v626 = vpop.f32.mrb[0].mxu0
  %627 = vmatprep.mubr.bf16.mxu0 0
  %628 = vmatmul.mubr.bf16.gmra.mrb[0].mxu0 %v582
  %v629 = vpop.f32.mrb[0].mxu0
  %v630 = vadd.f32 0.0, %v629
  %v631 = vpop.f32.mrb[0].mxu0
  %v632 = vpop.f32.mrb[0].mxu0
  %v633 = vpop.f32.mrb[0].mxu0
  %634 = vdwg.mxu0
  %635 = vrot.lane.b32.xlu0 %v109, 122
  %v636 = vpop.permute.xlu0 %635
  %637 = vrot.lane.b32.xlu0 %v110, 122
  %v638 = vpop.permute.xlu0 %637
  %639 = vrot.lane.b32.xlu0 %v109, 114
  %v640 = vpop.permute.xlu0 %639
  %641 = vrot.lane.b32.xlu0 %v110, 114
  %v642 = vpop.permute.xlu0 %641
  %v644 = vsel %vm117, %v636, 0
  %v647 = vsel %vm117, %v638, 0
  %v650 = vsel %vm117, %v640, 0
  %v653 = vsel %vm117, %v642, 0
  %655 = vmatprep.subr.bf16.mxu0 0
  %656 = vmatpush1.bf16.xpose.msra.mxu0 %v650
  %657 = vmatprep.subr.bf16.mxu0 0
  %658 = vmatpush1.bf16.xpose.msra.mxu0 %v653
  %659 = vmatprep.subr.bf16.mxu0 0
  %660 = vmatpush1.bf16.xpose.msra.mxu0 0
  %661 = vmatprep.subr.bf16.mxu0 0
  %662 = vmatpush1.bf16.xpose.msra.mxu0 0
  %663 = vmatprep.subr.bf16.mxu0 0
  %664 = vmatpush1.bf16.xpose.msra.mxu0 0
  %665 = vmatprep.subr.bf16.mxu0 0
  %666 = vmatpush1.bf16.xpose.msra.mxu0 0
  %667 = vmatprep.subr.bf16.mxu0 0
  %668 = vmatpush1.bf16.xpose.msra.mxu0 0
  %669 = vmatprep.subr.bf16.mxu0 0
  %670 = vmatpush1.bf16.xpose.msra.mxu0 0
  %671 = vmatprep.subr.bf16.mxu0 0
  %672 = vmatpush1.bf16.xpose.msra.mxu0 0
  %673 = vmatprep.subr.bf16.mxu0 0
  %674 = vmatpush1.bf16.xpose.msra.mxu0 0
  %675 = vmatprep.subr.bf16.mxu0 0
  %676 = vmatpush1.bf16.xpose.msra.mxu0 0
  %677 = vmatprep.subr.bf16.mxu0 0
  %678 = vmatpush1.bf16.xpose.msra.mxu0 0
  %679 = vmatprep.subr.bf16.mxu0 0
  %680 = vmatpush1.bf16.xpose.msra.mxu0 0
  %681 = vmatprep.subr.bf16.mxu0 0
  %682 = vmatpush1.bf16.xpose.msra.mxu0 0
  %683 = vmatprep.subr.bf16.mxu0 0
  %684 = vmatpush1.bf16.xpose.msra.mxu0 0
  %685 = vmatprep.subr.bf16.mxu0 0
  %686 = vmatpush1.bf16.xpose.msra.mxu0 0
  %687 = vmatprep.mubr.bf16.mxu0 0
  %688 = vmatmul.mubr.bf16.gmra.mrb[0].mxu0 %v644
  %v689 = vpop.f32.mrb[0].mxu0
  %v690 = vadd.f32 0.0, %v689
  %v691 = vpop.f32.mrb[0].mxu0
  %v692 = vpop.f32.mrb[0].mxu0
  %v693 = vadd.f32 0.0, %v692
  %v694 = vpop.f32.mrb[0].mxu0
  %695 = vmatprep.mubr.bf16.mxu0 0
  %696 = vmatmul.mubr.bf16.gmra.mrb[0].mxu0 %v647
  %v697 = vpop.f32.mrb[0].mxu0
  %v698 = vadd.f32 0.0, %v697
  %v699 = vpop.f32.mrb[0].mxu0
  %v700 = vpop.f32.mrb[0].mxu0
  %v701 = vpop.f32.mrb[0].mxu0
  %702 = vdwg.mxu0
  %v703 = vmul.f32 %v690, 0.70710677
  %v704 = vmul.f32 %v693, 0.70710677
  %v705 = vmul.f32 %v698, 0.70710677
  %v706 = vadd.f32 %v703, %v182
  %v707 = vadd.f32 %v704, %v184
  %v708 = vadd.f32 %v705, %v186
  %v709 = vsel %vm193, %v706, -inf
  %710 = vmax.xlane.f32.xlu0 %v709
  %v711 = vpop.xlane.xlu0 %710
  %v712 = vsel %vm193, %v707, -inf
  %713 = vmax.xlane.f32.xlu0 %v712
  %v714 = vpop.xlane.xlu0 %713
  %v715 = vsel %vm200, %v708, -inf
  %716 = vmax.xlane.f32.xlu0 %v715
  %v717 = vpop.xlane.xlu0 %716
  %v718 = vsub.f32 %v706, %v711
  %v719 = vsub.f32 %v707, %v714
  %v720 = vsub.f32 %v708, %v717
  %v721 = vmul.f32 %v718, 1.442695
  %v722 = vpow.pop %v721
  %v723 = vmul.f32 %v719, 1.442695
  %v724 = vpow.pop %v723
  %v725 = vmul.f32 %v720, 1.442695
  %v726 = vpow.pop %v725
  %v727 = vsel %vm193, %v722, 0.0
  %728 = vadd.xlane.f32.xlu0 %v727
  %v729 = vpop.xlane.xlu0 %728
  %v730 = vsel %vm193, %v724, 0.0
  %731 = vadd.xlane.f32.xlu0 %v730
  %v732 = vpop.xlane.xlu0 %731
  %v733 = vsel %vm200, %v726, 0.0
  %734 = vadd.xlane.f32.xlu0 %v733
  %v735 = vpop.xlane.xlu0 %734
  %v736 = vrcp.pop %v729
  %v737 = vrcp.pop %v732
  %v738 = vrcp.pop %v735
  %v739 = vmul.f32 %v722, %v736
  %v740 = vmul.f32 %v724, %v737
  %v741 = vmul.f32 %v726, %v738
  %v742 = vpack.c.bf16 %v740, %v739
  %v743 = vpack.c.bf16 %v741, %v741
  %744 = vrot.lane.b32.xlu0 %v109, 106
  %v745 = vpop.permute.xlu0 %744
  %746 = vrot.lane.b32.xlu0 %v110, 106
  %v747 = vpop.permute.xlu0 %746
  %v750 = vsel %vm193, %v742, 0
  %v753 = vsel %vm193, %v743, 0
  %v756 = vsel %vm241, %v747, 0
  %758 = vmatprep.subr.bf16.mxu0 0
  %759 = vmatpush1.bf16.msra.mxu0 %v745
  %760 = vmatprep.subr.bf16.mxu0 0
  %761 = vmatpush1.bf16.msra.mxu0 %v756
  %762 = vmatprep.subr.bf16.mxu0 0
  %763 = vmatpush1.bf16.msra.mxu0 0
  %764 = vmatprep.subr.bf16.mxu0 0
  %765 = vmatpush1.bf16.msra.mxu0 0
  %766 = vmatprep.subr.bf16.mxu0 0
  %767 = vmatpush1.bf16.msra.mxu0 0
  %768 = vmatprep.subr.bf16.mxu0 0
  %769 = vmatpush1.bf16.msra.mxu0 0
  %770 = vmatprep.subr.bf16.mxu0 0
  %771 = vmatpush1.bf16.msra.mxu0 0
  %772 = vmatprep.subr.bf16.mxu0 0
  %773 = vmatpush1.bf16.msra.mxu0 0
  %774 = vmatprep.subr.bf16.mxu0 0
  %775 = vmatpush1.bf16.msra.mxu0 0
  %776 = vmatprep.subr.bf16.mxu0 0
  %777 = vmatpush1.bf16.msra.mxu0 0
  %778 = vmatprep.subr.bf16.mxu0 0
  %779 = vmatpush1.bf16.msra.mxu0 0
  %780 = vmatprep.subr.bf16.mxu0 0
  %781 = vmatpush1.bf16.msra.mxu0 0
  %782 = vmatprep.subr.bf16.mxu0 0
  %783 = vmatpush1.bf16.msra.mxu0 0
  %784 = vmatprep.subr.bf16.mxu0 0
  %785 = vmatpush1.bf16.msra.mxu0 0
  %786 = vmatprep.subr.bf16.mxu0 0
  %787 = vmatpush1.bf16.msra.mxu0 0
  %788 = vmatprep.subr.bf16.mxu0 0
  %789 = vmatpush1.bf16.msra.mxu0 0
  %790 = vmatprep.mubr.bf16.mxu0 0
  %791 = vmatmul.mubr.bf16.gmra.mrb[0].mxu0 %v750
  %v792 = vpop.f32.mrb[0].mxu0
  %v793 = vadd.f32 0.0, %v792
  %v794 = vpop.f32.mrb[0].mxu0
  %v795 = vpop.f32.mrb[0].mxu0
  %v796 = vadd.f32 0.0, %v795
  %v797 = vpop.f32.mrb[0].mxu0
  %798 = vmatprep.mubr.bf16.mxu0 0
  %799 = vmatmul.mubr.bf16.gmra.mrb[0].mxu0 %v753
  %v800 = vpop.f32.mrb[0].mxu0
  %v801 = vadd.f32 0.0, %v800
  %v802 = vpop.f32.mrb[0].mxu0
  %v803 = vpop.f32.mrb[0].mxu0
  %v804 = vpop.f32.mrb[0].mxu0
  %805 = vdwg.mxu0
  %809 = vrot.lane.b32.xlu0 %v451, 2
  %v810 = vpop.permute.xlu0 %809
  %811 = vrot.lane.b32.xlu0 %v454, 2
  %v812 = vpop.permute.xlu0 %811
  %813 = vrot.lane.b32.xlu0 %v459, 2
  %v814 = vpop.permute.xlu0 %813
  %821 = vrot.lane.b32.xlu0 %v622, 4
  %v822 = vpop.permute.xlu0 %821
  %823 = vrot.lane.b32.xlu0 %v625, 4
  %v824 = vpop.permute.xlu0 %823
  %825 = vrot.lane.b32.xlu0 %v630, 4
  %v826 = vpop.permute.xlu0 %825
  %833 = vrot.lane.b32.xlu0 %v793, 6
  %v834 = vpop.permute.xlu0 %833
  %835 = vrot.lane.b32.xlu0 %v796, 6
  %v836 = vpop.permute.xlu0 %835
  %837 = vrot.lane.b32.xlu0 %v801, 6
  %v838 = vpop.permute.xlu0 %837
  %v842 = vsel %vm117, %v280, %v810
  %v843 = vsel %vm117, %v283, %v812
  %v844 = vsel %vm117, %v288, %v814
  %v845 = vsel %vm24, %v842, %v822
  %v846 = vsel %vm24, %v843, %v824
  %v847 = vsel %vm24, %v844, %v826
  %vm848 = vcmask 48128
  %v849 = vsel %vm848, %v845, %v834
  %v850 = vsel %vm848, %v846, %v836
  %v851 = vsel %vm848, %v847, %v838
  %v852 = vpack.c.bf16 %v850, %v849
  %v853 = vpack.c.bf16 %v851, %v851
  %v855 = vunpack.c.l.b16 %v46
  %v856 = vpack.c.b16 %v855, %v855
  %857 = vrot.lane.b32.xlu0 %v856, 104
  %v858 = vpop.permute.xlu0 %857
  %v860 = vsel %vm50, %v852, 0
  %v863 = vsel %vm50, %v853, 0
  %v866 = vsel %vm57, %v858, 0
  %868 = vmatprep.subr.bf16.mxu0 0
  %869 = vmatpush1.bf16.msra.mxu0 %v866
  %870 = vmatprep.subr.bf16.mxu0 0
  %871 = vmatpush1.bf16.msra.mxu0 0
  %872 = vmatprep.subr.bf16.mxu0 0
  %873 = vmatpush1.bf16.msra.mxu0 0
  %874 = vmatprep.subr.bf16.mxu0 0
  %875 = vmatpush1.bf16.msra.mxu0 0
  %876 = vmatprep.subr.bf16.mxu0 0
  %877 = vmatpush1.bf16.msra.mxu0 0
  %878 = vmatprep.subr.bf16.mxu0 0
  %879 = vmatpush1.bf16.msra.mxu0 0
  %880 = vmatprep.subr.bf16.mxu0 0
  %881 = vmatpush1.bf16.msra.mxu0 0
  %882 = vmatprep.subr.bf16.mxu0 0
  %883 = vmatpush1.bf16.msra.mxu0 0
  %884 = vmatprep.subr.bf16.mxu0 0
  %885 = vmatpush1.bf16.msra.mxu0 0
  %886 = vmatprep.subr.bf16.mxu0 0
  %887 = vmatpush1.bf16.msra.mxu0 0
  %888 = vmatprep.subr.bf16.mxu0 0
  %889 = vmatpush1.bf16.msra.mxu0 0
  %890 = vmatprep.subr.bf16.mxu0 0
  %891 = vmatpush1.bf16.msra.mxu0 0
  %892 = vmatprep.subr.bf16.mxu0 0
  %893 = vmatpush1.bf16.msra.mxu0 0
  %894 = vmatprep.subr.bf16.mxu0 0
  %895 = vmatpush1.bf16.msra.mxu0 0
  %896 = vmatprep.subr.bf16.mxu0 0
  %897 = vmatpush1.bf16.msra.mxu0 0
  %898 = vmatprep.subr.bf16.mxu0 0
  %899 = vmatpush1.bf16.msra.mxu0 0
  %900 = vmatprep.mubr.bf16.mxu0 0
  %901 = vmatmul.mubr.bf16.gmra.mrb[0].mxu0 %v860
  %v902 = vpop.f32.mrb[0].mxu0
  %v903 = vadd.f32 0.0, %v902
  %v904 = vpop.f32.mrb[0].mxu0
  %v905 = vpop.f32.mrb[0].mxu0
  %v906 = vadd.f32 0.0, %v905
  %v907 = vpop.f32.mrb[0].mxu0
  %908 = vmatprep.mubr.bf16.mxu0 0
  %909 = vmatmul.mubr.bf16.gmra.mrb[0].mxu0 %v863
  %v910 = vpop.f32.mrb[0].mxu0
  %v911 = vadd.f32 0.0, %v910
  %v912 = vpop.f32.mrb[0].mxu0
  %v913 = vpop.f32.mrb[0].mxu0
  %v914 = vpop.f32.mrb[0].mxu0
  %915 = vdwg.mxu0
  %v916 = vadd.f32 %v43, %v903
  %v917 = vadd.f32 %v44, %v906
  %v918 = vadd.f32 %v45, %v911
  %920 = vrot.lane.b32.xlu0 %v49, 104
  %v921 = vpop.permute.xlu0 %920
  %v923 = vadd.f32 %v916, %v921
  %v924 = vadd.f32 %v917, %v921
  %v925 = vadd.f32 %v918, %v921
  %v926 = vpack.c.bf16 %v924, %v923
  %v927 = vpack.c.bf16 %v925, %v925
  %928 = vrot.lane.b32.xlu0 %v856, 96
  %v929 = vpop.permute.xlu0 %928
  %930 = vrot.lane.b32.xlu0 %v49, 96
  %v931 = vpop.permute.xlu0 %930
  %v934 = vsel %vm50, %v926, 0
  %v937 = vsel %vm50, %v927, 0
  %v940 = vsel %vm57, %v929, 0
  %942 = vmatprep.subr.bf16.mxu0 0
  %943 = vmatpush1.bf16.msra.mxu0 %v940
  %944 = vmatprep.subr.bf16.mxu0 0
  %945 = vmatpush1.bf16.msra.mxu0 0
  %946 = vmatprep.subr.bf16.mxu0 0
  %947 = vmatpush1.bf16.msra.mxu0 0
  %948 = vmatprep.subr.bf16.mxu0 0
  %949 = vmatpush1.bf16.msra.mxu0 0
  %950 = vmatprep.subr.bf16.mxu0 0
  %951 = vmatpush1.bf16.msra.mxu0 0
  %952 = vmatprep.subr.bf16.mxu0 0
  %953 = vmatpush1.bf16.msra.mxu0 0
  %954 = vmatprep.subr.bf16.mxu0 0
  %955 = vmatpush1.bf16.msra.mxu0 0
  %956 = vmatprep.subr.bf16.mxu0 0
  %957 = vmatpush1.bf16.msra.mxu0 0
  %958 = vmatprep.subr.bf16.mxu0 0
  %959 = vmatpush1.bf16.msra.mxu0 0
  %960 = vmatprep.subr.bf16.mxu0 0
  %961 = vmatpush1.bf16.msra.mxu0 0
  %962 = vmatprep.subr.bf16.mxu0 0
  %963 = vmatpush1.bf16.msra.mxu0 0
  %964 = vmatprep.subr.bf16.mxu0 0
  %965 = vmatpush1.bf16.msra.mxu0 0
  %966 = vmatprep.subr.bf16.mxu0 0
  %967 = vmatpush1.bf16.msra.mxu0 0
  %968 = vmatprep.subr.bf16.mxu0 0
  %969 = vmatpush1.bf16.msra.mxu0 0
  %970 = vmatprep.subr.bf16.mxu0 0
  %971 = vmatpush1.bf16.msra.mxu0 0
  %972 = vmatprep.subr.bf16.mxu0 0
  %973 = vmatpush1.bf16.msra.mxu0 0
  %974 = vmatprep.mubr.bf16.mxu0 0
  %975 = vmatmul.mubr.bf16.gmra.mrb[0].mxu0 %v934
  %v976 = vpop.f32.mrb[0].mxu0
  %v977 = vadd.f32 %v931, %v976
  %v978 = vpop.f32.mrb[0].mxu0
  %v979 = vpop.f32.mrb[0].mxu0
  %v980 = vadd.f32 %v931, %v979
  %v981 = vpop.f32.mrb[0].mxu0
  %982 = vmatprep.mubr.bf16.mxu0 0
  %983 = vmatmul.mubr.bf16.gmra.mrb[0].mxu0 %v937
  %v984 = vpop.f32.mrb[0].mxu0
  %v985 = vadd.f32 %v931, %v984
  %v986 = vpop.f32.mrb[0].mxu0
  %v987 = vpop.f32.mrb[0].mxu0
  %v988 = vpop.f32.mrb[0].mxu0
  %989 = vdwg.mxu0
  %v990 = vld [vmem:[%s2] sm:$0xf]
  %v991 = vld [vmem:[%s2 + $0x8] sm:$0xf]
  %v992 = vpack.c.bf16 %v980, %v977
  %v993 = vpack.c.bf16 %v985, %v985
  %v996 = vunpack.c.l.b16 %v990
  %v997 = vunpack.c.l.b16 %v991
  %v998 = vpack.c.b16 %v997, %v996
  %999 = vrot.lane.b32.xlu0 %v998, 80
  %v1000 = vpop.permute.xlu0 %999
  %vm1002 = vcmask 130048
  %v1004 = vsel %vm1002, %v992, 0
  %v1007 = vsel %vm1002, %v993, 0
  %1009 = vmatprep.subr.bf16.mxu0 0
  %1010 = vmatpush1.bf16.msra.mxu0 %v1000
  %1011 = vmatprep.subr.bf16.mxu0 0
  %1012 = vmatpush1.bf16.msra.mxu0 0
  %1013 = vmatprep.subr.bf16.mxu0 0
  %1014 = vmatpush1.bf16.msra.mxu0 0
  %1015 = vmatprep.subr.bf16.mxu0 0
  %1016 = vmatpush1.bf16.msra.mxu0 0
  %1017 = vmatprep.subr.bf16.mxu0 0
  %1018 = vmatpush1.bf16.msra.mxu0 0
  %1019 = vmatprep.subr.bf16.mxu0 0
  %1020 = vmatpush1.bf16.msra.mxu0 0
  %1021 = vmatprep.subr.bf16.mxu0 0
  %1022 = vmatpush1.bf16.msra.mxu0 0
  %1023 = vmatprep.subr.bf16.mxu0 0
  %1024 = vmatpush1.bf16.msra.mxu0 0
  %1025 = vmatprep.subr.bf16.mxu0 0
  %1026 = vmatpush1.bf16.msra.mxu0 0
  %1027 = vmatprep.subr.bf16.mxu0 0
  %1028 = vmatpush1.bf16.msra.mxu0 0
  %1029 = vmatprep.subr.bf16.mxu0 0
  %1030 = vmatpush1.bf16.msra.mxu0 0
  %1031 = vmatprep.subr.bf16.mxu0 0
  %1032 = vmatpush1.bf16.msra.mxu0 0
  %1033 = vmatprep.subr.bf16.mxu0 0
  %1034 = vmatpush1.bf16.msra.mxu0 0
  %1035 = vmatprep.subr.bf16.mxu0 0
  %1036 = vmatpush1.bf16.msra.mxu0 0
  %1037 = vmatprep.subr.bf16.mxu0 0
  %1038 = vmatpush1.bf16.msra.mxu0 0
  %1039 = vmatprep.subr.bf16.mxu0 0
  %1040 = vmatpush1.bf16.msra.mxu0 0
  %1041 = vmatprep.mubr.bf16.mxu0 0
  %1042 = vmatmul.mubr.bf16.gmra.mrb[0].mxu0 %v1004
  %v1043 = vpop.f32.mrb[0].mxu0
  %v1044 = vadd.f32 0.0, %v1043
  %v1045 = vpop.f32.mrb[0].mxu0
  %v1046 = vpop.f32.mrb[0].mxu0
  %v1047 = vadd.f32 0.0, %v1046
  %v1048 = vpop.f32.mrb[0].mxu0
  %1049 = vmatprep.mubr.bf16.mxu0 0
  %1050 = vmatmul.mubr.bf16.gmra.mrb[0].mxu0 %v1007
  %v1051 = vpop.f32.mrb[0].mxu0
  %v1052 = vadd.f32 0.0, %v1051
  %v1053 = vpop.f32.mrb[0].mxu0
  %v1054 = vpop.f32.mrb[0].mxu0
  %v1055 = vpop.f32.mrb[0].mxu0
  %1056 = vdwg.mxu0
  %v1057 = vadd.f32 %v923, %v1044
  %v1058 = vadd.f32 %v924, %v1047
  %v1059 = vadd.f32 %v925, %v1052
  %1060 = vrot.lane.b32.xlu0 %v49, 80
  %v1061 = vpop.permute.xlu0 %1060
  %v1063 = vadd.f32 %v1057, %v1061
  %v1064 = vadd.f32 %v1058, %v1061
  %v1065 = vadd.f32 %v1059, %v1061
  %v1066 = vld [vmem:[%s1] sm:$0x3]
  %1068 = vrot.lane.b32.xlu0 %v1066, 4
  %v1069 = vpop.permute.xlu0 %1068
  %v1071 = vsel %vm24, %v1066, %v1069
  %1073 = vrot.lane.b32.xlu0 %v1071, 8
  %v1074 = vpop.permute.xlu0 %1073
  %v1076 = vsel %vm50, %v1071, %v1074
  %v1077 = vpack.c.bf16 %v1071, %v1071
  %1078 = vrot.lane.b32.xlu0 %v856, 72
  %v1079 = vpop.permute.xlu0 %1078
  %1080 = vrot.lane.b32.xlu0 %v49, 72
  %v1081 = vpop.permute.xlu0 %1080
  %v1084 = vsel %vm50, %v1077, 0
  %v1087 = vsel %vm57, %v1079, 0
  %1089 = vmatprep.subr.bf16.mxu0 0
  %1090 = vmatpush1.bf16.msra.mxu0 %v1087
  %1091 = vmatprep.subr.bf16.mxu0 0
  %1092 = vmatpush1.bf16.msra.mxu0 0
  %1093 = vmatprep.subr.bf16.mxu0 0
  %1094 = vmatpush1.bf16.msra.mxu0 0
  %1095 = vmatprep.subr.bf16.mxu0 0
  %1096 = vmatpush1.bf16.msra.mxu0 0
  %1097 = vmatprep.subr.bf16.mxu0 0
  %1098 = vmatpush1.bf16.msra.mxu0 0
  %1099 = vmatprep.subr.bf16.mxu0 0
  %1100 = vmatpush1.bf16.msra.mxu0 0
  %1101 = vmatprep.subr.bf16.mxu0 0
  %1102 = vmatpush1.bf16.msra.mxu0 0
  %1103 = vmatprep.subr.bf16.mxu0 0
  %1104 = vmatpush1.bf16.msra.mxu0 0
  %1105 = vmatprep.subr.bf16.mxu0 0
  %1106 = vmatpush1.bf16.msra.mxu0 0
  %1107 = vmatprep.subr.bf16.mxu0 0
  %1108 = vmatpush1.bf16.msra.mxu0 0
  %1109 = vmatprep.subr.bf16.mxu0 0
  %1110 = vmatpush1.bf16.msra.mxu0 0
  %1111 = vmatprep.subr.bf16.mxu0 0
  %1112 = vmatpush1.bf16.msra.mxu0 0
  %1113 = vmatprep.subr.bf16.mxu0 0
  %1114 = vmatpush1.bf16.msra.mxu0 0
  %1115 = vmatprep.subr.bf16.mxu0 0
  %1116 = vmatpush1.bf16.msra.mxu0 0
  %1117 = vmatprep.subr.bf16.mxu0 0
  %1118 = vmatpush1.bf16.msra.mxu0 0
  %1119 = vmatprep.subr.bf16.mxu0 0
  %1120 = vmatpush1.bf16.msra.mxu0 0
  %1121 = vmatprep.mubr.bf16.mxu0 0
  %1122 = vmatmul.mubr.bf16.gmra.mrb[0].mxu0 %v1084
  %v1123 = vpop.f32.mrb[0].mxu0
  %v1124 = vadd.f32 %v1081, %v1123
  %v1125 = vpop.f32.mrb[0].mxu0
  %v1126 = vpop.f32.mrb[0].mxu0
  %v1127 = vpop.f32.mrb[0].mxu0
  %1128 = vdwg.mxu0
  %v1129 = vpack.c.bf16 %v1124, %v1124
  %1130 = vrot.lane.b32.xlu0 %v998, 56
  %v1131 = vpop.permute.xlu0 %1130
  %v1134 = vsel %vm1002, %v1129, 0
  %1136 = vmatprep.subr.bf16.mxu0 0
  %1137 = vmatpush1.bf16.msra.mxu0 %v1131
  %1138 = vmatprep.subr.bf16.mxu0 0
  %1139 = vmatpush1.bf16.msra.mxu0 0
  %1140 = vmatprep.subr.bf16.mxu0 0
  %1141 = vmatpush1.bf16.msra.mxu0 0
  %1142 = vmatprep.subr.bf16.mxu0 0
  %1143 = vmatpush1.bf16.msra.mxu0 0
  %1144 = vmatprep.subr.bf16.mxu0 0
  %1145 = vmatpush1.bf16.msra.mxu0 0
  %1146 = vmatprep.subr.bf16.mxu0 0
  %1147 = vmatpush1.bf16.msra.mxu0 0
  %1148 = vmatprep.subr.bf16.mxu0 0
  %1149 = vmatpush1.bf16.msra.mxu0 0
  %1150 = vmatprep.subr.bf16.mxu0 0
  %1151 = vmatpush1.bf16.msra.mxu0 0
  %1152 = vmatprep.subr.bf16.mxu0 0
  %1153 = vmatpush1.bf16.msra.mxu0 0
  %1154 = vmatprep.subr.bf16.mxu0 0
  %1155 = vmatpush1.bf16.msra.mxu0 0
  %1156 = vmatprep.subr.bf16.mxu0 0
  %1157 = vmatpush1.bf16.msra.mxu0 0
  %1158 = vmatprep.subr.bf16.mxu0 0
  %1159 = vmatpush1.bf16.msra.mxu0 0
  %1160 = vmatprep.subr.bf16.mxu0 0
  %1161 = vmatpush1.bf16.msra.mxu0 0
  %1162 = vmatprep.subr.bf16.mxu0 0
  %1163 = vmatpush1.bf16.msra.mxu0 0
  %1164 = vmatprep.subr.bf16.mxu0 0
  %1165 = vmatpush1.bf16.msra.mxu0 0
  %1166 = vmatprep.subr.bf16.mxu0 0
  %1167 = vmatpush1.bf16.msra.mxu0 0
  %1168 = vmatprep.mubr.bf16.mxu0 0
  %1169 = vmatmul.mubr.bf16.gmra.mrb[0].mxu0 %v1134
  %v1170 = vpop.f32.mrb[0].mxu0
  %v1171 = vadd.f32 0.0, %v1170
  %v1172 = vpop.f32.mrb[0].mxu0
  %v1173 = vpop.f32.mrb[0].mxu0
  %v1174 = vpop.f32.mrb[0].mxu0
  %1175 = vdwg.mxu0
  %v1176 = vadd.f32 %v1076, %v1171
  %1177 = vrot.lane.b32.xlu0 %v49, 56
  %v1178 = vpop.permute.xlu0 %1177
  %v1180 = vadd.f32 %v1176, %v1178
  %v1181 = vld [vmem:[%s3 + $0x8] sm:$0x3]
  %v1182 = vpack.c.bf16 %v1180, %v1180
  %1183 = vrot.lane.b32.xlu0 %v998, 40
  %v1184 = vpop.permute.xlu0 %1183
  %1186 = vrot.lane.b32.xlu0 %v49, 40
  %v1187 = vpop.permute.xlu0 %1186
  %v1190 = vsel %vm1002, %v1182, 0
  %1192 = vmatprep.subr.bf16.mxu0 0
  %1193 = vmatpush1.bf16.msra.mxu0 %v1184
  %1194 = vmatprep.subr.bf16.mxu0 0
  %1195 = vmatpush1.bf16.msra.mxu0 0
  %1196 = vmatprep.subr.bf16.mxu0 0
  %1197 = vmatpush1.bf16.msra.mxu0 0
  %1198 = vmatprep.subr.bf16.mxu0 0
  %1199 = vmatpush1.bf16.msra.mxu0 0
  %1200 = vmatprep.subr.bf16.mxu0 0
  %1201 = vmatpush1.bf16.msra.mxu0 0
  %1202 = vmatprep.subr.bf16.mxu0 0
  %1203 = vmatpush1.bf16.msra.mxu0 0
  %1204 = vmatprep.subr.bf16.mxu0 0
  %1205 = vmatpush1.bf16.msra.mxu0 0
  %1206 = vmatprep.subr.bf16.mxu0 0
  %1207 = vmatpush1.bf16.msra.mxu0 0
  %1208 = vmatprep.subr.bf16.mxu0 0
  %1209 = vmatpush1.bf16.msra.mxu0 0
  %1210 = vmatprep.subr.bf16.mxu0 0
  %1211 = vmatpush1.bf16.msra.mxu0 0
  %1212 = vmatprep.subr.bf16.mxu0 0
  %1213 = vmatpush1.bf16.msra.mxu0 0
  %1214 = vmatprep.subr.bf16.mxu0 0
  %1215 = vmatpush1.bf16.msra.mxu0 0
  %1216 = vmatprep.subr.bf16.mxu0 0
  %1217 = vmatpush1.bf16.msra.mxu0 0
  %1218 = vmatprep.subr.bf16.mxu0 0
  %1219 = vmatpush1.bf16.msra.mxu0 0
  %1220 = vmatprep.subr.bf16.mxu0 0
  %1221 = vmatpush1.bf16.msra.mxu0 0
  %1222 = vmatprep.subr.bf16.mxu0 0
  %1223 = vmatpush1.bf16.msra.mxu0 0
  %1224 = vmatprep.mubr.bf16.mxu0 0
  %1225 = vmatmul.mubr.bf16.gmra.mrb[0].mxu0 %v1190
  %v1226 = vpop.f32.mrb[0].mxu0
  %v1227 = vadd.f32 %v1187, %v1226
  %v1228 = vpop.f32.mrb[0].mxu0
  %v1229 = vpop.f32.mrb[0].mxu0
  %v1230 = vpop.f32.mrb[0].mxu0
  %1231 = vdwg.mxu0
  %v1232 = vld [vmem:[%s2 + $0x4] sm:$0xf]
  %v1233 = vpack.c.bf16 %v1064, %v1063
  %v1234 = vpack.c.bf16 %v1065, %v1065
  %v1235 = vld [vmem:[%s3 + $0x8] ss:$0 sm:$0xff]
  %v1237 = vsel %vm50, %v1233, 0
  %v1240 = vsel %vm50, %v1234, 0
  %v1243 = vsel %vm57, %v1232, 0
  %1245 = vmatprep.subr.bf16.mxu0 0
  %1246 = vmatpush1.bf16.msra.mxu0 %v1243
  %1247 = vmatprep.subr.bf16.mxu0 0
  %1248 = vmatpush1.bf16.msra.mxu0 0
  %1249 = vmatprep.subr.bf16.mxu0 0
  %1250 = vmatpush1.bf16.msra.mxu0 0
  %1251 = vmatprep.subr.bf16.mxu0 0
  %1252 = vmatpush1.bf16.msra.mxu0 0
  %1253 = vmatprep.subr.bf16.mxu0 0
  %1254 = vmatpush1.bf16.msra.mxu0 0
  %1255 = vmatprep.subr.bf16.mxu0 0
  %1256 = vmatpush1.bf16.msra.mxu0 0
  %1257 = vmatprep.subr.bf16.mxu0 0
  %1258 = vmatpush1.bf16.msra.mxu0 0
  %1259 = vmatprep.subr.bf16.mxu0 0
  %1260 = vmatpush1.bf16.msra.mxu0 0
  %1261 = vmatprep.subr.bf16.mxu0 0
  %1262 = vmatpush1.bf16.msra.mxu0 0
  %1263 = vmatprep.subr.bf16.mxu0 0
  %1264 = vmatpush1.bf16.msra.mxu0 0
  %1265 = vmatprep.subr.bf16.mxu0 0
  %1266 = vmatpush1.bf16.msra.mxu0 0
  %1267 = vmatprep.subr.bf16.mxu0 0
  %1268 = vmatpush1.bf16.msra.mxu0 0
  %1269 = vmatprep.subr.bf16.mxu0 0
  %1270 = vmatpush1.bf16.msra.mxu0 0
  %1271 = vmatprep.subr.bf16.mxu0 0
  %1272 = vmatpush1.bf16.msra.mxu0 0
  %1273 = vmatprep.subr.bf16.mxu0 0
  %1274 = vmatpush1.bf16.msra.mxu0 0
  %1275 = vmatprep.subr.bf16.mxu0 0
  %1276 = vmatpush1.bf16.msra.mxu0 0
  %1277 = vmatprep.mubr.bf16.mxu0 0
  %1278 = vmatmul.mubr.bf16.gmra.mrb[0].mxu0 %v1237
  %v1279 = vpop.f32.mrb[0].mxu0
  %v1280 = vadd.f32 %v1235, %v1279
  %v1281 = vpop.f32.mrb[0].mxu0
  %v1282 = vpop.f32.mrb[0].mxu0
  %v1283 = vadd.f32 %v1235, %v1282
  %v1284 = vpop.f32.mrb[0].mxu0
  %1285 = vmatprep.mubr.bf16.mxu0 0
  %1286 = vmatmul.mubr.bf16.gmra.mrb[0].mxu0 %v1240
  %v1287 = vpop.f32.mrb[0].mxu0
  %v1288 = vadd.f32 %v1235, %v1287
  %v1289 = vpop.f32.mrb[0].mxu0
  %v1290 = vpop.f32.mrb[0].mxu0
  %v1291 = vpop.f32.mrb[0].mxu0
  %1292 = vdwg.mxu0
  %v1293 = vpack.c.bf16 %v1283, %v1280
  %v1294 = vpack.c.bf16 %v1288, %v1288
  %v1295 = vpack.c.bf16 %v1227, %v1227
  %v1297 = vsel %vm117, %v1295, 0
  %v1300 = vsel %vm117, %v1293, 0
  %v1303 = vsel %vm117, %v1294, 0
  %1305 = vmatprep.subr.bf16.mxu0 0
  %1306 = vmatpush1.bf16.xpose.msra.mxu0 %v1300
  %1307 = vmatprep.subr.bf16.mxu0 0
  %1308 = vmatpush1.bf16.xpose.msra.mxu0 %v1303
  %1309 = vmatprep.subr.bf16.mxu0 0
  %1310 = vmatpush1.bf16.xpose.msra.mxu0 0
  %1311 = vmatprep.subr.bf16.mxu0 0
  %1312 = vmatpush1.bf16.xpose.msra.mxu0 0
  %1313 = vmatprep.subr.bf16.mxu0 0
  %1314 = vmatpush1.bf16.xpose.msra.mxu0 0
  %1315 = vmatprep.subr.bf16.mxu0 0
  %1316 = vmatpush1.bf16.xpose.msra.mxu0 0
  %1317 = vmatprep.subr.bf16.mxu0 0
  %1318 = vmatpush1.bf16.xpose.msra.mxu0 0
  %1319 = vmatprep.subr.bf16.mxu0 0
  %1320 = vmatpush1.bf16.xpose.msra.mxu0 0
  %1321 = vmatprep.subr.bf16.mxu0 0
  %1322 = vmatpush1.bf16.xpose.msra.mxu0 0
  %1323 = vmatprep.subr.bf16.mxu0 0
  %1324 = vmatpush1.bf16.xpose.msra.mxu0 0
  %1325 = vmatprep.subr.bf16.mxu0 0
  %1326 = vmatpush1.bf16.xpose.msra.mxu0 0
  %1327 = vmatprep.subr.bf16.mxu0 0
  %1328 = vmatpush1.bf16.xpose.msra.mxu0 0
  %1329 = vmatprep.subr.bf16.mxu0 0
  %1330 = vmatpush1.bf16.xpose.msra.mxu0 0
  %1331 = vmatprep.subr.bf16.mxu0 0
  %1332 = vmatpush1.bf16.xpose.msra.mxu0 0
  %1333 = vmatprep.subr.bf16.mxu0 0
  %1334 = vmatpush1.bf16.xpose.msra.mxu0 0
  %1335 = vmatprep.subr.bf16.mxu0 0
  %1336 = vmatpush1.bf16.xpose.msra.mxu0 0
  %1337 = vmatprep.mubr.bf16.mxu0 0
  %1338 = vmatmul.mubr.bf16.gmra.mrb[0].mxu0 %v1297
  %v1339 = vpop.f32.mrb[0].mxu0
  %v1340 = vadd.f32 0.0, %v1339
  %v1341 = vpop.f32.mrb[0].mxu0
  %v1342 = vpop.f32.mrb[0].mxu0
  %v1343 = vpop.f32.mrb[0].mxu0
  %1344 = vdwg.mxu0
  %v1345 = vmul.f32 %v1340, 0.70710677
  %1347 = vrot.lane.b32.xlu0 %v1181, 20
  %v1348 = vpop.permute.xlu0 %1347
  %v1350 = vadd.f32 %v1345, %v1348
  %vm1351 = vcmask 156672
  %v1352 = vsel %vm1351, %v1350, -inf
  %1353 = vmax.xlane.f32.xlu0 %v1352
  %v1354 = vpop.xlane.xlu0 %1353
  %v1355 = vsub.f32 %v1350, %v1354
  %v1356 = vmul.f32 %v1355, 1.442695
  %v1357 = vpow.pop %v1356
  %v1358 = vsel %vm1351, %v1357, 0.0
  %1359 = vadd.xlane.f32.xlu0 %v1358
  %v1360 = vpop.xlane.xlu0 %1359
  %v1361 = vrcp.pop %v1360
  %v1362 = vmul.f32 %v1357, %v1361
  %v1363 = vpack.c.bf16 %v1362, %v1362
  %1366 = vrot.lane.b32.xlu0 %v1293, 112
  %v1367 = vpop.permute.xlu0 %1366
  %1368 = vrot.lane.b32.xlu0 %v1294, 112
  %v1369 = vpop.permute.xlu0 %1368
  %v1372 = vsel %vm193, %v1363, 0
  %v1375 = vsel %vm241, %v1369, 0
  %1377 = vmatprep.subr.bf16.mxu0 0
  %1378 = vmatpush1.bf16.msra.mxu0 %v1367
  %1379 = vmatprep.subr.bf16.mxu0 0
  %1380 = vmatpush1.bf16.msra.mxu0 %v1375
  %1381 = vmatprep.subr.bf16.mxu0 0
  %1382 = vmatpush1.bf16.msra.mxu0 0
  %1383 = vmatprep.subr.bf16.mxu0 0
  %1384 = vmatpush1.bf16.msra.mxu0 0
  %1385 = vmatprep.subr.bf16.mxu0 0
  %1386 = vmatpush1.bf16.msra.mxu0 0
  %1387 = vmatprep.subr.bf16.mxu0 0
  %1388 = vmatpush1.bf16.msra.mxu0 0
  %1389 = vmatprep.subr.bf16.mxu0 0
  %1390 = vmatpush1.bf16.msra.mxu0 0
  %1391 = vmatprep.subr.bf16.mxu0 0
  %1392 = vmatpush1.bf16.msra.mxu0 0
  %1393 = vmatprep.subr.bf16.mxu0 0
  %1394 = vmatpush1.bf16.msra.mxu0 0
  %1395 = vmatprep.subr.bf16.mxu0 0
  %1396 = vmatpush1.bf16.msra.mxu0 0
  %1397 = vmatprep.subr.bf16.mxu0 0
  %1398 = vmatpush1.bf16.msra.mxu0 0
  %1399 = vmatprep.subr.bf16.mxu0 0
  %1400 = vmatpush1.bf16.msra.mxu0 0
  %1401 = vmatprep.subr.bf16.mxu0 0
  %1402 = vmatpush1.bf16.msra.mxu0 0
  %1403 = vmatprep.subr.bf16.mxu0 0
  %1404 = vmatpush1.bf16.msra.mxu0 0
  %1405 = vmatprep.subr.bf16.mxu0 0
  %1406 = vmatpush1.bf16.msra.mxu0 0
  %1407 = vmatprep.subr.bf16.mxu0 0
  %1408 = vmatpush1.bf16.msra.mxu0 0
  %1409 = vmatprep.mubr.bf16.mxu0 0
  %1410 = vmatmul.mubr.bf16.gmra.mrb[0].mxu0 %v1372
  %v1411 = vpop.f32.mrb[0].mxu0
  %v1412 = vadd.f32 0.0, %v1411
  %v1413 = vpop.f32.mrb[0].mxu0
  %v1414 = vpop.f32.mrb[0].mxu0
  %v1415 = vpop.f32.mrb[0].mxu0
  %1416 = vdwg.mxu0
  %1418 = vrot.lane.b32.xlu0 %v1295, 126
  %v1419 = vpop.permute.xlu0 %1418
  %1420 = vrot.lane.b32.xlu0 %v1293, 126
  %v1421 = vpop.permute.xlu0 %1420
  %1422 = vrot.lane.b32.xlu0 %v1294, 126
  %v1423 = vpop.permute.xlu0 %1422
  %v1425 = vsel %vm117, %v1419, 0
  %v1428 = vsel %vm117, %v1421, 0
  %v1431 = vsel %vm117, %v1423, 0
  %1433 = vmatprep.subr.bf16.mxu0 0
  %1434 = vmatpush1.bf16.xpose.msra.mxu0 %v1428
  %1435 = vmatprep.subr.bf16.mxu0 0
  %1436 = vmatpush1.bf16.xpose.msra.mxu0 %v1431
  %1437 = vmatprep.subr.bf16.mxu0 0
  %1438 = vmatpush1.bf16.xpose.msra.mxu0 0
  %1439 = vmatprep.subr.bf16.mxu0 0
  %1440 = vmatpush1.bf16.xpose.msra.mxu0 0
  %1441 = vmatprep.subr.bf16.mxu0 0
  %1442 = vmatpush1.bf16.xpose.msra.mxu0 0
  %1443 = vmatprep.subr.bf16.mxu0 0
  %1444 = vmatpush1.bf16.xpose.msra.mxu0 0
  %1445 = vmatprep.subr.bf16.mxu0 0
  %1446 = vmatpush1.bf16.xpose.msra.mxu0 0
  %1447 = vmatprep.subr.bf16.mxu0 0
  %1448 = vmatpush1.bf16.xpose.msra.mxu0 0
  %1449 = vmatprep.subr.bf16.mxu0 0
  %1450 = vmatpush1.bf16.xpose.msra.mxu0 0
  %1451 = vmatprep.subr.bf16.mxu0 0
  %1452 = vmatpush1.bf16.xpose.msra.mxu0 0
  %1453 = vmatprep.subr.bf16.mxu0 0
  %1454 = vmatpush1.bf16.xpose.msra.mxu0 0
  %1455 = vmatprep.subr.bf16.mxu0 0
  %1456 = vmatpush1.bf16.xpose.msra.mxu0 0
  %1457 = vmatprep.subr.bf16.mxu0 0
  %1458 = vmatpush1.bf16.xpose.msra.mxu0 0
  %1459 = vmatprep.subr.bf16.mxu0 0
  %1460 = vmatpush1.bf16.xpose.msra.mxu0 0
  %1461 = vmatprep.subr.bf16.mxu0 0
  %1462 = vmatpush1.bf16.xpose.msra.mxu0 0
  %1463 = vmatprep.subr.bf16.mxu0 0
  %1464 = vmatpush1.bf16.xpose.msra.mxu0 0
  %1465 = vmatprep.mubr.bf16.mxu0 0
  %1466 = vmatmul.mubr.bf16.gmra.mrb[0].mxu0 %v1425
  %v1467 = vpop.f32.mrb[0].mxu0
  %v1468 = vadd.f32 0.0, %v1467
  %v1469 = vpop.f32.mrb[0].mxu0
  %v1470 = vpop.f32.mrb[0].mxu0
  %v1471 = vpop.f32.mrb[0].mxu0
  %1472 = vdwg.mxu0
  %v1473 = vmul.f32 %v1468, 0.70710677
  %v1474 = vadd.f32 %v1473, %v1348
  %v1475 = vsel %vm1351, %v1474, -inf
  %1476 = vmax.xlane.f32.xlu0 %v1475
  %v1477 = vpop.xlane.xlu0 %1476
  %v1478 = vsub.f32 %v1474, %v1477
  %v1479 = vmul.f32 %v1478, 1.442695
  %v1480 = vpow.pop %v1479
  %v1481 = vsel %vm1351, %v1480, 0.0
  %1482 = vadd.xlane.f32.xlu0 %v1481
  %v1483 = vpop.xlane.xlu0 %1482
  %v1484 = vrcp.pop %v1483
  %v1485 = vmul.f32 %v1480, %v1484
  %v1486 = vpack.c.bf16 %v1485, %v1485
  %1487 = vrot.lane.b32.xlu0 %v1293, 110
  %v1488 = vpop.permute.xlu0 %1487
  %1489 = vrot.lane.b32.xlu0 %v1294, 110
  %v1490 = vpop.permute.xlu0 %1489
  %v1493 = vsel %vm193, %v1486, 0
  %v1496 = vsel %vm241, %v1490, 0
  %1498 = vmatprep.subr.bf16.mxu0 0
  %1499 = vmatpush1.bf16.msra.mxu0 %v1488
  %1500 = vmatprep.subr.bf16.mxu0 0
  %1501 = vmatpush1.bf16.msra.mxu0 %v1496
  %1502 = vmatprep.subr.bf16.mxu0 0
  %1503 = vmatpush1.bf16.msra.mxu0 0
  %1504 = vmatprep.subr.bf16.mxu0 0
  %1505 = vmatpush1.bf16.msra.mxu0 0
  %1506 = vmatprep.subr.bf16.mxu0 0
  %1507 = vmatpush1.bf16.msra.mxu0 0
  %1508 = vmatprep.subr.bf16.mxu0 0
  %1509 = vmatpush1.bf16.msra.mxu0 0
  %1510 = vmatprep.subr.bf16.mxu0 0
  %1511 = vmatpush1.bf16.msra.mxu0 0
  %1512 = vmatprep.subr.bf16.mxu0 0
  %1513 = vmatpush1.bf16.msra.mxu0 0
  %1514 = vmatprep.subr.bf16.mxu0 0
  %1515 = vmatpush1.bf16.msra.mxu0 0
  %1516 = vmatprep.subr.bf16.mxu0 0
  %1517 = vmatpush1.bf16.msra.mxu0 0
  %1518 = vmatprep.subr.bf16.mxu0 0
  %1519 = vmatpush1.bf16.msra.mxu0 0
  %1520 = vmatprep.subr.bf16.mxu0 0
  %1521 = vmatpush1.bf16.msra.mxu0 0
  %1522 = vmatprep.subr.bf16.mxu0 0
  %1523 = vmatpush1.bf16.msra.mxu0 0
  %1524 = vmatprep.subr.bf16.mxu0 0
  %1525 = vmatpush1.bf16.msra.mxu0 0
  %1526 = vmatprep.subr.bf16.mxu0 0
  %1527 = vmatpush1.bf16.msra.mxu0 0
  %1528 = vmatprep.subr.bf16.mxu0 0
  %1529 = vmatpush1.bf16.msra.mxu0 0
  %1530 = vmatprep.mubr.bf16.mxu0 0
  %1531 = vmatmul.mubr.bf16.gmra.mrb[0].mxu0 %v1493
  %v1532 = vpop.f32.mrb[0].mxu0
  %v1533 = vadd.f32 0.0, %v1532
  %v1534 = vpop.f32.mrb[0].mxu0
  %v1535 = vpop.f32.mrb[0].mxu0
  %v1536 = vpop.f32.mrb[0].mxu0
  %1537 = vdwg.mxu0
  %1538 = vrot.lane.b32.xlu0 %v1295, 124
  %v1539 = vpop.permute.xlu0 %1538
  %1540 = vrot.lane.b32.xlu0 %v1293, 124
  %v1541 = vpop.permute.xlu0 %1540
  %1542 = vrot.lane.b32.xlu0 %v1294, 124
  %v1543 = vpop.permute.xlu0 %1542
  %v1545 = vsel %vm117, %v1539, 0
  %v1548 = vsel %vm117, %v1541, 0
  %v1551 = vsel %vm117, %v1543, 0
  %1553 = vmatprep.subr.bf16.mxu0 0
  %1554 = vmatpush1.bf16.xpose.msra.mxu0 %v1548
  %1555 = vmatprep.subr.bf16.mxu0 0
  %1556 = vmatpush1.bf16.xpose.msra.mxu0 %v1551
  %1557 = vmatprep.subr.bf16.mxu0 0
  %1558 = vmatpush1.bf16.xpose.msra.mxu0 0
  %1559 = vmatprep.subr.bf16.mxu0 0
  %1560 = vmatpush1.bf16.xpose.msra.mxu0 0
  %1561 = vmatprep.subr.bf16.mxu0 0
  %1562 = vmatpush1.bf16.xpose.msra.mxu0 0
  %1563 = vmatprep.subr.bf16.mxu0 0
  %1564 = vmatpush1.bf16.xpose.msra.mxu0 0
  %1565 = vmatprep.subr.bf16.mxu0 0
  %1566 = vmatpush1.bf16.xpose.msra.mxu0 0
  %1567 = vmatprep.subr.bf16.mxu0 0
  %1568 = vmatpush1.bf16.xpose.msra.mxu0 0
  %1569 = vmatprep.subr.bf16.mxu0 0
  %1570 = vmatpush1.bf16.xpose.msra.mxu0 0
  %1571 = vmatprep.subr.bf16.mxu0 0
  %1572 = vmatpush1.bf16.xpose.msra.mxu0 0
  %1573 = vmatprep.subr.bf16.mxu0 0
  %1574 = vmatpush1.bf16.xpose.msra.mxu0 0
  %1575 = vmatprep.subr.bf16.mxu0 0
  %1576 = vmatpush1.bf16.xpose.msra.mxu0 0
  %1577 = vmatprep.subr.bf16.mxu0 0
  %1578 = vmatpush1.bf16.xpose.msra.mxu0 0
  %1579 = vmatprep.subr.bf16.mxu0 0
  %1580 = vmatpush1.bf16.xpose.msra.mxu0 0
  %1581 = vmatprep.subr.bf16.mxu0 0
  %1582 = vmatpush1.bf16.xpose.msra.mxu0 0
  %1583 = vmatprep.subr.bf16.mxu0 0
  %1584 = vmatpush1.bf16.xpose.msra.mxu0 0
  %1585 = vmatprep.mubr.bf16.mxu0 0
  %1586 = vmatmul.mubr.bf16.gmra.mrb[0].mxu0 %v1545
  %v1587 = vpop.f32.mrb[0].mxu0
  %v1588 = vadd.f32 0.0, %v1587
  %v1589 = vpop.f32.mrb[0].mxu0
  %v1590 = vpop.f32.mrb[0].mxu0
  %v1591 = vpop.f32.mrb[0].mxu0
  %1592 = vdwg.mxu0
  %v1593 = vmul.f32 %v1588, 0.70710677
  %v1594 = vadd.f32 %v1593, %v1348
  %v1595 = vsel %vm1351, %v1594, -inf
  %1596 = vmax.xlane.f32.xlu0 %v1595
  %v1597 = vpop.xlane.xlu0 %1596
  %v1598 = vsub.f32 %v1594, %v1597
  %v1599 = vmul.f32 %v1598, 1.442695
  %v1600 = vpow.pop %v1599
  %v1601 = vsel %vm1351, %v1600, 0.0
  %1602 = vadd.xlane.f32.xlu0 %v1601
  %v1603 = vpop.xlane.xlu0 %1602
  %v1604 = vrcp.pop %v1603
  %v1605 = vmul.f32 %v1600, %v1604
  %v1606 = vpack.c.bf16 %v1605, %v1605
  %1607 = vrot.lane.b32.xlu0 %v1293, 108
  %v1608 = vpop.permute.xlu0 %1607
  %1609 = vrot.lane.b32.xlu0 %v1294, 108
  %v1610 = vpop.permute.xlu0 %1609
  %v1613 = vsel %vm193, %v1606, 0
  %v1616 = vsel %vm241, %v1610, 0
  %1618 = vmatprep.subr.bf16.mxu0 0
  %1619 = vmatpush1.bf16.msra.mxu0 %v1608
  %1620 = vmatprep.subr.bf16.mxu0 0
  %1621 = vmatpush1.bf16.msra.mxu0 %v1616
  %1622 = vmatprep.subr.bf16.mxu0 0
  %1623 = vmatpush1.bf16.msra.mxu0 0
  %1624 = vmatprep.subr.bf16.mxu0 0
  %1625 = vmatpush1.bf16.msra.mxu0 0
  %1626 = vmatprep.subr.bf16.mxu0 0
  %1627 = vmatpush1.bf16.msra.mxu0 0
  %1628 = vmatprep.subr.bf16.mxu0 0
  %1629 = vmatpush1.bf16.msra.mxu0 0
  %1630 = vmatprep.subr.bf16.mxu0 0
  %1631 = vmatpush1.bf16.msra.mxu0 0
  %1632 = vmatprep.subr.bf16.mxu0 0
  %1633 = vmatpush1.bf16.msra.mxu0 0
  %1634 = vmatprep.subr.bf16.mxu0 0
  %1635 = vmatpush1.bf16.msra.mxu0 0
  %1636 = vmatprep.subr.bf16.mxu0 0
  %1637 = vmatpush1.bf16.msra.mxu0 0
  %1638 = vmatprep.subr.bf16.mxu0 0
  %1639 = vmatpush1.bf16.msra.mxu0 0
  %1640 = vmatprep.subr.bf16.mxu0 0
  %1641 = vmatpush1.bf16.msra.mxu0 0
  %1642 = vmatprep.subr.bf16.mxu0 0
  %1643 = vmatpush1.bf16.msra.mxu0 0
  %1644 = vmatprep.subr.bf16.mxu0 0
  %1645 = vmatpush1.bf16.msra.mxu0 0
  %1646 = vmatprep.subr.bf16.mxu0 0
  %1647 = vmatpush1.bf16.msra.mxu0 0
  %1648 = vmatprep.subr.bf16.mxu0 0
  %1649 = vmatpush1.bf16.msra.mxu0 0
  %1650 = vmatprep.mubr.bf16.mxu0 0
  %1651 = vmatmul.mubr.bf16.gmra.mrb[0].mxu0 %v1613
  %v1652 = vpop.f32.mrb[0].mxu0
  %v1653 = vadd.f32 0.0, %v1652
  %v1654 = vpop.f32.mrb[0].mxu0
  %v1655 = vpop.f32.mrb[0].mxu0
  %v1656 = vpop.f32.mrb[0].mxu0
  %1657 = vdwg.mxu0
  %1658 = vrot.lane.b32.xlu0 %v1295, 122
  %v1659 = vpop.permute.xlu0 %1658
  %1660 = vrot.lane.b32.xlu0 %v1293, 122
  %v1661 = vpop.permute.xlu0 %1660
  %1662 = vrot.lane.b32.xlu0 %v1294, 122
  %v1663 = vpop.permute.xlu0 %1662
  %v1665 = vsel %vm117, %v1659, 0
  %v1668 = vsel %vm117, %v1661, 0
  %v1671 = vsel %vm117, %v1663, 0
  %1673 = vmatprep.subr.bf16.mxu0 0
  %1674 = vmatpush1.bf16.xpose.msra.mxu0 %v1668
  %1675 = vmatprep.subr.bf16.mxu0 0
  %1676 = vmatpush1.bf16.xpose.msra.mxu0 %v1671
  %1677 = vmatprep.subr.bf16.mxu0 0
  %1678 = vmatpush1.bf16.xpose.msra.mxu0 0
  %1679 = vmatprep.subr.bf16.mxu0 0
  %1680 = vmatpush1.bf16.xpose.msra.mxu0 0
  %1681 = vmatprep.subr.bf16.mxu0 0
  %1682 = vmatpush1.bf16.xpose.msra.mxu0 0
  %1683 = vmatprep.subr.bf16.mxu0 0
  %1684 = vmatpush1.bf16.xpose.msra.mxu0 0
  %1685 = vmatprep.subr.bf16.mxu0 0
  %1686 = vmatpush1.bf16.xpose.msra.mxu0 0
  %1687 = vmatprep.subr.bf16.mxu0 0
  %1688 = vmatpush1.bf16.xpose.msra.mxu0 0
  %1689 = vmatprep.subr.bf16.mxu0 0
  %1690 = vmatpush1.bf16.xpose.msra.mxu0 0
  %1691 = vmatprep.subr.bf16.mxu0 0
  %1692 = vmatpush1.bf16.xpose.msra.mxu0 0
  %1693 = vmatprep.subr.bf16.mxu0 0
  %1694 = vmatpush1.bf16.xpose.msra.mxu0 0
  %1695 = vmatprep.subr.bf16.mxu0 0
  %1696 = vmatpush1.bf16.xpose.msra.mxu0 0
  %1697 = vmatprep.subr.bf16.mxu0 0
  %1698 = vmatpush1.bf16.xpose.msra.mxu0 0
  %1699 = vmatprep.subr.bf16.mxu0 0
  %1700 = vmatpush1.bf16.xpose.msra.mxu0 0
  %1701 = vmatprep.subr.bf16.mxu0 0
  %1702 = vmatpush1.bf16.xpose.msra.mxu0 0
  %1703 = vmatprep.subr.bf16.mxu0 0
  %1704 = vmatpush1.bf16.xpose.msra.mxu0 0
  %1705 = vmatprep.mubr.bf16.mxu0 0
  %1706 = vmatmul.mubr.bf16.gmra.mrb[0].mxu0 %v1665
  %v1707 = vpop.f32.mrb[0].mxu0
  %v1708 = vadd.f32 0.0, %v1707
  %v1709 = vpop.f32.mrb[0].mxu0
  %v1710 = vpop.f32.mrb[0].mxu0
  %v1711 = vpop.f32.mrb[0].mxu0
  %1712 = vdwg.mxu0
  %v1713 = vmul.f32 %v1708, 0.70710677
  %v1714 = vadd.f32 %v1713, %v1348
  %v1715 = vsel %vm1351, %v1714, -inf
  %1716 = vmax.xlane.f32.xlu0 %v1715
  %v1717 = vpop.xlane.xlu0 %1716
  %v1718 = vsub.f32 %v1714, %v1717
  %v1719 = vmul.f32 %v1718, 1.442695
  %v1720 = vpow.pop %v1719
  %v1721 = vsel %vm1351, %v1720, 0.0
  %1722 = vadd.xlane.f32.xlu0 %v1721
  %v1723 = vpop.xlane.xlu0 %1722
  %v1724 = vrcp.pop %v1723
  %v1725 = vmul.f32 %v1720, %v1724
  %v1726 = vpack.c.bf16 %v1725, %v1725
  %1727 = vrot.lane.b32.xlu0 %v1293, 106
  %v1728 = vpop.permute.xlu0 %1727
  %1729 = vrot.lane.b32.xlu0 %v1294, 106
  %v1730 = vpop.permute.xlu0 %1729
  %v1733 = vsel %vm193, %v1726, 0
  %v1736 = vsel %vm241, %v1730, 0
  %1738 = vmatprep.subr.bf16.mxu0 0
  %1739 = vmatpush1.bf16.msra.mxu0 %v1728
  %1740 = vmatprep.subr.bf16.mxu0 0
  %1741 = vmatpush1.bf16.msra.mxu0 %v1736
  %1742 = vmatprep.subr.bf16.mxu0 0
  %1743 = vmatpush1.bf16.msra.mxu0 0
  %1744 = vmatprep.subr.bf16.mxu0 0
  %1745 = vmatpush1.bf16.msra.mxu0 0
  %1746 = vmatprep.subr.bf16.mxu0 0
  %1747 = vmatpush1.bf16.msra.mxu0 0
  %1748 = vmatprep.subr.bf16.mxu0 0
  %1749 = vmatpush1.bf16.msra.mxu0 0
  %1750 = vmatprep.subr.bf16.mxu0 0
  %1751 = vmatpush1.bf16.msra.mxu0 0
  %1752 = vmatprep.subr.bf16.mxu0 0
  %1753 = vmatpush1.bf16.msra.mxu0 0
  %1754 = vmatprep.subr.bf16.mxu0 0
  %1755 = vmatpush1.bf16.msra.mxu0 0
  %1756 = vmatprep.subr.bf16.mxu0 0
  %1757 = vmatpush1.bf16.msra.mxu0 0
  %1758 = vmatprep.subr.bf16.mxu0 0
  %1759 = vmatpush1.bf16.msra.mxu0 0
  %1760 = vmatprep.subr.bf16.mxu0 0
  %1761 = vmatpush1.bf16.msra.mxu0 0
  %1762 = vmatprep.subr.bf16.mxu0 0
  %1763 = vmatpush1.bf16.msra.mxu0 0
  %1764 = vmatprep.subr.bf16.mxu0 0
  %1765 = vmatpush1.bf16.msra.mxu0 0
  %1766 = vmatprep.subr.bf16.mxu0 0
  %1767 = vmatpush1.bf16.msra.mxu0 0
  %1768 = vmatprep.subr.bf16.mxu0 0
  %1769 = vmatpush1.bf16.msra.mxu0 0
  %1770 = vmatprep.mubr.bf16.mxu0 0
  %1771 = vmatmul.mubr.bf16.gmra.mrb[0].mxu0 %v1733
  %v1772 = vpop.f32.mrb[0].mxu0
  %v1773 = vadd.f32 0.0, %v1772
  %v1774 = vpop.f32.mrb[0].mxu0
  %v1775 = vpop.f32.mrb[0].mxu0
  %v1776 = vpop.f32.mrb[0].mxu0
  %1777 = vdwg.mxu0
  %1778 = vrot.lane.b32.xlu0 %v1295, 120
  %v1779 = vpop.permute.xlu0 %1778
  %1780 = vrot.lane.b32.xlu0 %v1293, 120
  %v1781 = vpop.permute.xlu0 %1780
  %1782 = vrot.lane.b32.xlu0 %v1294, 120
  %v1783 = vpop.permute.xlu0 %1782
  %v1785 = vsel %vm117, %v1779, 0
  %v1788 = vsel %vm117, %v1781, 0
  %v1791 = vsel %vm117, %v1783, 0
  %1793 = vmatprep.subr.bf16.mxu0 0
  %1794 = vmatpush1.bf16.xpose.msra.mxu0 %v1788
  %1795 = vmatprep.subr.bf16.mxu0 0
  %1796 = vmatpush1.bf16.xpose.msra.mxu0 %v1791
  %1797 = vmatprep.subr.bf16.mxu0 0
  %1798 = vmatpush1.bf16.xpose.msra.mxu0 0
  %1799 = vmatprep.subr.bf16.mxu0 0
  %1800 = vmatpush1.bf16.xpose.msra.mxu0 0
  %1801 = vmatprep.subr.bf16.mxu0 0
  %1802 = vmatpush1.bf16.xpose.msra.mxu0 0
  %1803 = vmatprep.subr.bf16.mxu0 0
  %1804 = vmatpush1.bf16.xpose.msra.mxu0 0
  %1805 = vmatprep.subr.bf16.mxu0 0
  %1806 = vmatpush1.bf16.xpose.msra.mxu0 0
  %1807 = vmatprep.subr.bf16.mxu0 0
  %1808 = vmatpush1.bf16.xpose.msra.mxu0 0
  %1809 = vmatprep.subr.bf16.mxu0 0
  %1810 = vmatpush1.bf16.xpose.msra.mxu0 0
  %1811 = vmatprep.subr.bf16.mxu0 0
  %1812 = vmatpush1.bf16.xpose.msra.mxu0 0
  %1813 = vmatprep.subr.bf16.mxu0 0
  %1814 = vmatpush1.bf16.xpose.msra.mxu0 0
  %1815 = vmatprep.subr.bf16.mxu0 0
  %1816 = vmatpush1.bf16.xpose.msra.mxu0 0
  %1817 = vmatprep.subr.bf16.mxu0 0
  %1818 = vmatpush1.bf16.xpose.msra.mxu0 0
  %1819 = vmatprep.subr.bf16.mxu0 0
  %1820 = vmatpush1.bf16.xpose.msra.mxu0 0
  %1821 = vmatprep.subr.bf16.mxu0 0
  %1822 = vmatpush1.bf16.xpose.msra.mxu0 0
  %1823 = vmatprep.subr.bf16.mxu0 0
  %1824 = vmatpush1.bf16.xpose.msra.mxu0 0
  %1825 = vmatprep.mubr.bf16.mxu0 0
  %1826 = vmatmul.mubr.bf16.gmra.mrb[0].mxu0 %v1785
  %v1827 = vpop.f32.mrb[0].mxu0
  %v1828 = vadd.f32 0.0, %v1827
  %v1829 = vpop.f32.mrb[0].mxu0
  %v1830 = vpop.f32.mrb[0].mxu0
  %v1831 = vpop.f32.mrb[0].mxu0
  %1832 = vdwg.mxu0
  %v1833 = vmul.f32 %v1828, 0.70710677
  %v1834 = vadd.f32 %v1833, %v1348
  %v1835 = vsel %vm1351, %v1834, -inf
  %1836 = vmax.xlane.f32.xlu0 %v1835
  %v1837 = vpop.xlane.xlu0 %1836
  %v1838 = vsub.f32 %v1834, %v1837
  %v1839 = vmul.f32 %v1838, 1.442695
  %v1840 = vpow.pop %v1839
  %v1841 = vsel %vm1351, %v1840, 0.0
  %1842 = vadd.xlane.f32.xlu0 %v1841
  %v1843 = vpop.xlane.xlu0 %1842
  %v1844 = vrcp.pop %v1843
  %v1845 = vmul.f32 %v1840, %v1844
  %v1846 = vpack.c.bf16 %v1845, %v1845
  %1847 = vrot.lane.b32.xlu0 %v1293, 104
  %v1848 = vpop.permute.xlu0 %1847
  %1849 = vrot.lane.b32.xlu0 %v1294, 104
  %v1850 = vpop.permute.xlu0 %1849
  %v1853 = vsel %vm193, %v1846, 0
  %v1856 = vsel %vm241, %v1850, 0
  %1858 = vmatprep.subr.bf16.mxu0 0
  %1859 = vmatpush1.bf16.msra.mxu0 %v1848
  %1860 = vmatprep.subr.bf16.mxu0 0
  %1861 = vmatpush1.bf16.msra.mxu0 %v1856
  %1862 = vmatprep.subr.bf16.mxu0 0
  %1863 = vmatpush1.bf16.msra.mxu0 0
  %1864 = vmatprep.subr.bf16.mxu0 0
  %1865 = vmatpush1.bf16.msra.mxu0 0
  %1866 = vmatprep.subr.bf16.mxu0 0
  %1867 = vmatpush1.bf16.msra.mxu0 0
  %1868 = vmatprep.subr.bf16.mxu0 0
  %1869 = vmatpush1.bf16.msra.mxu0 0
  %1870 = vmatprep.subr.bf16.mxu0 0
  %1871 = vmatpush1.bf16.msra.mxu0 0
  %1872 = vmatprep.subr.bf16.mxu0 0
  %1873 = vmatpush1.bf16.msra.mxu0 0
  %1874 = vmatprep.subr.bf16.mxu0 0
  %1875 = vmatpush1.bf16.msra.mxu0 0
  %1876 = vmatprep.subr.bf16.mxu0 0
  %1877 = vmatpush1.bf16.msra.mxu0 0
  %1878 = vmatprep.subr.bf16.mxu0 0
  %1879 = vmatpush1.bf16.msra.mxu0 0
  %1880 = vmatprep.subr.bf16.mxu0 0
  %1881 = vmatpush1.bf16.msra.mxu0 0
  %1882 = vmatprep.subr.bf16.mxu0 0
  %1883 = vmatpush1.bf16.msra.mxu0 0
  %1884 = vmatprep.subr.bf16.mxu0 0
  %1885 = vmatpush1.bf16.msra.mxu0 0
  %1886 = vmatprep.subr.bf16.mxu0 0
  %1887 = vmatpush1.bf16.msra.mxu0 0
  %1888 = vmatprep.subr.bf16.mxu0 0
  %1889 = vmatpush1.bf16.msra.mxu0 0
  %1890 = vmatprep.mubr.bf16.mxu0 0
  %1891 = vmatmul.mubr.bf16.gmra.mrb[0].mxu0 %v1853
  %v1892 = vpop.f32.mrb[0].mxu0
  %v1893 = vadd.f32 0.0, %v1892
  %v1894 = vpop.f32.mrb[0].mxu0
  %v1895 = vpop.f32.mrb[0].mxu0
  %v1896 = vpop.f32.mrb[0].mxu0
  %1897 = vdwg.mxu0
  %1898 = vrot.lane.b32.xlu0 %v1295, 118
  %v1899 = vpop.permute.xlu0 %1898
  %1900 = vrot.lane.b32.xlu0 %v1293, 118
  %v1901 = vpop.permute.xlu0 %1900
  %1902 = vrot.lane.b32.xlu0 %v1294, 118
  %v1903 = vpop.permute.xlu0 %1902
  %v1905 = vsel %vm117, %v1899, 0
  %v1908 = vsel %vm117, %v1901, 0
  %v1911 = vsel %vm117, %v1903, 0
  %1913 = vmatprep.subr.bf16.mxu0 0
  %1914 = vmatpush1.bf16.xpose.msra.mxu0 %v1908
  %1915 = vmatprep.subr.bf16.mxu0 0
  %1916 = vmatpush1.bf16.xpose.msra.mxu0 %v1911
  %1917 = vmatprep.subr.bf16.mxu0 0
  %1918 = vmatpush1.bf16.xpose.msra.mxu0 0
  %1919 = vmatprep.subr.bf16.mxu0 0
  %1920 = vmatpush1.bf16.xpose.msra.mxu0 0
  %1921 = vmatprep.subr.bf16.mxu0 0
  %1922 = vmatpush1.bf16.xpose.msra.mxu0 0
  %1923 = vmatprep.subr.bf16.mxu0 0
  %1924 = vmatpush1.bf16.xpose.msra.mxu0 0
  %1925 = vmatprep.subr.bf16.mxu0 0
  %1926 = vmatpush1.bf16.xpose.msra.mxu0 0
  %1927 = vmatprep.subr.bf16.mxu0 0
  %1928 = vmatpush1.bf16.xpose.msra.mxu0 0
  %1929 = vmatprep.subr.bf16.mxu0 0
  %1930 = vmatpush1.bf16.xpose.msra.mxu0 0
  %1931 = vmatprep.subr.bf16.mxu0 0
  %1932 = vmatpush1.bf16.xpose.msra.mxu0 0
  %1933 = vmatprep.subr.bf16.mxu0 0
  %1934 = vmatpush1.bf16.xpose.msra.mxu0 0
  %1935 = vmatprep.subr.bf16.mxu0 0
  %1936 = vmatpush1.bf16.xpose.msra.mxu0 0
  %1937 = vmatprep.subr.bf16.mxu0 0
  %1938 = vmatpush1.bf16.xpose.msra.mxu0 0
  %1939 = vmatprep.subr.bf16.mxu0 0
  %1940 = vmatpush1.bf16.xpose.msra.mxu0 0
  %1941 = vmatprep.subr.bf16.mxu0 0
  %1942 = vmatpush1.bf16.xpose.msra.mxu0 0
  %1943 = vmatprep.subr.bf16.mxu0 0
  %1944 = vmatpush1.bf16.xpose.msra.mxu0 0
  %1945 = vmatprep.mubr.bf16.mxu0 0
  %1946 = vmatmul.mubr.bf16.gmra.mrb[0].mxu0 %v1905
  %v1947 = vpop.f32.mrb[0].mxu0
  %v1948 = vadd.f32 0.0, %v1947
  %v1949 = vpop.f32.mrb[0].mxu0
  %v1950 = vpop.f32.mrb[0].mxu0
  %v1951 = vpop.f32.mrb[0].mxu0
  %1952 = vdwg.mxu0
  %v1953 = vmul.f32 %v1948, 0.70710677
  %v1954 = vadd.f32 %v1953, %v1348
  %v1955 = vsel %vm1351, %v1954, -inf
  %1956 = vmax.xlane.f32.xlu0 %v1955
  %v1957 = vpop.xlane.xlu0 %1956
  %v1958 = vsub.f32 %v1954, %v1957
  %v1959 = vmul.f32 %v1958, 1.442695
  %v1960 = vpow.pop %v1959
  %v1961 = vsel %vm1351, %v1960, 0.0
  %1962 = vadd.xlane.f32.xlu0 %v1961
  %v1963 = vpop.xlane.xlu0 %1962
  %v1964 = vrcp.pop %v1963
  %v1965 = vmul.f32 %v1960, %v1964
  %v1966 = vpack.c.bf16 %v1965, %v1965
  %1967 = vrot.lane.b32.xlu0 %v1293, 102
  %v1968 = vpop.permute.xlu0 %1967
  %1969 = vrot.lane.b32.xlu0 %v1294, 102
  %v1970 = vpop.permute.xlu0 %1969
  %v1973 = vsel %vm193, %v1966, 0
  %v1976 = vsel %vm241, %v1970, 0
  %1978 = vmatprep.subr.bf16.mxu0 0
  %1979 = vmatpush1.bf16.msra.mxu0 %v1968
  %1980 = vmatprep.subr.bf16.mxu0 0
  %1981 = vmatpush1.bf16.msra.mxu0 %v1976
  %1982 = vmatprep.subr.bf16.mxu0 0
  %1983 = vmatpush1.bf16.msra.mxu0 0
  %1984 = vmatprep.subr.bf16.mxu0 0
  %1985 = vmatpush1.bf16.msra.mxu0 0
  %1986 = vmatprep.subr.bf16.mxu0 0
  %1987 = vmatpush1.bf16.msra.mxu0 0
  %1988 = vmatprep.subr.bf16.mxu0 0
  %1989 = vmatpush1.bf16.msra.mxu0 0
  %1990 = vmatprep.subr.bf16.mxu0 0
  %1991 = vmatpush1.bf16.msra.mxu0 0
  %1992 = vmatprep.subr.bf16.mxu0 0
  %1993 = vmatpush1.bf16.msra.mxu0 0
  %1994 = vmatprep.subr.bf16.mxu0 0
  %1995 = vmatpush1.bf16.msra.mxu0 0
  %1996 = vmatprep.subr.bf16.mxu0 0
  %1997 = vmatpush1.bf16.msra.mxu0 0
  %1998 = vmatprep.subr.bf16.mxu0 0
  %1999 = vmatpush1.bf16.msra.mxu0 0
  %2000 = vmatprep.subr.bf16.mxu0 0
  %2001 = vmatpush1.bf16.msra.mxu0 0
  %2002 = vmatprep.subr.bf16.mxu0 0
  %2003 = vmatpush1.bf16.msra.mxu0 0
  %2004 = vmatprep.subr.bf16.mxu0 0
  %2005 = vmatpush1.bf16.msra.mxu0 0
  %2006 = vmatprep.subr.bf16.mxu0 0
  %2007 = vmatpush1.bf16.msra.mxu0 0
  %2008 = vmatprep.subr.bf16.mxu0 0
  %2009 = vmatpush1.bf16.msra.mxu0 0
  %2010 = vmatprep.mubr.bf16.mxu0 0
  %2011 = vmatmul.mubr.bf16.gmra.mrb[0].mxu0 %v1973
  %v2012 = vpop.f32.mrb[0].mxu0
  %v2013 = vadd.f32 0.0, %v2012
  %v2014 = vpop.f32.mrb[0].mxu0
  %v2015 = vpop.f32.mrb[0].mxu0
  %v2016 = vpop.f32.mrb[0].mxu0
  %2017 = vdwg.mxu0
  %2018 = vrot.lane.b32.xlu0 %v1295, 116
  %v2019 = vpop.permute.xlu0 %2018
  %2020 = vrot.lane.b32.xlu0 %v1293, 116
  %v2021 = vpop.permute.xlu0 %2020
  %2022 = vrot.lane.b32.xlu0 %v1294, 116
  %v2023 = vpop.permute.xlu0 %2022
  %v2025 = vsel %vm117, %v2019, 0
  %v2028 = vsel %vm117, %v2021, 0
  %v2031 = vsel %vm117, %v2023, 0
  %2033 = vmatprep.subr.bf16.mxu0 0
  %2034 = vmatpush1.bf16.xpose.msra.mxu0 %v2028
  %2035 = vmatprep.subr.bf16.mxu0 0
  %2036 = vmatpush1.bf16.xpose.msra.mxu0 %v2031
  %2037 = vmatprep.subr.bf16.mxu0 0
  %2038 = vmatpush1.bf16.xpose.msra.mxu0 0
  %2039 = vmatprep.subr.bf16.mxu0 0
  %2040 = vmatpush1.bf16.xpose.msra.mxu0 0
  %2041 = vmatprep.subr.bf16.mxu0 0
  %2042 = vmatpush1.bf16.xpose.msra.mxu0 0
  %2043 = vmatprep.subr.bf16.mxu0 0
  %2044 = vmatpush1.bf16.xpose.msra.mxu0 0
  %2045 = vmatprep.subr.bf16.mxu0 0
  %2046 = vmatpush1.bf16.xpose.msra.mxu0 0
  %2047 = vmatprep.subr.bf16.mxu0 0
  %2048 = vmatpush1.bf16.xpose.msra.mxu0 0
  %2049 = vmatprep.subr.bf16.mxu0 0
  %2050 = vmatpush1.bf16.xpose.msra.mxu0 0
  %2051 = vmatprep.subr.bf16.mxu0 0
  %2052 = vmatpush1.bf16.xpose.msra.mxu0 0
  %2053 = vmatprep.subr.bf16.mxu0 0
  %2054 = vmatpush1.bf16.xpose.msra.mxu0 0
  %2055 = vmatprep.subr.bf16.mxu0 0
  %2056 = vmatpush1.bf16.xpose.msra.mxu0 0
  %2057 = vmatprep.subr.bf16.mxu0 0
  %2058 = vmatpush1.bf16.xpose.msra.mxu0 0
  %2059 = vmatprep.subr.bf16.mxu0 0
  %2060 = vmatpush1.bf16.xpose.msra.mxu0 0
  %2061 = vmatprep.subr.bf16.mxu0 0
  %2062 = vmatpush1.bf16.xpose.msra.mxu0 0
  %2063 = vmatprep.subr.bf16.mxu0 0
  %2064 = vmatpush1.bf16.xpose.msra.mxu0 0
  %2065 = vmatprep.mubr.bf16.mxu0 0
  %2066 = vmatmul.mubr.bf16.gmra.mrb[0].mxu0 %v2025
  %v2067 = vpop.f32.mrb[0].mxu0
  %v2068 = vadd.f32 0.0, %v2067
  %v2069 = vpop.f32.mrb[0].mxu0
  %v2070 = vpop.f32.mrb[0].mxu0
  %v2071 = vpop.f32.mrb[0].mxu0
  %2072 = vdwg.mxu0
  %v2073 = vmul.f32 %v2068, 0.70710677
  %v2074 = vadd.f32 %v2073, %v1348
  %v2075 = vsel %vm1351, %v2074, -inf
  %2076 = vmax.xlane.f32.xlu0 %v2075
  %v2077 = vpop.xlane.xlu0 %2076
  %v2078 = vsub.f32 %v2074, %v2077
  %v2079 = vmul.f32 %v2078, 1.442695
  %v2080 = vpow.pop %v2079
  %v2081 = vsel %vm1351, %v2080, 0.0
  %2082 = vadd.xlane.f32.xlu0 %v2081
  %v2083 = vpop.xlane.xlu0 %2082
  %v2084 = vrcp.pop %v2083
  %v2085 = vmul.f32 %v2080, %v2084
  %v2086 = vpack.c.bf16 %v2085, %v2085
  %2087 = vrot.lane.b32.xlu0 %v1293, 100
  %v2088 = vpop.permute.xlu0 %2087
  %2089 = vrot.lane.b32.xlu0 %v1294, 100
  %v2090 = vpop.permute.xlu0 %2089
  %v2093 = vsel %vm193, %v2086, 0
  %v2096 = vsel %vm241, %v2090, 0
  %2098 = vmatprep.subr.bf16.mxu0 0
  %2099 = vmatpush1.bf16.msra.mxu0 %v2088
  %2100 = vmatprep.subr.bf16.mxu0 0
  %2101 = vmatpush1.bf16.msra.mxu0 %v2096
  %2102 = vmatprep.subr.bf16.mxu0 0
  %2103 = vmatpush1.bf16.msra.mxu0 0
  %2104 = vmatprep.subr.bf16.mxu0 0
  %2105 = vmatpush1.bf16.msra.mxu0 0
  %2106 = vmatprep.subr.bf16.mxu0 0
  %2107 = vmatpush1.bf16.msra.mxu0 0
  %2108 = vmatprep.subr.bf16.mxu0 0
  %2109 = vmatpush1.bf16.msra.mxu0 0
  %2110 = vmatprep.subr.bf16.mxu0 0
  %2111 = vmatpush1.bf16.msra.mxu0 0
  %2112 = vmatprep.subr.bf16.mxu0 0
  %2113 = vmatpush1.bf16.msra.mxu0 0
  %2114 = vmatprep.subr.bf16.mxu0 0
  %2115 = vmatpush1.bf16.msra.mxu0 0
  %2116 = vmatprep.subr.bf16.mxu0 0
  %2117 = vmatpush1.bf16.msra.mxu0 0
  %2118 = vmatprep.subr.bf16.mxu0 0
  %2119 = vmatpush1.bf16.msra.mxu0 0
  %2120 = vmatprep.subr.bf16.mxu0 0
  %2121 = vmatpush1.bf16.msra.mxu0 0
  %2122 = vmatprep.subr.bf16.mxu0 0
  %2123 = vmatpush1.bf16.msra.mxu0 0
  %2124 = vmatprep.subr.bf16.mxu0 0
  %2125 = vmatpush1.bf16.msra.mxu0 0
  %2126 = vmatprep.subr.bf16.mxu0 0
  %2127 = vmatpush1.bf16.msra.mxu0 0
  %2128 = vmatprep.subr.bf16.mxu0 0
  %2129 = vmatpush1.bf16.msra.mxu0 0
  %2130 = vmatprep.mubr.bf16.mxu0 0
  %2131 = vmatmul.mubr.bf16.gmra.mrb[0].mxu0 %v2093
  %v2132 = vpop.f32.mrb[0].mxu0
  %v2133 = vadd.f32 0.0, %v2132
  %v2134 = vpop.f32.mrb[0].mxu0
  %v2135 = vpop.f32.mrb[0].mxu0
  %v2136 = vpop.f32.mrb[0].mxu0
  %2137 = vdwg.mxu0
  %2138 = vrot.lane.b32.xlu0 %v1295, 114
  %v2139 = vpop.permute.xlu0 %2138
  %2140 = vrot.lane.b32.xlu0 %v1293, 114
  %v2141 = vpop.permute.xlu0 %2140
  %2142 = vrot.lane.b32.xlu0 %v1294, 114
  %v2143 = vpop.permute.xlu0 %2142
  %v2145 = vsel %vm117, %v2139, 0
  %v2148 = vsel %vm117, %v2141, 0
  %v2151 = vsel %vm117, %v2143, 0
  %2153 = vmatprep.subr.bf16.mxu0 0
  %2154 = vmatpush1.bf16.xpose.msra.mxu0 %v2148
  %2155 = vmatprep.subr.bf16.mxu0 0
  %2156 = vmatpush1.bf16.xpose.msra.mxu0 %v2151
  %2157 = vmatprep.subr.bf16.mxu0 0
  %2158 = vmatpush1.bf16.xpose.msra.mxu0 0
  %2159 = vmatprep.subr.bf16.mxu0 0
  %2160 = vmatpush1.bf16.xpose.msra.mxu0 0
  %2161 = vmatprep.subr.bf16.mxu0 0
  %2162 = vmatpush1.bf16.xpose.msra.mxu0 0
  %2163 = vmatprep.subr.bf16.mxu0 0
  %2164 = vmatpush1.bf16.xpose.msra.mxu0 0
  %2165 = vmatprep.subr.bf16.mxu0 0
  %2166 = vmatpush1.bf16.xpose.msra.mxu0 0
  %2167 = vmatprep.subr.bf16.mxu0 0
  %2168 = vmatpush1.bf16.xpose.msra.mxu0 0
  %2169 = vmatprep.subr.bf16.mxu0 0
  %2170 = vmatpush1.bf16.xpose.msra.mxu0 0
  %2171 = vmatprep.subr.bf16.mxu0 0
  %2172 = vmatpush1.bf16.xpose.msra.mxu0 0
  %2173 = vmatprep.subr.bf16.mxu0 0
  %2174 = vmatpush1.bf16.xpose.msra.mxu0 0
  %2175 = vmatprep.subr.bf16.mxu0 0
  %2176 = vmatpush1.bf16.xpose.msra.mxu0 0
  %2177 = vmatprep.subr.bf16.mxu0 0
  %2178 = vmatpush1.bf16.xpose.msra.mxu0 0
  %2179 = vmatprep.subr.bf16.mxu0 0
  %2180 = vmatpush1.bf16.xpose.msra.mxu0 0
  %2181 = vmatprep.subr.bf16.mxu0 0
  %2182 = vmatpush1.bf16.xpose.msra.mxu0 0
  %2183 = vmatprep.subr.bf16.mxu0 0
  %2184 = vmatpush1.bf16.xpose.msra.mxu0 0
  %2185 = vmatprep.mubr.bf16.mxu0 0
  %2186 = vmatmul.mubr.bf16.gmra.mrb[0].mxu0 %v2145
  %v2187 = vpop.f32.mrb[0].mxu0
  %v2188 = vadd.f32 0.0, %v2187
  %v2189 = vpop.f32.mrb[0].mxu0
  %v2190 = vpop.f32.mrb[0].mxu0
  %v2191 = vpop.f32.mrb[0].mxu0
  %2192 = vdwg.mxu0
  %v2193 = vmul.f32 %v2188, 0.70710677
  %v2194 = vadd.f32 %v2193, %v1348
  %v2195 = vsel %vm1351, %v2194, -inf
  %2196 = vmax.xlane.f32.xlu0 %v2195
  %v2197 = vpop.xlane.xlu0 %2196
  %v2198 = vsub.f32 %v2194, %v2197
  %v2199 = vmul.f32 %v2198, 1.442695
  %v2200 = vpow.pop %v2199
  %v2201 = vsel %vm1351, %v2200, 0.0
  %2202 = vadd.xlane.f32.xlu0 %v2201
  %v2203 = vpop.xlane.xlu0 %2202
  %v2204 = vrcp.pop %v2203
  %v2205 = vmul.f32 %v2200, %v2204
  %v2206 = vpack.c.bf16 %v2205, %v2205
  %2207 = vrot.lane.b32.xlu0 %v1293, 98
  %v2208 = vpop.permute.xlu0 %2207
  %2209 = vrot.lane.b32.xlu0 %v1294, 98
  %v2210 = vpop.permute.xlu0 %2209
  %v2213 = vsel %vm193, %v2206, 0
  %v2216 = vsel %vm241, %v2210, 0
  %2218 = vmatprep.subr.bf16.mxu0 0
  %2219 = vmatpush1.bf16.msra.mxu0 %v2208
  %2220 = vmatprep.subr.bf16.mxu0 0
  %2221 = vmatpush1.bf16.msra.mxu0 %v2216
  %2222 = vmatprep.subr.bf16.mxu0 0
  %2223 = vmatpush1.bf16.msra.mxu0 0
  %2224 = vmatprep.subr.bf16.mxu0 0
  %2225 = vmatpush1.bf16.msra.mxu0 0
  %2226 = vmatprep.subr.bf16.mxu0 0
  %2227 = vmatpush1.bf16.msra.mxu0 0
  %2228 = vmatprep.subr.bf16.mxu0 0
  %2229 = vmatpush1.bf16.msra.mxu0 0
  %2230 = vmatprep.subr.bf16.mxu0 0
  %2231 = vmatpush1.bf16.msra.mxu0 0
  %2232 = vmatprep.subr.bf16.mxu0 0
  %2233 = vmatpush1.bf16.msra.mxu0 0
  %2234 = vmatprep.subr.bf16.mxu0 0
  %2235 = vmatpush1.bf16.msra.mxu0 0
  %2236 = vmatprep.subr.bf16.mxu0 0
  %2237 = vmatpush1.bf16.msra.mxu0 0
  %2238 = vmatprep.subr.bf16.mxu0 0
  %2239 = vmatpush1.bf16.msra.mxu0 0
  %2240 = vmatprep.subr.bf16.mxu0 0
  %2241 = vmatpush1.bf16.msra.mxu0 0
  %2242 = vmatprep.subr.bf16.mxu0 0
  %2243 = vmatpush1.bf16.msra.mxu0 0
  %2244 = vmatprep.subr.bf16.mxu0 0
  %2245 = vmatpush1.bf16.msra.mxu0 0
  %2246 = vmatprep.subr.bf16.mxu0 0
  %2247 = vmatpush1.bf16.msra.mxu0 0
  %2248 = vmatprep.subr.bf16.mxu0 0
  %2249 = vmatpush1.bf16.msra.mxu0 0
  %2250 = vmatprep.mubr.bf16.mxu0 0
  %2251 = vmatmul.mubr.bf16.gmra.mrb[0].mxu0 %v2213
  %v2252 = vpop.f32.mrb[0].mxu0
  %v2253 = vadd.f32 0.0, %v2252
  %v2254 = vpop.f32.mrb[0].mxu0
  %v2255 = vpop.f32.mrb[0].mxu0
  %v2256 = vpop.f32.mrb[0].mxu0
  %2257 = vdwg.mxu0
  %2259 = vrot.lane.b32.xlu0 %v1533, 2
  %v2260 = vpop.permute.xlu0 %2259
  %2263 = vrot.lane.b32.xlu0 %v1653, 4
  %v2264 = vpop.permute.xlu0 %2263
  %2267 = vrot.lane.b32.xlu0 %v1773, 6
  %v2268 = vpop.permute.xlu0 %2267
  %2271 = vrot.lane.b32.xlu0 %v1893, 8
  %v2272 = vpop.permute.xlu0 %2271
  %2275 = vrot.lane.b32.xlu0 %v2013, 10
  %v2276 = vpop.permute.xlu0 %2275
  %2279 = vrot.lane.b32.xlu0 %v2133, 12
  %v2280 = vpop.permute.xlu0 %2279
  %2283 = vrot.lane.b32.xlu0 %v2253, 14
  %v2284 = vpop.permute.xlu0 %2283
  %v2286 = vsel %vm117, %v1412, %v2260
  %v2287 = vsel %vm24, %v2286, %v2264
  %v2288 = vsel %vm848, %v2287, %v2268
  %v2289 = vsel %vm50, %v2288, %v2272
  %vm2290 = vcmask 80896
  %v2291 = vsel %vm2290, %v2289, %v2276
  %vm2292 = vcmask 97280
  %v2293 = vsel %vm2292, %v2291, %v2280
  %vm2294 = vcmask 113664
  %v2295 = vsel %vm2294, %v2293, %v2284
  %v2296 = vpack.c.bf16 %v2295, %v2295
  %2297 = vrot.lane.b32.xlu0 %v998, 24
  %v2298 = vpop.permute.xlu0 %2297
  %v2301 = vsel %vm1002, %v2296, 0
  %2303 = vmatprep.subr.bf16.mxu0 0
  %2304 = vmatpush1.bf16.msra.mxu0 %v2298
  %2305 = vmatprep.subr.bf16.mxu0 0
  %2306 = vmatpush1.bf16.msra.mxu0 0
  %2307 = vmatprep.subr.bf16.mxu0 0
  %2308 = vmatpush1.bf16.msra.mxu0 0
  %2309 = vmatprep.subr.bf16.mxu0 0
  %2310 = vmatpush1.bf16.msra.mxu0 0
  %2311 = vmatprep.subr.bf16.mxu0 0
  %2312 = vmatpush1.bf16.msra.mxu0 0
  %2313 = vmatprep.subr.bf16.mxu0 0
  %2314 = vmatpush1.bf16.msra.mxu0 0
  %2315 = vmatprep.subr.bf16.mxu0 0
  %2316 = vmatpush1.bf16.msra.mxu0 0
  %2317 = vmatprep.subr.bf16.mxu0 0
  %2318 = vmatpush1.bf16.msra.mxu0 0
  %2319 = vmatprep.subr.bf16.mxu0 0
  %2320 = vmatpush1.bf16.msra.mxu0 0
  %2321 = vmatprep.subr.bf16.mxu0 0
  %2322 = vmatpush1.bf16.msra.mxu0 0
  %2323 = vmatprep.subr.bf16.mxu0 0
  %2324 = vmatpush1.bf16.msra.mxu0 0
  %2325 = vmatprep.subr.bf16.mxu0 0
  %2326 = vmatpush1.bf16.msra.mxu0 0
  %2327 = vmatprep.subr.bf16.mxu0 0
  %2328 = vmatpush1.bf16.msra.mxu0 0
  %2329 = vmatprep.subr.bf16.mxu0 0
  %2330 = vmatpush1.bf16.msra.mxu0 0
  %2331 = vmatprep.subr.bf16.mxu0 0
  %2332 = vmatpush1.bf16.msra.mxu0 0
  %2333 = vmatprep.subr.bf16.mxu0 0
  %2334 = vmatpush1.bf16.msra.mxu0 0
  %2335 = vmatprep.mubr.bf16.mxu0 0
  %2336 = vmatmul.mubr.bf16.gmra.mrb[0].mxu0 %v2301
  %v2337 = vpop.f32.mrb[0].mxu0
  %v2338 = vadd.f32 0.0, %v2337
  %v2339 = vpop.f32.mrb[0].mxu0
  %v2340 = vpop.f32.mrb[0].mxu0
  %v2341 = vpop.f32.mrb[0].mxu0
  %2342 = vdwg.mxu0
  %v2343 = vadd.f32 %v1180, %v2338
  %2344 = vrot.lane.b32.xlu0 %v49, 24
  %v2345 = vpop.permute.xlu0 %2344
  %v2347 = vadd.f32 %v2343, %v2345
  %v2348 = vld [vmem:[%s2 + $0x4] sm:$0xf]
  %v2349 = vld [vmem:[%s2 + $0xc] sm:$0xf]
  %v2350 = vpack.c.bf16 %v2347, %v2347
  %v2353 = vunpack.c.l.b16 %v2348
  %v2354 = vunpack.c.l.b16 %v2349
  %v2355 = vpack.c.b16 %v2354, %v2353
  %2356 = vrot.lane.b32.xlu0 %v2355, 96
  %v2357 = vpop.permute.xlu0 %2356
  %2360 = vrot.lane.b32.xlu0 %v1235, 96
  %v2361 = vpop.permute.xlu0 %2360
  %v2364 = vsel %vm1002, %v2350, 0
  %2366 = vmatprep.subr.bf16.mxu0 0
  %2367 = vmatpush1.bf16.msra.mxu0 %v2357
  %2368 = vmatprep.subr.bf16.mxu0 0
  %2369 = vmatpush1.bf16.msra.mxu0 0
  %2370 = vmatprep.subr.bf16.mxu0 0
  %2371 = vmatpush1.bf16.msra.mxu0 0
  %2372 = vmatprep.subr.bf16.mxu0 0
  %2373 = vmatpush1.bf16.msra.mxu0 0
  %2374 = vmatprep.subr.bf16.mxu0 0
  %2375 = vmatpush1.bf16.msra.mxu0 0
  %2376 = vmatprep.subr.bf16.mxu0 0
  %2377 = vmatpush1.bf16.msra.mxu0 0
  %2378 = vmatprep.subr.bf16.mxu0 0
  %2379 = vmatpush1.bf16.msra.mxu0 0
  %2380 = vmatprep.subr.bf16.mxu0 0
  %2381 = vmatpush1.bf16.msra.mxu0 0
  %2382 = vmatprep.subr.bf16.mxu0 0
  %2383 = vmatpush1.bf16.msra.mxu0 0
  %2384 = vmatprep.subr.bf16.mxu0 0
  %2385 = vmatpush1.bf16.msra.mxu0 0
  %2386 = vmatprep.subr.bf16.mxu0 0
  %2387 = vmatpush1.bf16.msra.mxu0 0
  %2388 = vmatprep.subr.bf16.mxu0 0
  %2389 = vmatpush1.bf16.msra.mxu0 0
  %2390 = vmatprep.subr.bf16.mxu0 0
  %2391 = vmatpush1.bf16.msra.mxu0 0
  %2392 = vmatprep.subr.bf16.mxu0 0
  %2393 = vmatpush1.bf16.msra.mxu0 0
  %2394 = vmatprep.subr.bf16.mxu0 0
  %2395 = vmatpush1.bf16.msra.mxu0 0
  %2396 = vmatprep.subr.bf16.mxu0 0
  %2397 = vmatpush1.bf16.msra.mxu0 0
  %2398 = vmatprep.mubr.bf16.mxu0 0
  %2399 = vmatmul.mubr.bf16.gmra.mrb[0].mxu0 %v2364
  %v2400 = vpop.f32.mrb[0].mxu0
  %v2401 = vadd.f32 %v2361, %v2400
  %v2402 = vpop.f32.mrb[0].mxu0
  %v2403 = vpop.f32.mrb[0].mxu0
  %v2404 = vpop.f32.mrb[0].mxu0
  %2405 = vdwg.mxu0
  %v2406 = vld [vmem:[%s2 + $0x4] sm:$0xf]
  %v2407 = vld [vmem:[%s2 + $0xc] sm:$0xf]
  %v2408 = vld [vmem:[%s2 + $0x14] sm:$0xf]
  %v2409 = vld [vmem:[%s2 + $0x1c] sm:$0xf]
  %v2410 = vpack.c.bf16 %v2401, %v2401
  %v2415 = vunpack.c.l.b16 %v2406
  %v2416 = vunpack.c.l.b16 %v2407
  %v2417 = vunpack.c.l.b16 %v2408
  %v2418 = vunpack.c.l.b16 %v2409
  %v2419 = vpack.c.b16 %v2416, %v2415
  %v2420 = vpack.c.b16 %v2418, %v2417
  %2421 = vrot.lane.b32.xlu0 %v2419, 64
  %v2422 = vpop.permute.xlu0 %2421
  %2423 = vrot.lane.b32.xlu0 %v2420, 64
  %v2424 = vpop.permute.xlu0 %2423
  %vm2427 = vcmask 261120
  %v2429 = vsel %vm2427, %v2410, 0
  %2431 = vmatprep.subr.bf16.mxu0 0
  %2432 = vmatpush1.bf16.msra.mxu0 %v2422
  %2433 = vmatprep.subr.bf16.mxu0 0
  %2434 = vmatpush1.bf16.msra.mxu0 %v2424
  %2435 = vmatprep.subr.bf16.mxu0 0
  %2436 = vmatpush1.bf16.msra.mxu0 0
  %2437 = vmatprep.subr.bf16.mxu0 0
  %2438 = vmatpush1.bf16.msra.mxu0 0
  %2439 = vmatprep.subr.bf16.mxu0 0
  %2440 = vmatpush1.bf16.msra.mxu0 0
  %2441 = vmatprep.subr.bf16.mxu0 0
  %2442 = vmatpush1.bf16.msra.mxu0 0
  %2443 = vmatprep.subr.bf16.mxu0 0
  %2444 = vmatpush1.bf16.msra.mxu0 0
  %2445 = vmatprep.subr.bf16.mxu0 0
  %2446 = vmatpush1.bf16.msra.mxu0 0
  %2447 = vmatprep.subr.bf16.mxu0 0
  %2448 = vmatpush1.bf16.msra.mxu0 0
  %2449 = vmatprep.subr.bf16.mxu0 0
  %2450 = vmatpush1.bf16.msra.mxu0 0
  %2451 = vmatprep.subr.bf16.mxu0 0
  %2452 = vmatpush1.bf16.msra.mxu0 0
  %2453 = vmatprep.subr.bf16.mxu0 0
  %2454 = vmatpush1.bf16.msra.mxu0 0
  %2455 = vmatprep.subr.bf16.mxu0 0
  %2456 = vmatpush1.bf16.msra.mxu0 0
  %2457 = vmatprep.subr.bf16.mxu0 0
  %2458 = vmatpush1.bf16.msra.mxu0 0
  %2459 = vmatprep.subr.bf16.mxu0 0
  %2460 = vmatpush1.bf16.msra.mxu0 0
  %2461 = vmatprep.subr.bf16.mxu0 0
  %2462 = vmatpush1.bf16.msra.mxu0 0
  %2463 = vmatprep.mubr.bf16.mxu0 0
  %2464 = vmatmul.mubr.bf16.gmra.mrb[0].mxu0 %v2429
  %v2465 = vpop.f32.mrb[0].mxu0
  %v2466 = vadd.f32 0.0, %v2465
  %v2467 = vpop.f32.mrb[0].mxu0
  %v2468 = vpop.f32.mrb[0].mxu0
  %v2469 = vpop.f32.mrb[0].mxu0
  %2470 = vdwg.mxu0
  %v2471 = vadd.f32 %v2347, %v2466
  %2472 = vrot.lane.b32.xlu0 %v1235, 64
  %v2473 = vpop.permute.xlu0 %2472
  %v2475 = vadd.f32 %v2471, %v2473
  %v2476 = vpack.c.bf16 %v2475, %v2475
  %2477 = vrot.lane.b32.xlu0 %v998, 8
  %v2478 = vpop.permute.xlu0 %2477
  %2480 = vrot.lane.b32.xlu0 %v49, 8
  %v2481 = vpop.permute.xlu0 %2480
  %v2484 = vsel %vm1002, %v2476, 0
  %2486 = vmatprep.subr.bf16.mxu0 0
  %2487 = vmatpush1.bf16.msra.mxu0 %v2478
  %2488 = vmatprep.subr.bf16.mxu0 0
  %2489 = vmatpush1.bf16.msra.mxu0 0
  %2490 = vmatprep.subr.bf16.mxu0 0
  %2491 = vmatpush1.bf16.msra.mxu0 0
  %2492 = vmatprep.subr.bf16.mxu0 0
  %2493 = vmatpush1.bf16.msra.mxu0 0
  %2494 = vmatprep.subr.bf16.mxu0 0
  %2495 = vmatpush1.bf16.msra.mxu0 0
  %2496 = vmatprep.subr.bf16.mxu0 0
  %2497 = vmatpush1.bf16.msra.mxu0 0
  %2498 = vmatprep.subr.bf16.mxu0 0
  %2499 = vmatpush1.bf16.msra.mxu0 0
  %2500 = vmatprep.subr.bf16.mxu0 0
  %2501 = vmatpush1.bf16.msra.mxu0 0
  %2502 = vmatprep.subr.bf16.mxu0 0
  %2503 = vmatpush1.bf16.msra.mxu0 0
  %2504 = vmatprep.subr.bf16.mxu0 0
  %2505 = vmatpush1.bf16.msra.mxu0 0
  %2506 = vmatprep.subr.bf16.mxu0 0
  %2507 = vmatpush1.bf16.msra.mxu0 0
  %2508 = vmatprep.subr.bf16.mxu0 0
  %2509 = vmatpush1.bf16.msra.mxu0 0
  %2510 = vmatprep.subr.bf16.mxu0 0
  %2511 = vmatpush1.bf16.msra.mxu0 0
  %2512 = vmatprep.subr.bf16.mxu0 0
  %2513 = vmatpush1.bf16.msra.mxu0 0
  %2514 = vmatprep.subr.bf16.mxu0 0
  %2515 = vmatpush1.bf16.msra.mxu0 0
  %2516 = vmatprep.subr.bf16.mxu0 0
  %2517 = vmatpush1.bf16.msra.mxu0 0
  %2518 = vmatprep.mubr.bf16.mxu0 0
  %2519 = vmatmul.mubr.bf16.gmra.mrb[0].mxu0 %v2484
  %v2520 = vpop.f32.mrb[0].mxu0
  %v2521 = vadd.f32 %v2481, %v2520
  %v2522 = vpop.f32.mrb[0].mxu0
  %v2523 = vpop.f32.mrb[0].mxu0
  %v2524 = vpop.f32.mrb[0].mxu0
  %2525 = vdwg.mxu0
  %v2526 = vsub.f32 0.0, %v2521
  %v2527 = vmul.f32 %v2526, 1.442695
  %v2528 = vpow.pop %v2527
  %v2529 = vadd.f32 %v2528, 1.0
  %v2530 = vrcp.pop %v2529
  %vm2531 = vcmask 58368
  %2532 = vst.msk [vmem:[%s4] sm:$0x3] %vm2531, %v2530
  // Predicated region
  $region18: #{tranad_forward.1} parent=0 // pred_check
    _
  $region19: #{tranad_forward.1} parent=0 // pred_check_branch
    %2534 = sbr.rel (0) target = $region21
  $region20: #{tranad_forward.1} parent=0 // pred_region
    _
  $region21: #{tranad_forward.1} parent=0 // pred_fallthru
    _
  // Predicated region
  $region22: #{tranad_forward.1} parent=0 // pred_check
    _
  $region23: #{tranad_forward.1} parent=0 // pred_check_branch
    %2536 = sbr.rel (0) target = $region25
  $region24: #{tranad_forward.1} parent=0 // pred_region
    _
  $region25: #{tranad_forward.1} parent=0 // pred_fallthru
    _

</llo_original>
